<compile_context>
chip_gen: v5e
topology: v5e:2x2
jax: 0.10.0
libtpu: 0.0.40
codegen_flags: <defaults>
</compile_context>

<pallas_src>
import functools

import jax
import jax.numpy as jnp
from jax import lax
from jax.experimental import pallas as pl
from jax.experimental.pallas import tpu as pltpu


def _round_up(x, m):
    return ((x + m - 1) // m) * m


# ------------------------- fused GRU + MLP kernel ---------------------------
def gru_mlp_kernel(x_ref, wih_ref, whh_ref, bih_ref, bhn_ref, h0_ref,
                   w1_ref, b1_ref, w2_ref, b2_ref,
                   out_ref, hlast_ref,
                   h_s, gi_s,
                   *, t_blk, b_tile, hp, seq_len, needs_mask, unroll):
    tb = pl.program_id(1)                    # time-block axis (serial, "arbitrary")

    @pl.when(tb == 0)
    def _():
        h_s[...] = h0_ref[...]

    # Hoisted, fused input projection for the whole timestep block:
    # one (t_blk*b_tile, D) x (D, 3*Hp) bf16 MXU matmul with f32 accumulation.
    # r/z biases (b_ih + b_hh) and the n input-side bias are pre-folded into bih.
    gi_s[...] = jnp.dot(x_ref[...], wih_ref[...],
                        preferred_element_type=jnp.float32) + bih_ref[...]

    whh = whh_ref[...]                       # (Hp, 3*Hp) bf16, stays VMEM resident
    b_hn = bhn_ref[...]                      # (1, Hp) f32: hidden-side bias of n gate

    def step(i, h):
        row = pl.multiple_of(i * b_tile, b_tile)
        gi = gi_s[pl.ds(row, b_tile), :]                        # (b_tile, 3*Hp) f32
        # Single fused recurrent matmul per timestep (the serial latency path).
        gh = jnp.dot(h.astype(jnp.bfloat16), whh,
                     preferred_element_type=jnp.float32)        # (b_tile, 3*Hp) f32
        r = jax.nn.sigmoid(gi[:, :hp] + gh[:, :hp])
        z = jax.nn.sigmoid(gi[:, hp:2 * hp] + gh[:, hp:2 * hp])
        n = jnp.tanh(gi[:, 2 * hp:] + r * (gh[:, 2 * hp:] + b_hn))
        h_new = n + z * (h - n)                                 # == (1 - z)*n + z*h
        if needs_mask:                                          # only when T was padded
            valid = (tb * t_blk + i) < seq_len
            h_new = jnp.where(valid, h_new, h)
        return h_new

    h = lax.fori_loop(0, t_blk, step, h_s[...], unroll=unroll)
    h_s[...] = h

    # Fused MLP head on the final hidden state only (no (T,B,H) HBM writeback).
    # TODO(synk): for very large H on v7x, move w1/w2 to memory_space=pl.ANY and DMA
    # them here under pl.when to free recurrence-time VMEM (or split into a tiny
    # second pallas_call).
    @pl.when(tb == pl.num_programs(1) - 1)
    def _():
        hlast_ref[...] = h
        z1 = jnp.maximum(
            jnp.dot(h.astype(jnp.bfloat16), w1_ref[...],
                    preferred_element_type=jnp.float32) + b1_ref[...], 0.0)
        out_ref[...] = jnp.dot(z1.astype(jnp.bfloat16), w2_ref[...],
                               preferred_element_type=jnp.float32) + b2_ref[...]


# --------------------------- parameter preparation --------------------------
def prepare_params(params):
    """One-time conversion of PyTorch-layout params into kernel layout:
    gate-fused, pre-transposed, H padded to 128, bf16 weights, r/z biases combined."""
    H = params["w_hh"].shape[-1]
    D = params["w_ih"].shape[-1]
    Hp = _round_up(H, 128)

    w_ih = params["w_ih"].reshape(3, H, D)        # PyTorch gate order: r, z, n
    w_hh = params["w_hh"].reshape(3, H, H)
    b_ih = params["b_ih"].reshape(3, H)
    b_hh = params["b_hh"].reshape(3, H)

    def pad_last(a, width):
        return jnp.pad(a, [(0, 0)] * (a.ndim - 1) + [(0, width - a.shape[-1])])

    # (D, 3*Hp): columns [r | z | n], each gate zero-padded H -> Hp.
    wih_t = jnp.concatenate([pad_last(w_ih[g].T, Hp) for g in range(3)], axis=1)
    # (Hp, 3*Hp): contraction rows padded H -> Hp (padded h dims are zero anyway).
    whh_t = jnp.concatenate(
        [pad_last(jnp.pad(w_hh[g].T, ((0, Hp - H), (0, 0))), Hp) for g in range(3)],
        axis=1)
    # (1, 3*Hp): r/z biases combined (b_ih + b_hh); n keeps only its input-side bias.
    bih = jnp.concatenate([pad_last((b_ih[0] + b_hh[0])[None, :], Hp),
                           pad_last((b_ih[1] + b_hh[1])[None, :], Hp),
                           pad_last(b_ih[2][None, :], Hp)], axis=1)
    bhn = pad_last(b_hh[2][None, :], Hp)          # (1, Hp) hidden-side bias of n gate

    return {
        "wih_t": wih_t.astype(jnp.bfloat16),
        "whh_t": whh_t.astype(jnp.bfloat16),
        "bih": bih.astype(jnp.float32),
        "bhn": bhn.astype(jnp.float32),
        "fc_w1": jnp.pad(params["fc_w1"],
                         ((0, Hp - H), (0, 0))).astype(jnp.bfloat16),   # (Hp, H)
        "fc_b1": params["fc_b1"].reshape(1, -1).astype(jnp.float32),
        "fc_w2": params["fc_w2"].astype(jnp.bfloat16),                  # (H, O)
        "fc_b2": params["fc_b2"].reshape(1, -1).astype(jnp.float32),
        "hidden_size": H,
    }


# ------------------------------- forward pass -------------------------------
def _vmem_limit_bytes():
    # Raise the scoped-VMEM budget above the arbitrary 32 MiB default; clamp below the
    # part's physical capacity (64 MiB on v7x, 128 MiB on v5e/v6e).
    cap = 128 * 1024 * 1024
    try:
        cap = int(pltpu.get_tpu_info().vmem_capacity_bytes)
    except Exception:
        pass
    return int(min(100 * 1024 * 1024, max(32 * 1024 * 1024, cap - 4 * 1024 * 1024)))


def _build_in_specs(n_tb, t_blk, b_tile, D, Hp, H, O, weight_mode):
    kw = {} if weight_mode is None else {"pipeline_mode": weight_mode}

    def const(shape):          # constant-index block (fetched once, never revisited)
        return pl.BlockSpec(shape, lambda bt, tb: (0, 0), **kw)

    return [
        pl.BlockSpec((t_blk * b_tile, D),
                     lambda bt, tb: (bt * n_tb + tb, 0)),        # x block
        const((D, 3 * Hp)),                                      # W_ih^T (gate-fused)
        const((Hp, 3 * Hp)),                                     # W_hh^T (gate-fused)
        const((1, 3 * Hp)),                                      # fused biases
        const((1, Hp)),                                          # b_hh_n
        pl.BlockSpec((b_tile, Hp), lambda bt, tb: (bt, 0)),      # h0 per batch tile
        const((Hp, H)),                                          # fc1 W
        const((1, H)),                                           # fc1 b
        const((H, O)),                                           # fc2 W
        const((1, O)),                                           # fc2 b
    ]


def gru_module_forward(prep, x, hidden=None, *, t_blk=None, batch_tiles=1):
    """x: (B, T, D) batch_first. Returns (out (B, O), hidden (1, B, H)) like the PyTorch
    module: out = MLP(last hidden); the full sequence output is never materialized.

    batch_tiles: set to 2 on v7x (2 TensorCores) when the padded batch is >= 16 — the
    leading grid axis is 'parallel' so the two half-batch recurrences run on separate
    cores. Keep 1 on v5e/v6e (splitting only lengthens the serial recurrence there).
    """
    B, T, D = x.shape
    H = prep["hidden_size"]
    Hp = prep["whh_t"].shape[0]
    O = prep["fc_w2"].shape[-1]

    n_bt = max(1, int(batch_tiles))
    b_tile = _round_up(-(-B // n_bt), 8)             # ceil(B/n_bt), sublane quantum
    b_pad = b_tile * n_bt

    if t_blk is None:
        # t_blk*b_tile >= 256 fills the 256-wide MXU rows on v6e/v7x (2 passes on v5e's
        # 128-wide MXU, still fine) and amortizes the ~0.35us per-grid-step overhead.
        t_blk = max(1, min(T, 256 // b_tile))
    t_pad = _round_up(T, t_blk)
    n_tb = t_pad // t_blk

    # Time-major + batch/time padding + per-batch-tile flattening. One fused XLA copy
    # of x before the kernel (x is read exactly once either way); bf16 halves its
    # HBM->VMEM traffic.
    x_tbd = jnp.transpose(x, (1, 0, 2)).astype(jnp.bfloat16)           # (T, B, D)
    x_tbd = jnp.pad(x_tbd, ((0, t_pad - T), (0, b_pad - B), (0, 0)))   # (t_pad,b_pad,D)
    x_flat = (x_tbd.reshape(t_pad, n_bt, b_tile, D)
              .transpose(1, 0, 2, 3)
              .reshape(n_bt * t_pad * b_tile, D))

    if hidden is None:
        h0 = jnp.zeros((b_pad, Hp), jnp.float32)
    else:
        h0 = jnp.pad(hidden[0].astype(jnp.float32), ((0, b_pad - B), (0, Hp - H)))

    # Register-pressure guard: fully unroll the inner recurrence only for small H.
    unroll = True if Hp < 512 else 4

    kernel = functools.partial(gru_mlp_kernel, t_blk=t_blk, b_tile=b_tile, hp=Hp,
                               seq_len=T, needs_mask=(t_pad != T), unroll=unroll)

    def run(weight_mode):
        return pl.pallas_call(
            kernel,
            out_shape=(jax.ShapeDtypeStruct((b_pad, O), jnp.float32),
                       jax.ShapeDtypeStruct((b_pad, Hp), jnp.float32)),
            grid_spec=pltpu.PrefetchScalarGridSpec(
                num_scalar_prefetch=0,
                grid=(n_bt, n_tb),
                in_specs=_build_in_specs(n_tb, t_blk, b_tile, D, Hp, H, O, weight_mode),
                out_specs=[
                    pl.BlockSpec((b_tile, O), lambda bt, tb: (bt, 0)),   # MLP(h_T)
                    pl.BlockSpec((b_tile, Hp), lambda bt, tb: (bt, 0)),  # h_T
                ],
                scratch_shapes=[
                    pltpu.VMEM((b_tile, Hp), jnp.float32),               # h carry (f32)
                    pltpu.VMEM((t_blk * b_tile, 3 * Hp), jnp.float32),   # fused gi block
                ],
            ),
            compiler_params=pltpu.CompilerParams(
                dimension_semantics=("parallel", "arbitrary"),
                vmem_limit_bytes=_vmem_limit_bytes(),
            ),
        )(x_flat, prep["wih_t"], prep["whh_t"], prep["bih"], prep["bhn"], h0,
          prep["fc_w1"], prep["fc_b1"], prep["fc_w2"], prep["fc_b2"])

    try:
        # Single-buffer the constant-index weight blocks (halves their VMEM residency,
        # which is what makes large-H configs fit v7x's 64 MiB).
        out_p, hlast_p = run(pl.Buffered(1))
    except Exception:
        # Fallback: default double-buffering if this build rejects Buffered(1).
        out_p, hlast_p = run(None)

    out = out_p[:B]
    hidden_out = hlast_p[:B, :H][None]               # (1, B, H), num_layers=1
    return out, hidden_out


# ------------------------------ initialization -------------------------------
def init_params(key, input_size, hidden_size, output_size):
    ks = jax.random.split(key, 8)
    s_gru = 1.0 / jnp.sqrt(hidden_size)
    s_fc1 = 1.0 / jnp.sqrt(hidden_size)
    u = lambda k, shape, s: jax.random.uniform(k, shape, jnp.float32, -s, s)
    return {
        "w_ih": u(ks[0], (3 * hidden_size, input_size), s_gru),
        "w_hh": u(ks[1], (3 * hidden_size, hidden_size), s_gru),
        "b_ih": u(ks[2], (3 * hidden_size,), s_gru),
        "b_hh": u(ks[3], (3 * hidden_size,), s_gru),
        "fc_w1": u(ks[4], (hidden_size, hidden_size), s_fc1),
        "fc_b1": u(ks[5], (hidden_size,), s_fc1),
        "fc_w2": u(ks[6], (hidden_size, output_size), s_fc1),
        "fc_b2": u(ks[7], (output_size,), s_fc1),
    }


# ---------------------------- pure-JAX reference -----------------------------
def reference_forward(params, x):
    B, T, D = x.shape
    H = params["w_hh"].shape[-1]
    wih_t = params["w_ih"].T
    whh_t = params["w_hh"].T
    hi = jax.lax.Precision.HIGHEST

    def step(h, x_t):
        gi = jnp.dot(x_t, wih_t, precision=hi) + params["b_ih"]
        gh = jnp.dot(h, whh_t, precision=hi) + params["b_hh"]
        r = jax.nn.sigmoid(gi[:, :H] + gh[:, :H])
        z = jax.nn.sigmoid(gi[:, H:2 * H] + gh[:, H:2 * H])
        n = jnp.tanh(gi[:, 2 * H:] + r * gh[:, 2 * H:])
        h_new = (1.0 - z) * n + z * h
        return h_new, h_new

    h_last, _ = jax.lax.scan(step, jnp.zeros((B, H), jnp.float32),
                             jnp.transpose(x, (1, 0, 2)))
    z1 = jnp.maximum(jnp.dot(h_last, params["fc_w1"], precision=hi) + params["fc_b1"], 0.0)
    out = jnp.dot(z1, params["fc_w2"], precision=hi) + params["fc_b2"]
    return out, h_last[None]


if __name__ == "__main__":
    B, T, D, H, O = 2, 8, 16, 32, 4
    key = jax.random.PRNGKey(0)
    k_p, k_x = jax.random.split(key)
    params = init_params(k_p, D, H, O)
    x = jax.random.normal(k_x, (B, T, D), jnp.float32)

    prep = prepare_params(params)
    out, hidden = gru_module_forward(prep, x)
    out = jax.block_until_ready(out)
    hidden = jax.block_until_ready(hidden)

    out_ref, hidden_ref = reference_forward(params, x)
    assert out.shape == (B, O) and hidden.shape == (1, B, H)
    # bf16 MXU feeds (f32 accumulation + f32 gate math) vs. an f32 HIGHEST-precision
    # reference: tolerance relaxed accordingly.
    assert jnp.allclose(out, out_ref, rtol=2e-2, atol=2e-2)
    assert jnp.allclose(hidden, hidden_ref, rtol=2e-2, atol=2e-2)

    print("KERNEL_OK")
</pallas_src>

<mosaic_0001>
module attributes {stable_mosaic.version = 11 : i64} {
  func.func @gru_mlp_kernel(%arg0: i32, %arg1: i32, %arg2: memref<64x16xbf16, #tpu.memory_space<vmem>>, %arg3: memref<16x384xbf16, #tpu.memory_space<vmem>>, %arg4: memref<128x384xbf16, #tpu.memory_space<vmem>>, %arg5: memref<1x384xf32, #tpu.memory_space<vmem>>, %arg6: memref<1x128xf32, #tpu.memory_space<vmem>>, %arg7: memref<8x128xf32, #tpu.memory_space<vmem>>, %arg8: memref<128x32xbf16, #tpu.memory_space<vmem>>, %arg9: memref<1x32xf32, #tpu.memory_space<vmem>>, %arg10: memref<32x4xbf16, #tpu.memory_space<vmem>>, %arg11: memref<1x4xf32, #tpu.memory_space<vmem>>, %arg12: memref<8x4xf32, #tpu.memory_space<vmem>>, %arg13: memref<8x128xf32, #tpu.memory_space<vmem>>, %arg14: memref<8x128xf32, #tpu.memory_space<vmem>>, %arg15: memref<64x384xf32, #tpu.memory_space<vmem>>) attributes {dimension_semantics = [#tpu.dimension_semantics<parallel>, #tpu.dimension_semantics<arbitrary>], iteration_bounds = array<i64: 1, 1>, scalar_prefetch = 0 : i64, scratch_operands = 2 : i64, tpu.core_type = #tpu.core_type<tc>, window_params = [{transform_indices = @transform_0, window_bounds = array<i64: 64, 16>}, {pipeline_mode = #tpu.pipeline_mode<synchronous>, transform_indices = @transform_1, window_bounds = array<i64: 16, 384>}, {pipeline_mode = #tpu.pipeline_mode<synchronous>, transform_indices = @transform_2, window_bounds = array<i64: 128, 384>}, {pipeline_mode = #tpu.pipeline_mode<synchronous>, transform_indices = @transform_3, window_bounds = array<i64: 1, 384>}, {pipeline_mode = #tpu.pipeline_mode<synchronous>, transform_indices = @transform_4, window_bounds = array<i64: 1, 128>}, {transform_indices = @transform_5, window_bounds = array<i64: 8, 128>}, {pipeline_mode = #tpu.pipeline_mode<synchronous>, transform_indices = @transform_6, window_bounds = array<i64: 128, 32>}, {pipeline_mode = #tpu.pipeline_mode<synchronous>, transform_indices = @transform_7, window_bounds = array<i64: 1, 32>}, {pipeline_mode = #tpu.pipeline_mode<synchronous>, transform_indices = @transform_8, window_bounds = array<i64: 32, 4>}, {pipeline_mode = #tpu.pipeline_mode<synchronous>, transform_indices = @transform_9, window_bounds = array<i64: 1, 4>}, {transform_indices = @transform_10, window_bounds = array<i64: 8, 4>}, {transform_indices = @transform_11, window_bounds = array<i64: 8, 128>}]} {
    %c0_i32 = arith.constant 0 : i32
    %0 = arith.cmpi eq, %arg1, %c0_i32 : i32
    %1 = arith.extui %0 : i1 to i32
    %c0_i32_0 = arith.constant 0 : i32
    %2 = arith.cmpi ne, %1, %c0_i32_0 : i32
    scf.if %2 {
      %c0_59 = arith.constant 0 : index
      %c0_60 = arith.constant 0 : index
      %273 = vector.load %arg7[%c0_59, %c0_60] : memref<8x128xf32, #tpu.memory_space<vmem>>, vector<8x128xf32>
      %c0_61 = arith.constant 0 : index
      %c0_62 = arith.constant 0 : index
      %274 = vector.load %arg14[%c0_61, %c0_62] : memref<8x128xf32, #tpu.memory_space<vmem>>, vector<8x128xf32>
      tpu.vector_store %arg14[%c0_61, %c0_62], %273 {strides = array<i32>} : memref<8x128xf32, #tpu.memory_space<vmem>>, vector<8x128xf32>,
    } else {
    }
    %c0 = arith.constant 0 : index
    %c0_1 = arith.constant 0 : index
    %3 = vector.load %arg2[%c0, %c0_1] : memref<64x16xbf16, #tpu.memory_space<vmem>>, vector<64x16xbf16>
    %c0_2 = arith.constant 0 : index
    %c0_3 = arith.constant 0 : index
    %4 = vector.load %arg3[%c0_2, %c0_3] : memref<16x384xbf16, #tpu.memory_space<vmem>>, vector<16x384xbf16>
    %cst = arith.constant dense<0.000000e+00> : vector<64x384xf32>
    %5 = tpu.matmul %3, %4, %cst {dimension_numbers = #tpu.dot_dimension_numbers<[1], [0], [0], [1], [0, 0, 1, 1], [], []>} : vector<64x16xbf16>, vector<16x384xbf16>, vector<64x384xf32> -> vector<64x384xf32>
    %c0_4 = arith.constant 0 : index
    %c0_5 = arith.constant 0 : index
    %6 = vector.load %arg5[%c0_4, %c0_5] : memref<1x384xf32, #tpu.memory_space<vmem>>, vector<1x384xf32>
    %7 = vector.broadcast %6 : vector<1x384xf32> to vector<64x384xf32>
    %8 = arith.addf %5, %7 : vector<64x384xf32>
    %c0_6 = arith.constant 0 : index
    %c0_7 = arith.constant 0 : index
    %9 = vector.load %arg15[%c0_6, %c0_7] : memref<64x384xf32, #tpu.memory_space<vmem>>, vector<64x384xf32>
    tpu.vector_store %arg15[%c0_6, %c0_7], %8 {strides = array<i32>} : memref<64x384xf32, #tpu.memory_space<vmem>>, vector<64x384xf32>,
    %c0_8 = arith.constant 0 : index
    %c0_9 = arith.constant 0 : index
    %10 = vector.load %arg4[%c0_8, %c0_9] : memref<128x384xbf16, #tpu.memory_space<vmem>>, vector<128x384xbf16>
    %c0_10 = arith.constant 0 : index
    %c0_11 = arith.constant 0 : index
    %11 = vector.load %arg6[%c0_10, %c0_11] : memref<1x128xf32, #tpu.memory_space<vmem>>, vector<1x128xf32>
    %c0_12 = arith.constant 0 : index
    %c0_13 = arith.constant 0 : index
    %12 = vector.load %arg14[%c0_12, %c0_13] : memref<8x128xf32, #tpu.memory_space<vmem>>, vector<8x128xf32>
    %c0_i32_14 = arith.constant 0 : i32
    %c8_i32 = arith.constant 8 : i32
    %13 = arith.muli %c0_i32_14, %c8_i32 : i32
    %14 = tpu.assume_multiple %13, 8 : i32
    %15 = arith.index_cast %14 : i32 to index
    %c0_15 = arith.constant 0 : index
    %16 = vector.load %arg15[%15, %c0_15] : memref<64x384xf32, #tpu.memory_space<vmem>>, vector<8x384xf32>
    %17 = arith.truncf %12 : vector<8x128xf32> to vector<8x128xbf16>
    %cst_16 = arith.constant dense<0.000000e+00> : vector<8x384xf32>
    %18 = tpu.matmul %17, %10, %cst_16 {dimension_numbers = #tpu.dot_dimension_numbers<[1], [0], [0], [1], [0, 0, 1, 1], [], []>} : vector<8x128xbf16>, vector<128x384xbf16>, vector<8x384xf32> -> vector<8x384xf32>
    %19 = vector.extract_strided_slice %16 {offsets = [0, 0], sizes = [8, 128], strides = [1, 1]} : vector<8x384xf32> to vector<8x128xf32>
    %20 = vector.extract_strided_slice %18 {offsets = [0, 0], sizes = [8, 128], strides = [1, 1]} : vector<8x384xf32> to vector<8x128xf32>
    %21 = arith.addf %19, %20 : vector<8x128xf32>
    %22 = arith.negf %21 : vector<8x128xf32>
    %23 = math.exp %22 : vector<8x128xf32>
    %cst_17 = arith.constant 1.000000e+00 : f32
    %24 = vector.broadcast %cst_17 : f32 to vector<8x128xf32>
    %25 = arith.addf %24, %23 : vector<8x128xf32>
    %26 = arith.divf %24, %25 : vector<8x128xf32>
    %27 = vector.extract_strided_slice %16 {offsets = [0, 128], sizes = [8, 128], strides = [1, 1]} : vector<8x384xf32> to vector<8x128xf32>
    %28 = vector.extract_strided_slice %18 {offsets = [0, 128], sizes = [8, 128], strides = [1, 1]} : vector<8x384xf32> to vector<8x128xf32>
    %29 = arith.addf %27, %28 : vector<8x128xf32>
    %30 = arith.negf %29 : vector<8x128xf32>
    %31 = math.exp %30 : vector<8x128xf32>
    %cst_18 = arith.constant 1.000000e+00 : f32
    %32 = vector.broadcast %cst_18 : f32 to vector<8x128xf32>
    %33 = arith.addf %32, %31 : vector<8x128xf32>
    %34 = arith.divf %32, %33 : vector<8x128xf32>
    %35 = vector.extract_strided_slice %16 {offsets = [0, 256], sizes = [8, 128], strides = [1, 1]} : vector<8x384xf32> to vector<8x128xf32>
    %36 = vector.extract_strided_slice %18 {offsets = [0, 256], sizes = [8, 128], strides = [1, 1]} : vector<8x384xf32> to vector<8x128xf32>
    %37 = vector.broadcast %11 : vector<1x128xf32> to vector<8x128xf32>
    %38 = arith.addf %36, %37 : vector<8x128xf32>
    %39 = arith.mulf %26, %38 : vector<8x128xf32>
    %40 = arith.addf %35, %39 : vector<8x128xf32>
    %41 = math.tanh %40 : vector<8x128xf32>
    %42 = arith.subf %12, %41 : vector<8x128xf32>
    %43 = arith.mulf %34, %42 : vector<8x128xf32>
    %44 = arith.addf %41, %43 : vector<8x128xf32>
    %c1_i32 = arith.constant 1 : i32
    %c8_i32_19 = arith.constant 8 : i32
    %45 = arith.muli %c1_i32, %c8_i32_19 : i32
    %46 = tpu.assume_multiple %45, 8 : i32
    %47 = arith.index_cast %46 : i32 to index
    %c0_20 = arith.constant 0 : index
    %48 = vector.load %arg15[%47, %c0_20] : memref<64x384xf32, #tpu.memory_space<vmem>>, vector<8x384xf32>
    %49 = arith.truncf %44 : vector<8x128xf32> to vector<8x128xbf16>
    %cst_21 = arith.constant dense<0.000000e+00> : vector<8x384xf32>
    %50 = tpu.matmul %49, %10, %cst_21 {dimension_numbers = #tpu.dot_dimension_numbers<[1], [0], [0], [1], [0, 0, 1, 1], [], []>} : vector<8x128xbf16>, vector<128x384xbf16>, vector<8x384xf32> -> vector<8x384xf32>
    %51 = vector.extract_strided_slice %48 {offsets = [0, 0], sizes = [8, 128], strides = [1, 1]} : vector<8x384xf32> to vector<8x128xf32>
    %52 = vector.extract_strided_slice %50 {offsets = [0, 0], sizes = [8, 128], strides = [1, 1]} : vector<8x384xf32> to vector<8x128xf32>
    %53 = arith.addf %51, %52 : vector<8x128xf32>
    %54 = arith.negf %53 : vector<8x128xf32>
    %55 = math.exp %54 : vector<8x128xf32>
    %cst_22 = arith.constant 1.000000e+00 : f32
    %56 = vector.broadcast %cst_22 : f32 to vector<8x128xf32>
    %57 = arith.addf %56, %55 : vector<8x128xf32>
    %58 = arith.divf %56, %57 : vector<8x128xf32>
    %59 = vector.extract_strided_slice %48 {offsets = [0, 128], sizes = [8, 128], strides = [1, 1]} : vector<8x384xf32> to vector<8x128xf32>
    %60 = vector.extract_strided_slice %50 {offsets = [0, 128], sizes = [8, 128], strides = [1, 1]} : vector<8x384xf32> to vector<8x128xf32>
    %61 = arith.addf %59, %60 : vector<8x128xf32>
    %62 = arith.negf %61 : vector<8x128xf32>
    %63 = math.exp %62 : vector<8x128xf32>
    %cst_23 = arith.constant 1.000000e+00 : f32
    %64 = vector.broadcast %cst_23 : f32 to vector<8x128xf32>
    %65 = arith.addf %64, %63 : vector<8x128xf32>
    %66 = arith.divf %64, %65 : vector<8x128xf32>
    %67 = vector.extract_strided_slice %48 {offsets = [0, 256], sizes = [8, 128], strides = [1, 1]} : vector<8x384xf32> to vector<8x128xf32>
    %68 = vector.extract_strided_slice %50 {offsets = [0, 256], sizes = [8, 128], strides = [1, 1]} : vector<8x384xf32> to vector<8x128xf32>
    %69 = vector.broadcast %11 : vector<1x128xf32> to vector<8x128xf32>
    %70 = arith.addf %68, %69 : vector<8x128xf32>
    %71 = arith.mulf %58, %70 : vector<8x128xf32>
    %72 = arith.addf %67, %71 : vector<8x128xf32>
    %73 = math.tanh %72 : vector<8x128xf32>
    %74 = arith.subf %44, %73 : vector<8x128xf32>
    %75 = arith.mulf %66, %74 : vector<8x128xf32>
    %76 = arith.addf %73, %75 : vector<8x128xf32>
    %c2_i32 = arith.constant 2 : i32
    %c8_i32_24 = arith.constant 8 : i32
    %77 = arith.muli %c2_i32, %c8_i32_24 : i32
    %78 = tpu.assume_multiple %77, 8 : i32
    %79 = arith.index_cast %78 : i32 to index
    %c0_25 = arith.constant 0 : index
    %80 = vector.load %arg15[%79, %c0_25] : memref<64x384xf32, #tpu.memory_space<vmem>>, vector<8x384xf32>
    %81 = arith.truncf %76 : vector<8x128xf32> to vector<8x128xbf16>
    %cst_26 = arith.constant dense<0.000000e+00> : vector<8x384xf32>
    %82 = tpu.matmul %81, %10, %cst_26 {dimension_numbers = #tpu.dot_dimension_numbers<[1], [0], [0], [1], [0, 0, 1, 1], [], []>} : vector<8x128xbf16>, vector<128x384xbf16>, vector<8x384xf32> -> vector<8x384xf32>
    %83 = vector.extract_strided_slice %80 {offsets = [0, 0], sizes = [8, 128], strides = [1, 1]} : vector<8x384xf32> to vector<8x128xf32>
    %84 = vector.extract_strided_slice %82 {offsets = [0, 0], sizes = [8, 128], strides = [1, 1]} : vector<8x384xf32> to vector<8x128xf32>
    %85 = arith.addf %83, %84 : vector<8x128xf32>
    %86 = arith.negf %85 : vector<8x128xf32>
    %87 = math.exp %86 : vector<8x128xf32>
    %cst_27 = arith.constant 1.000000e+00 : f32
    %88 = vector.broadcast %cst_27 : f32 to vector<8x128xf32>
    %89 = arith.addf %88, %87 : vector<8x128xf32>
    %90 = arith.divf %88, %89 : vector<8x128xf32>
    %91 = vector.extract_strided_slice %80 {offsets = [0, 128], sizes = [8, 128], strides = [1, 1]} : vector<8x384xf32> to vector<8x128xf32>
    %92 = vector.extract_strided_slice %82 {offsets = [0, 128], sizes = [8, 128], strides = [1, 1]} : vector<8x384xf32> to vector<8x128xf32>
    %93 = arith.addf %91, %92 : vector<8x128xf32>
    %94 = arith.negf %93 : vector<8x128xf32>
    %95 = math.exp %94 : vector<8x128xf32>
    %cst_28 = arith.constant 1.000000e+00 : f32
    %96 = vector.broadcast %cst_28 : f32 to vector<8x128xf32>
    %97 = arith.addf %96, %95 : vector<8x128xf32>
    %98 = arith.divf %96, %97 : vector<8x128xf32>
    %99 = vector.extract_strided_slice %80 {offsets = [0, 256], sizes = [8, 128], strides = [1, 1]} : vector<8x384xf32> to vector<8x128xf32>
    %100 = vector.extract_strided_slice %82 {offsets = [0, 256], sizes = [8, 128], strides = [1, 1]} : vector<8x384xf32> to vector<8x128xf32>
    %101 = vector.broadcast %11 : vector<1x128xf32> to vector<8x128xf32>
    %102 = arith.addf %100, %101 : vector<8x128xf32>
    %103 = arith.mulf %90, %102 : vector<8x128xf32>
    %104 = arith.addf %99, %103 : vector<8x128xf32>
    %105 = math.tanh %104 : vector<8x128xf32>
    %106 = arith.subf %76, %105 : vector<8x128xf32>
    %107 = arith.mulf %98, %106 : vector<8x128xf32>
    %108 = arith.addf %105, %107 : vector<8x128xf32>
    %c3_i32 = arith.constant 3 : i32
    %c8_i32_29 = arith.constant 8 : i32
    %109 = arith.muli %c3_i32, %c8_i32_29 : i32
    %110 = tpu.assume_multiple %109, 8 : i32
    %111 = arith.index_cast %110 : i32 to index
    %c0_30 = arith.constant 0 : index
    %112 = vector.load %arg15[%111, %c0_30] : memref<64x384xf32, #tpu.memory_space<vmem>>, vector<8x384xf32>
    %113 = arith.truncf %108 : vector<8x128xf32> to vector<8x128xbf16>
    %cst_31 = arith.constant dense<0.000000e+00> : vector<8x384xf32>
    %114 = tpu.matmul %113, %10, %cst_31 {dimension_numbers = #tpu.dot_dimension_numbers<[1], [0], [0], [1], [0, 0, 1, 1], [], []>} : vector<8x128xbf16>, vector<128x384xbf16>, vector<8x384xf32> -> vector<8x384xf32>
    %115 = vector.extract_strided_slice %112 {offsets = [0, 0], sizes = [8, 128], strides = [1, 1]} : vector<8x384xf32> to vector<8x128xf32>
    %116 = vector.extract_strided_slice %114 {offsets = [0, 0], sizes = [8, 128], strides = [1, 1]} : vector<8x384xf32> to vector<8x128xf32>
    %117 = arith.addf %115, %116 : vector<8x128xf32>
    %118 = arith.negf %117 : vector<8x128xf32>
    %119 = math.exp %118 : vector<8x128xf32>
    %cst_32 = arith.constant 1.000000e+00 : f32
    %120 = vector.broadcast %cst_32 : f32 to vector<8x128xf32>
    %121 = arith.addf %120, %119 : vector<8x128xf32>
    %122 = arith.divf %120, %121 : vector<8x128xf32>
    %123 = vector.extract_strided_slice %112 {offsets = [0, 128], sizes = [8, 128], strides = [1, 1]} : vector<8x384xf32> to vector<8x128xf32>
    %124 = vector.extract_strided_slice %114 {offsets = [0, 128], sizes = [8, 128], strides = [1, 1]} : vector<8x384xf32> to vector<8x128xf32>
    %125 = arith.addf %123, %124 : vector<8x128xf32>
    %126 = arith.negf %125 : vector<8x128xf32>
    %127 = math.exp %126 : vector<8x128xf32>
    %cst_33 = arith.constant 1.000000e+00 : f32
    %128 = vector.broadcast %cst_33 : f32 to vector<8x128xf32>
    %129 = arith.addf %128, %127 : vector<8x128xf32>
    %130 = arith.divf %128, %129 : vector<8x128xf32>
    %131 = vector.extract_strided_slice %112 {offsets = [0, 256], sizes = [8, 128], strides = [1, 1]} : vector<8x384xf32> to vector<8x128xf32>
    %132 = vector.extract_strided_slice %114 {offsets = [0, 256], sizes = [8, 128], strides = [1, 1]} : vector<8x384xf32> to vector<8x128xf32>
    %133 = vector.broadcast %11 : vector<1x128xf32> to vector<8x128xf32>
    %134 = arith.addf %132, %133 : vector<8x128xf32>
    %135 = arith.mulf %122, %134 : vector<8x128xf32>
    %136 = arith.addf %131, %135 : vector<8x128xf32>
    %137 = math.tanh %136 : vector<8x128xf32>
    %138 = arith.subf %108, %137 : vector<8x128xf32>
    %139 = arith.mulf %130, %138 : vector<8x128xf32>
    %140 = arith.addf %137, %139 : vector<8x128xf32>
    %c4_i32 = arith.constant 4 : i32
    %c8_i32_34 = arith.constant 8 : i32
    %141 = arith.muli %c4_i32, %c8_i32_34 : i32
    %142 = tpu.assume_multiple %141, 8 : i32
    %143 = arith.index_cast %142 : i32 to index
    %c0_35 = arith.constant 0 : index
    %144 = vector.load %arg15[%143, %c0_35] : memref<64x384xf32, #tpu.memory_space<vmem>>, vector<8x384xf32>
    %145 = arith.truncf %140 : vector<8x128xf32> to vector<8x128xbf16>
    %cst_36 = arith.constant dense<0.000000e+00> : vector<8x384xf32>
    %146 = tpu.matmul %145, %10, %cst_36 {dimension_numbers = #tpu.dot_dimension_numbers<[1], [0], [0], [1], [0, 0, 1, 1], [], []>} : vector<8x128xbf16>, vector<128x384xbf16>, vector<8x384xf32> -> vector<8x384xf32>
    %147 = vector.extract_strided_slice %144 {offsets = [0, 0], sizes = [8, 128], strides = [1, 1]} : vector<8x384xf32> to vector<8x128xf32>
    %148 = vector.extract_strided_slice %146 {offsets = [0, 0], sizes = [8, 128], strides = [1, 1]} : vector<8x384xf32> to vector<8x128xf32>
    %149 = arith.addf %147, %148 : vector<8x128xf32>
    %150 = arith.negf %149 : vector<8x128xf32>
    %151 = math.exp %150 : vector<8x128xf32>
    %cst_37 = arith.constant 1.000000e+00 : f32
    %152 = vector.broadcast %cst_37 : f32 to vector<8x128xf32>
    %153 = arith.addf %152, %151 : vector<8x128xf32>
    %154 = arith.divf %152, %153 : vector<8x128xf32>
    %155 = vector.extract_strided_slice %144 {offsets = [0, 128], sizes = [8, 128], strides = [1, 1]} : vector<8x384xf32> to vector<8x128xf32>
    %156 = vector.extract_strided_slice %146 {offsets = [0, 128], sizes = [8, 128], strides = [1, 1]} : vector<8x384xf32> to vector<8x128xf32>
    %157 = arith.addf %155, %156 : vector<8x128xf32>
    %158 = arith.negf %157 : vector<8x128xf32>
    %159 = math.exp %158 : vector<8x128xf32>
    %cst_38 = arith.constant 1.000000e+00 : f32
    %160 = vector.broadcast %cst_38 : f32 to vector<8x128xf32>
    %161 = arith.addf %160, %159 : vector<8x128xf32>
    %162 = arith.divf %160, %161 : vector<8x128xf32>
    %163 = vector.extract_strided_slice %144 {offsets = [0, 256], sizes = [8, 128], strides = [1, 1]} : vector<8x384xf32> to vector<8x128xf32>
    %164 = vector.extract_strided_slice %146 {offsets = [0, 256], sizes = [8, 128], strides = [1, 1]} : vector<8x384xf32> to vector<8x128xf32>
    %165 = vector.broadcast %11 : vector<1x128xf32> to vector<8x128xf32>
    %166 = arith.addf %164, %165 : vector<8x128xf32>
    %167 = arith.mulf %154, %166 : vector<8x128xf32>
    %168 = arith.addf %163, %167 : vector<8x128xf32>
    %169 = math.tanh %168 : vector<8x128xf32>
    %170 = arith.subf %140, %169 : vector<8x128xf32>
    %171 = arith.mulf %162, %170 : vector<8x128xf32>
    %172 = arith.addf %169, %171 : vector<8x128xf32>
    %c5_i32 = arith.constant 5 : i32
    %c8_i32_39 = arith.constant 8 : i32
    %173 = arith.muli %c5_i32, %c8_i32_39 : i32
    %174 = tpu.assume_multiple %173, 8 : i32
    %175 = arith.index_cast %174 : i32 to index
    %c0_40 = arith.constant 0 : index
    %176 = vector.load %arg15[%175, %c0_40] : memref<64x384xf32, #tpu.memory_space<vmem>>, vector<8x384xf32>
    %177 = arith.truncf %172 : vector<8x128xf32> to vector<8x128xbf16>
    %cst_41 = arith.constant dense<0.000000e+00> : vector<8x384xf32>
    %178 = tpu.matmul %177, %10, %cst_41 {dimension_numbers = #tpu.dot_dimension_numbers<[1], [0], [0], [1], [0, 0, 1, 1], [], []>} : vector<8x128xbf16>, vector<128x384xbf16>, vector<8x384xf32> -> vector<8x384xf32>
    %179 = vector.extract_strided_slice %176 {offsets = [0, 0], sizes = [8, 128], strides = [1, 1]} : vector<8x384xf32> to vector<8x128xf32>
    %180 = vector.extract_strided_slice %178 {offsets = [0, 0], sizes = [8, 128], strides = [1, 1]} : vector<8x384xf32> to vector<8x128xf32>
    %181 = arith.addf %179, %180 : vector<8x128xf32>
    %182 = arith.negf %181 : vector<8x128xf32>
    %183 = math.exp %182 : vector<8x128xf32>
    %cst_42 = arith.constant 1.000000e+00 : f32
    %184 = vector.broadcast %cst_42 : f32 to vector<8x128xf32>
    %185 = arith.addf %184, %183 : vector<8x128xf32>
    %186 = arith.divf %184, %185 : vector<8x128xf32>
    %187 = vector.extract_strided_slice %176 {offsets = [0, 128], sizes = [8, 128], strides = [1, 1]} : vector<8x384xf32> to vector<8x128xf32>
    %188 = vector.extract_strided_slice %178 {offsets = [0, 128], sizes = [8, 128], strides = [1, 1]} : vector<8x384xf32> to vector<8x128xf32>
    %189 = arith.addf %187, %188 : vector<8x128xf32>
    %190 = arith.negf %189 : vector<8x128xf32>
    %191 = math.exp %190 : vector<8x128xf32>
    %cst_43 = arith.constant 1.000000e+00 : f32
    %192 = vector.broadcast %cst_43 : f32 to vector<8x128xf32>
    %193 = arith.addf %192, %191 : vector<8x128xf32>
    %194 = arith.divf %192, %193 : vector<8x128xf32>
    %195 = vector.extract_strided_slice %176 {offsets = [0, 256], sizes = [8, 128], strides = [1, 1]} : vector<8x384xf32> to vector<8x128xf32>
    %196 = vector.extract_strided_slice %178 {offsets = [0, 256], sizes = [8, 128], strides = [1, 1]} : vector<8x384xf32> to vector<8x128xf32>
    %197 = vector.broadcast %11 : vector<1x128xf32> to vector<8x128xf32>
    %198 = arith.addf %196, %197 : vector<8x128xf32>
    %199 = arith.mulf %186, %198 : vector<8x128xf32>
    %200 = arith.addf %195, %199 : vector<8x128xf32>
    %201 = math.tanh %200 : vector<8x128xf32>
    %202 = arith.subf %172, %201 : vector<8x128xf32>
    %203 = arith.mulf %194, %202 : vector<8x128xf32>
    %204 = arith.addf %201, %203 : vector<8x128xf32>
    %c6_i32 = arith.constant 6 : i32
    %c8_i32_44 = arith.constant 8 : i32
    %205 = arith.muli %c6_i32, %c8_i32_44 : i32
    %206 = tpu.assume_multiple %205, 8 : i32
    %207 = arith.index_cast %206 : i32 to index
    %c0_45 = arith.constant 0 : index
    %208 = vector.load %arg15[%207, %c0_45] : memref<64x384xf32, #tpu.memory_space<vmem>>, vector<8x384xf32>
    %209 = arith.truncf %204 : vector<8x128xf32> to vector<8x128xbf16>
    %cst_46 = arith.constant dense<0.000000e+00> : vector<8x384xf32>
    %210 = tpu.matmul %209, %10, %cst_46 {dimension_numbers = #tpu.dot_dimension_numbers<[1], [0], [0], [1], [0, 0, 1, 1], [], []>} : vector<8x128xbf16>, vector<128x384xbf16>, vector<8x384xf32> -> vector<8x384xf32>
    %211 = vector.extract_strided_slice %208 {offsets = [0, 0], sizes = [8, 128], strides = [1, 1]} : vector<8x384xf32> to vector<8x128xf32>
    %212 = vector.extract_strided_slice %210 {offsets = [0, 0], sizes = [8, 128], strides = [1, 1]} : vector<8x384xf32> to vector<8x128xf32>
    %213 = arith.addf %211, %212 : vector<8x128xf32>
    %214 = arith.negf %213 : vector<8x128xf32>
    %215 = math.exp %214 : vector<8x128xf32>
    %cst_47 = arith.constant 1.000000e+00 : f32
    %216 = vector.broadcast %cst_47 : f32 to vector<8x128xf32>
    %217 = arith.addf %216, %215 : vector<8x128xf32>
    %218 = arith.divf %216, %217 : vector<8x128xf32>
    %219 = vector.extract_strided_slice %208 {offsets = [0, 128], sizes = [8, 128], strides = [1, 1]} : vector<8x384xf32> to vector<8x128xf32>
    %220 = vector.extract_strided_slice %210 {offsets = [0, 128], sizes = [8, 128], strides = [1, 1]} : vector<8x384xf32> to vector<8x128xf32>
    %221 = arith.addf %219, %220 : vector<8x128xf32>
    %222 = arith.negf %221 : vector<8x128xf32>
    %223 = math.exp %222 : vector<8x128xf32>
    %cst_48 = arith.constant 1.000000e+00 : f32
    %224 = vector.broadcast %cst_48 : f32 to vector<8x128xf32>
    %225 = arith.addf %224, %223 : vector<8x128xf32>
    %226 = arith.divf %224, %225 : vector<8x128xf32>
    %227 = vector.extract_strided_slice %208 {offsets = [0, 256], sizes = [8, 128], strides = [1, 1]} : vector<8x384xf32> to vector<8x128xf32>
    %228 = vector.extract_strided_slice %210 {offsets = [0, 256], sizes = [8, 128], strides = [1, 1]} : vector<8x384xf32> to vector<8x128xf32>
    %229 = vector.broadcast %11 : vector<1x128xf32> to vector<8x128xf32>
    %230 = arith.addf %228, %229 : vector<8x128xf32>
    %231 = arith.mulf %218, %230 : vector<8x128xf32>
    %232 = arith.addf %227, %231 : vector<8x128xf32>
    %233 = math.tanh %232 : vector<8x128xf32>
    %234 = arith.subf %204, %233 : vector<8x128xf32>
    %235 = arith.mulf %226, %234 : vector<8x128xf32>
    %236 = arith.addf %233, %235 : vector<8x128xf32>
    %c7_i32 = arith.constant 7 : i32
    %c8_i32_49 = arith.constant 8 : i32
    %237 = arith.muli %c7_i32, %c8_i32_49 : i32
    %238 = tpu.assume_multiple %237, 8 : i32
    %239 = arith.index_cast %238 : i32 to index
    %c0_50 = arith.constant 0 : index
    %240 = vector.load %arg15[%239, %c0_50] : memref<64x384xf32, #tpu.memory_space<vmem>>, vector<8x384xf32>
    %241 = arith.truncf %236 : vector<8x128xf32> to vector<8x128xbf16>
    %cst_51 = arith.constant dense<0.000000e+00> : vector<8x384xf32>
    %242 = tpu.matmul %241, %10, %cst_51 {dimension_numbers = #tpu.dot_dimension_numbers<[1], [0], [0], [1], [0, 0, 1, 1], [], []>} : vector<8x128xbf16>, vector<128x384xbf16>, vector<8x384xf32> -> vector<8x384xf32>
    %243 = vector.extract_strided_slice %240 {offsets = [0, 0], sizes = [8, 128], strides = [1, 1]} : vector<8x384xf32> to vector<8x128xf32>
    %244 = vector.extract_strided_slice %242 {offsets = [0, 0], sizes = [8, 128], strides = [1, 1]} : vector<8x384xf32> to vector<8x128xf32>
    %245 = arith.addf %243, %244 : vector<8x128xf32>
    %246 = arith.negf %245 : vector<8x128xf32>
    %247 = math.exp %246 : vector<8x128xf32>
    %cst_52 = arith.constant 1.000000e+00 : f32
    %248 = vector.broadcast %cst_52 : f32 to vector<8x128xf32>
    %249 = arith.addf %248, %247 : vector<8x128xf32>
    %250 = arith.divf %248, %249 : vector<8x128xf32>
    %251 = vector.extract_strided_slice %240 {offsets = [0, 128], sizes = [8, 128], strides = [1, 1]} : vector<8x384xf32> to vector<8x128xf32>
    %252 = vector.extract_strided_slice %242 {offsets = [0, 128], sizes = [8, 128], strides = [1, 1]} : vector<8x384xf32> to vector<8x128xf32>
    %253 = arith.addf %251, %252 : vector<8x128xf32>
    %254 = arith.negf %253 : vector<8x128xf32>
    %255 = math.exp %254 : vector<8x128xf32>
    %cst_53 = arith.constant 1.000000e+00 : f32
    %256 = vector.broadcast %cst_53 : f32 to vector<8x128xf32>
    %257 = arith.addf %256, %255 : vector<8x128xf32>
    %258 = arith.divf %256, %257 : vector<8x128xf32>
    %259 = vector.extract_strided_slice %240 {offsets = [0, 256], sizes = [8, 128], strides = [1, 1]} : vector<8x384xf32> to vector<8x128xf32>
    %260 = vector.extract_strided_slice %242 {offsets = [0, 256], sizes = [8, 128], strides = [1, 1]} : vector<8x384xf32> to vector<8x128xf32>
    %261 = vector.broadcast %11 : vector<1x128xf32> to vector<8x128xf32>
    %262 = arith.addf %260, %261 : vector<8x128xf32>
    %263 = arith.mulf %250, %262 : vector<8x128xf32>
    %264 = arith.addf %259, %263 : vector<8x128xf32>
    %265 = math.tanh %264 : vector<8x128xf32>
    %266 = arith.subf %236, %265 : vector<8x128xf32>
    %267 = arith.mulf %258, %266 : vector<8x128xf32>
    %268 = arith.addf %265, %267 : vector<8x128xf32>
    %c8_i32_54 = arith.constant 8 : i32
    %c0_55 = arith.constant 0 : index
    %c0_56 = arith.constant 0 : index
    %269 = vector.load %arg14[%c0_55, %c0_56] : memref<8x128xf32, #tpu.memory_space<vmem>>, vector<8x128xf32>
    tpu.vector_store %arg14[%c0_55, %c0_56], %268 {strides = array<i32>} : memref<8x128xf32, #tpu.memory_space<vmem>>, vector<8x128xf32>,
    %c0_i32_57 = arith.constant 0 : i32
    %270 = arith.cmpi eq, %arg1, %c0_i32_57 : i32
    %271 = arith.extui %270 : i1 to i32
    %c0_i32_58 = arith.constant 0 : i32
    %272 = arith.cmpi ne, %271, %c0_i32_58 : i32
    scf.if %272 {
      %c0_59 = arith.constant 0 : index
      %c0_60 = arith.constant 0 : index
      %273 = vector.load %arg13[%c0_59, %c0_60] : memref<8x128xf32, #tpu.memory_space<vmem>>, vector<8x128xf32>
      tpu.vector_store %arg13[%c0_59, %c0_60], %268 {strides = array<i32>} : memref<8x128xf32, #tpu.memory_space<vmem>>, vector<8x128xf32>,
      %274 = arith.truncf %268 : vector<8x128xf32> to vector<8x128xbf16>
      %c0_61 = arith.constant 0 : index
      %c0_62 = arith.constant 0 : index
      %275 = vector.load %arg8[%c0_61, %c0_62] : memref<128x32xbf16, #tpu.memory_space<vmem>>, vector<128x32xbf16>
      %cst_63 = arith.constant dense<0.000000e+00> : vector<8x32xf32>
      %276 = tpu.matmul %274, %275, %cst_63 {dimension_numbers = #tpu.dot_dimension_numbers<[1], [0], [0], [1], [0, 0, 1, 1], [], []>} : vector<8x128xbf16>, vector<128x32xbf16>, vector<8x32xf32> -> vector<8x32xf32>
      %c0_64 = arith.constant 0 : index
      %c0_65 = arith.constant 0 : index
      %277 = vector.load %arg9[%c0_64, %c0_65] : memref<1x32xf32, #tpu.memory_space<vmem>>, vector<1x32xf32>
      %278 = vector.broadcast %277 : vector<1x32xf32> to vector<8x32xf32>
      %279 = arith.addf %276, %278 : vector<8x32xf32>
      %cst_66 = arith.constant 0.000000e+00 : f32
      %280 = vector.broadcast %cst_66 : f32 to vector<8x32xf32>
      %281 = arith.maximumf %279, %280 : vector<8x32xf32>
      %282 = arith.truncf %281 : vector<8x32xf32> to vector<8x32xbf16>
      %c0_67 = arith.constant 0 : index
      %c0_68 = arith.constant 0 : index
      %283 = vector.load %arg10[%c0_67, %c0_68] : memref<32x4xbf16, #tpu.memory_space<vmem>>, vector<32x4xbf16>
      %cst_69 = arith.constant dense<0.000000e+00> : vector<8x4xf32>
      %284 = tpu.matmul %282, %283, %cst_69 {dimension_numbers = #tpu.dot_dimension_numbers<[1], [0], [0], [1], [0, 0, 1, 1], [], []>} : vector<8x32xbf16>, vector<32x4xbf16>, vector<8x4xf32> -> vector<8x4xf32>
      %c0_70 = arith.constant 0 : index
      %c0_71 = arith.constant 0 : index
      %285 = vector.load %arg11[%c0_70, %c0_71] : memref<1x4xf32, #tpu.memory_space<vmem>>, vector<1x4xf32>
      %286 = vector.broadcast %285 : vector<1x4xf32> to vector<8x4xf32>
      %287 = arith.addf %284, %286 : vector<8x4xf32>
      %c0_72 = arith.constant 0 : index
      %c0_73 = arith.constant 0 : index
      %288 = vector.load %arg12[%c0_72, %c0_73] : memref<8x4xf32, #tpu.memory_space<vmem>>, vector<8x4xf32>
      tpu.vector_store %arg12[%c0_72, %c0_73], %287 {strides = array<i32>} : memref<8x4xf32, #tpu.memory_space<vmem>>, vector<8x4xf32>,
    } else {
    }
    return
  }
  func.func @transform_0(%arg0: i32, %arg1: i32) -> (i32, i32) {
    %c1_i32 = arith.constant 1 : i32
    %0 = arith.muli %arg0, %c1_i32 : i32
    %1 = arith.addi %0, %arg1 : i32
    %c0_i32 = arith.constant 0 : i32
    %c0_i32_0 = arith.constant 0 : i32
    return %1, %c0_i32 : i32, i32
  }
  func.func @transform_1(%arg0: i32, %arg1: i32) -> (i32, i32) {
    %c0_i32 = arith.constant 0 : i32
    %c0_i32_0 = arith.constant 0 : i32
    %c0_i32_1 = arith.constant 0 : i32
    return %c0_i32, %c0_i32_0 : i32, i32
  }
  func.func @transform_2(%arg0: i32, %arg1: i32) -> (i32, i32) {
    %c0_i32 = arith.constant 0 : i32
    %c0_i32_0 = arith.constant 0 : i32
    %c0_i32_1 = arith.constant 0 : i32
    return %c0_i32, %c0_i32_0 : i32, i32
  }
  func.func @transform_3(%arg0: i32, %arg1: i32) -> (i32, i32) {
    %c0_i32 = arith.constant 0 : i32
    %c0_i32_0 = arith.constant 0 : i32
    %c0_i32_1 = arith.constant 0 : i32
    return %c0_i32, %c0_i32_0 : i32, i32
  }
  func.func @transform_4(%arg0: i32, %arg1: i32) -> (i32, i32) {
    %c0_i32 = arith.constant 0 : i32
    %c0_i32_0 = arith.constant 0 : i32
    %c0_i32_1 = arith.constant 0 : i32
    return %c0_i32, %c0_i32_0 : i32, i32
  }
  func.func @transform_5(%arg0: i32, %arg1: i32) -> (i32, i32) {
    %c0_i32 = arith.constant 0 : i32
    %c0_i32_0 = arith.constant 0 : i32
    return %arg0, %c0_i32 : i32, i32
  }
  func.func @transform_6(%arg0: i32, %arg1: i32) -> (i32, i32) {
    %c0_i32 = arith.constant 0 : i32
    %c0_i32_0 = arith.constant 0 : i32
    %c0_i32_1 = arith.constant 0 : i32
    return %c0_i32, %c0_i32_0 : i32, i32
  }
  func.func @transform_7(%arg0: i32, %arg1: i32) -> (i32, i32) {
    %c0_i32 = arith.constant 0 : i32
    %c0_i32_0 = arith.constant 0 : i32
    %c0_i32_1 = arith.constant 0 : i32
    return %c0_i32, %c0_i32_0 : i32, i32
  }
  func.func @transform_8(%arg0: i32, %arg1: i32) -> (i32, i32) {
    %c0_i32 = arith.constant 0 : i32
    %c0_i32_0 = arith.constant 0 : i32
    %c0_i32_1 = arith.constant 0 : i32
    return %c0_i32, %c0_i32_0 : i32, i32
  }
  func.func @transform_9(%arg0: i32, %arg1: i32) -> (i32, i32) {
    %c0_i32 = arith.constant 0 : i32
    %c0_i32_0 = arith.constant 0 : i32
    %c0_i32_1 = arith.constant 0 : i32
    return %c0_i32, %c0_i32_0 : i32, i32
  }
  func.func @transform_10(%arg0: i32, %arg1: i32) -> (i32, i32) {
    %c0_i32 = arith.constant 0 : i32
    %c0_i32_0 = arith.constant 0 : i32
    return %arg0, %c0_i32 : i32, i32
  }
  func.func @transform_11(%arg0: i32, %arg1: i32) -> (i32, i32) {
    %c0_i32 = arith.constant 0 : i32
    %c0_i32_0 = arith.constant 0 : i32
    return %arg0, %c0_i32 : i32, i32
  }
}

module attributes {stable_mosaic.version = 11 : i64} {
  func.func @gru_mlp_kernel(%arg0: i32, %arg1: i32, %arg2: memref<64x16xbf16, #tpu.memory_space<vmem>>, %arg3: memref<16x384xbf16, #tpu.memory_space<vmem>>, %arg4: memref<128x384xbf16, #tpu.memory_space<vmem>>, %arg5: memref<1x384xf32, #tpu.memory_space<vmem>>, %arg6: memref<1x128xf32, #tpu.memory_space<vmem>>, %arg7: memref<8x128xf32, #tpu.memory_space<vmem>>, %arg8: memref<128x32xbf16, #tpu.memory_space<vmem>>, %arg9: memref<1x32xf32, #tpu.memory_space<vmem>>, %arg10: memref<32x4xbf16, #tpu.memory_space<vmem>>, %arg11: memref<1x4xf32, #tpu.memory_space<vmem>>, %arg12: memref<8x4xf32, #tpu.memory_space<vmem>>, %arg13: memref<8x128xf32, #tpu.memory_space<vmem>>, %arg14: memref<8x128xf32, #tpu.memory_space<vmem>>, %arg15: memref<64x384xf32, #tpu.memory_space<vmem>>) attributes {dimension_semantics = [#tpu.dimension_semantics<parallel>, #tpu.dimension_semantics<arbitrary>], iteration_bounds = array<i64: 1, 1>, scalar_prefetch = 0 : i64, scratch_operands = 2 : i64, tpu.core_type = #tpu.core_type<tc>, window_params = [{transform_indices = @transform_0, window_bounds = array<i64: 64, 16>}, {pipeline_mode = #tpu.pipeline_mode<synchronous>, transform_indices = @transform_1, window_bounds = array<i64: 16, 384>}, {pipeline_mode = #tpu.pipeline_mode<synchronous>, transform_indices = @transform_2, window_bounds = array<i64: 128, 384>}, {pipeline_mode = #tpu.pipeline_mode<synchronous>, transform_indices = @transform_3, window_bounds = array<i64: 1, 384>}, {pipeline_mode = #tpu.pipeline_mode<synchronous>, transform_indices = @transform_4, window_bounds = array<i64: 1, 128>}, {transform_indices = @transform_5, window_bounds = array<i64: 8, 128>}, {pipeline_mode = #tpu.pipeline_mode<synchronous>, transform_indices = @transform_6, window_bounds = array<i64: 128, 32>}, {pipeline_mode = #tpu.pipeline_mode<synchronous>, transform_indices = @transform_7, window_bounds = array<i64: 1, 32>}, {pipeline_mode = #tpu.pipeline_mode<synchronous>, transform_indices = @transform_8, window_bounds = array<i64: 32, 4>}, {pipeline_mode = #tpu.pipeline_mode<synchronous>, transform_indices = @transform_9, window_bounds = array<i64: 1, 4>}, {transform_indices = @transform_10, window_bounds = array<i64: 8, 4>}, {transform_indices = @transform_11, window_bounds = array<i64: 8, 128>}]} {
    %c0_i32 = arith.constant 0 : i32
    %0 = arith.cmpi eq, %arg1, %c0_i32 : i32
    %1 = arith.extui %0 : i1 to i32
    %c0_i32_0 = arith.constant 0 : i32
    %2 = arith.cmpi ne, %1, %c0_i32_0 : i32
    scf.if %2 {
      %c0_59 = arith.constant 0 : index
      %c0_60 = arith.constant 0 : index
      %273 = vector.load %arg7[%c0_59, %c0_60] : memref<8x128xf32, #tpu.memory_space<vmem>>, vector<8x128xf32>
      %c0_61 = arith.constant 0 : index
      %c0_62 = arith.constant 0 : index
      %274 = vector.load %arg14[%c0_61, %c0_62] : memref<8x128xf32, #tpu.memory_space<vmem>>, vector<8x128xf32>
      tpu.vector_store %arg14[%c0_61, %c0_62], %273 {strides = array<i32>} : memref<8x128xf32, #tpu.memory_space<vmem>>, vector<8x128xf32>,
    } else {
    }
    %c0 = arith.constant 0 : index
    %c0_1 = arith.constant 0 : index
    %3 = vector.load %arg2[%c0, %c0_1] : memref<64x16xbf16, #tpu.memory_space<vmem>>, vector<64x16xbf16>
    %c0_2 = arith.constant 0 : index
    %c0_3 = arith.constant 0 : index
    %4 = vector.load %arg3[%c0_2, %c0_3] : memref<16x384xbf16, #tpu.memory_space<vmem>>, vector<16x384xbf16>
    %cst = arith.constant dense<0.000000e+00> : vector<64x384xf32>
    %5 = tpu.matmul %3, %4, %cst {dimension_numbers = #tpu.dot_dimension_numbers<[1], [0], [0], [1], [0, 0, 1, 1], [], []>} : vector<64x16xbf16>, vector<16x384xbf16>, vector<64x384xf32> -> vector<64x384xf32>
    %c0_4 = arith.constant 0 : index
    %c0_5 = arith.constant 0 : index
    %6 = vector.load %arg5[%c0_4, %c0_5] : memref<1x384xf32, #tpu.memory_space<vmem>>, vector<1x384xf32>
    %7 = vector.broadcast %6 : vector<1x384xf32> to vector<64x384xf32>
    %8 = arith.addf %5, %7 : vector<64x384xf32>
    %c0_6 = arith.constant 0 : index
    %c0_7 = arith.constant 0 : index
    %9 = vector.load %arg15[%c0_6, %c0_7] : memref<64x384xf32, #tpu.memory_space<vmem>>, vector<64x384xf32>
    tpu.vector_store %arg15[%c0_6, %c0_7], %8 {strides = array<i32>} : memref<64x384xf32, #tpu.memory_space<vmem>>, vector<64x384xf32>,
    %c0_8 = arith.constant 0 : index
    %c0_9 = arith.constant 0 : index
    %10 = vector.load %arg4[%c0_8, %c0_9] : memref<128x384xbf16, #tpu.memory_space<vmem>>, vector<128x384xbf16>
    %c0_10 = arith.constant 0 : index
    %c0_11 = arith.constant 0 : index
    %11 = vector.load %arg6[%c0_10, %c0_11] : memref<1x128xf32, #tpu.memory_space<vmem>>, vector<1x128xf32>
    %c0_12 = arith.constant 0 : index
    %c0_13 = arith.constant 0 : index
    %12 = vector.load %arg14[%c0_12, %c0_13] : memref<8x128xf32, #tpu.memory_space<vmem>>, vector<8x128xf32>
    %c0_i32_14 = arith.constant 0 : i32
    %c8_i32 = arith.constant 8 : i32
    %13 = arith.muli %c0_i32_14, %c8_i32 : i32
    %14 = tpu.assume_multiple %13, 8 : i32
    %15 = arith.index_cast %14 : i32 to index
    %c0_15 = arith.constant 0 : index
    %16 = vector.load %arg15[%15, %c0_15] : memref<64x384xf32, #tpu.memory_space<vmem>>, vector<8x384xf32>
    %17 = arith.truncf %12 : vector<8x128xf32> to vector<8x128xbf16>
    %cst_16 = arith.constant dense<0.000000e+00> : vector<8x384xf32>
    %18 = tpu.matmul %17, %10, %cst_16 {dimension_numbers = #tpu.dot_dimension_numbers<[1], [0], [0], [1], [0, 0, 1, 1], [], []>} : vector<8x128xbf16>, vector<128x384xbf16>, vector<8x384xf32> -> vector<8x384xf32>
    %19 = vector.extract_strided_slice %16 {offsets = [0, 0], sizes = [8, 128], strides = [1, 1]} : vector<8x384xf32> to vector<8x128xf32>
    %20 = vector.extract_strided_slice %18 {offsets = [0, 0], sizes = [8, 128], strides = [1, 1]} : vector<8x384xf32> to vector<8x128xf32>
    %21 = arith.addf %19, %20 : vector<8x128xf32>
    %22 = arith.negf %21 : vector<8x128xf32>
    %23 = math.exp %22 : vector<8x128xf32>
    %cst_17 = arith.constant 1.000000e+00 : f32
    %24 = vector.broadcast %cst_17 : f32 to vector<8x128xf32>
    %25 = arith.addf %24, %23 : vector<8x128xf32>
    %26 = arith.divf %24, %25 : vector<8x128xf32>
    %27 = vector.extract_strided_slice %16 {offsets = [0, 128], sizes = [8, 128], strides = [1, 1]} : vector<8x384xf32> to vector<8x128xf32>
    %28 = vector.extract_strided_slice %18 {offsets = [0, 128], sizes = [8, 128], strides = [1, 1]} : vector<8x384xf32> to vector<8x128xf32>
    %29 = arith.addf %27, %28 : vector<8x128xf32>
    %30 = arith.negf %29 : vector<8x128xf32>
    %31 = math.exp %30 : vector<8x128xf32>
    %cst_18 = arith.constant 1.000000e+00 : f32
    %32 = vector.broadcast %cst_18 : f32 to vector<8x128xf32>
    %33 = arith.addf %32, %31 : vector<8x128xf32>
    %34 = arith.divf %32, %33 : vector<8x128xf32>
    %35 = vector.extract_strided_slice %16 {offsets = [0, 256], sizes = [8, 128], strides = [1, 1]} : vector<8x384xf32> to vector<8x128xf32>
    %36 = vector.extract_strided_slice %18 {offsets = [0, 256], sizes = [8, 128], strides = [1, 1]} : vector<8x384xf32> to vector<8x128xf32>
    %37 = vector.broadcast %11 : vector<1x128xf32> to vector<8x128xf32>
    %38 = arith.addf %36, %37 : vector<8x128xf32>
    %39 = arith.mulf %26, %38 : vector<8x128xf32>
    %40 = arith.addf %35, %39 : vector<8x128xf32>
    %41 = math.tanh %40 : vector<8x128xf32>
    %42 = arith.subf %12, %41 : vector<8x128xf32>
    %43 = arith.mulf %34, %42 : vector<8x128xf32>
    %44 = arith.addf %41, %43 : vector<8x128xf32>
    %c1_i32 = arith.constant 1 : i32
    %c8_i32_19 = arith.constant 8 : i32
    %45 = arith.muli %c1_i32, %c8_i32_19 : i32
    %46 = tpu.assume_multiple %45, 8 : i32
    %47 = arith.index_cast %46 : i32 to index
    %c0_20 = arith.constant 0 : index
    %48 = vector.load %arg15[%47, %c0_20] : memref<64x384xf32, #tpu.memory_space<vmem>>, vector<8x384xf32>
    %49 = arith.truncf %44 : vector<8x128xf32> to vector<8x128xbf16>
    %cst_21 = arith.constant dense<0.000000e+00> : vector<8x384xf32>
    %50 = tpu.matmul %49, %10, %cst_21 {dimension_numbers = #tpu.dot_dimension_numbers<[1], [0], [0], [1], [0, 0, 1, 1], [], []>} : vector<8x128xbf16>, vector<128x384xbf16>, vector<8x384xf32> -> vector<8x384xf32>
    %51 = vector.extract_strided_slice %48 {offsets = [0, 0], sizes = [8, 128], strides = [1, 1]} : vector<8x384xf32> to vector<8x128xf32>
    %52 = vector.extract_strided_slice %50 {offsets = [0, 0], sizes = [8, 128], strides = [1, 1]} : vector<8x384xf32> to vector<8x128xf32>
    %53 = arith.addf %51, %52 : vector<8x128xf32>
    %54 = arith.negf %53 : vector<8x128xf32>
    %55 = math.exp %54 : vector<8x128xf32>
    %cst_22 = arith.constant 1.000000e+00 : f32
    %56 = vector.broadcast %cst_22 : f32 to vector<8x128xf32>
    %57 = arith.addf %56, %55 : vector<8x128xf32>
    %58 = arith.divf %56, %57 : vector<8x128xf32>
    %59 = vector.extract_strided_slice %48 {offsets = [0, 128], sizes = [8, 128], strides = [1, 1]} : vector<8x384xf32> to vector<8x128xf32>
    %60 = vector.extract_strided_slice %50 {offsets = [0, 128], sizes = [8, 128], strides = [1, 1]} : vector<8x384xf32> to vector<8x128xf32>
    %61 = arith.addf %59, %60 : vector<8x128xf32>
    %62 = arith.negf %61 : vector<8x128xf32>
    %63 = math.exp %62 : vector<8x128xf32>
    %cst_23 = arith.constant 1.000000e+00 : f32
    %64 = vector.broadcast %cst_23 : f32 to vector<8x128xf32>
    %65 = arith.addf %64, %63 : vector<8x128xf32>
    %66 = arith.divf %64, %65 : vector<8x128xf32>
    %67 = vector.extract_strided_slice %48 {offsets = [0, 256], sizes = [8, 128], strides = [1, 1]} : vector<8x384xf32> to vector<8x128xf32>
    %68 = vector.extract_strided_slice %50 {offsets = [0, 256], sizes = [8, 128], strides = [1, 1]} : vector<8x384xf32> to vector<8x128xf32>
    %69 = vector.broadcast %11 : vector<1x128xf32> to vector<8x128xf32>
    %70 = arith.addf %68, %69 : vector<8x128xf32>
    %71 = arith.mulf %58, %70 : vector<8x128xf32>
    %72 = arith.addf %67, %71 : vector<8x128xf32>
    %73 = math.tanh %72 : vector<8x128xf32>
    %74 = arith.subf %44, %73 : vector<8x128xf32>
    %75 = arith.mulf %66, %74 : vector<8x128xf32>
    %76 = arith.addf %73, %75 : vector<8x128xf32>
    %c2_i32 = arith.constant 2 : i32
    %c8_i32_24 = arith.constant 8 : i32
    %77 = arith.muli %c2_i32, %c8_i32_24 : i32
    %78 = tpu.assume_multiple %77, 8 : i32
    %79 = arith.index_cast %78 : i32 to index
    %c0_25 = arith.constant 0 : index
    %80 = vector.load %arg15[%79, %c0_25] : memref<64x384xf32, #tpu.memory_space<vmem>>, vector<8x384xf32>
    %81 = arith.truncf %76 : vector<8x128xf32> to vector<8x128xbf16>
    %cst_26 = arith.constant dense<0.000000e+00> : vector<8x384xf32>
    %82 = tpu.matmul %81, %10, %cst_26 {dimension_numbers = #tpu.dot_dimension_numbers<[1], [0], [0], [1], [0, 0, 1, 1], [], []>} : vector<8x128xbf16>, vector<128x384xbf16>, vector<8x384xf32> -> vector<8x384xf32>
    %83 = vector.extract_strided_slice %80 {offsets = [0, 0], sizes = [8, 128], strides = [1, 1]} : vector<8x384xf32> to vector<8x128xf32>
    %84 = vector.extract_strided_slice %82 {offsets = [0, 0], sizes = [8, 128], strides = [1, 1]} : vector<8x384xf32> to vector<8x128xf32>
    %85 = arith.addf %83, %84 : vector<8x128xf32>
    %86 = arith.negf %85 : vector<8x128xf32>
    %87 = math.exp %86 : vector<8x128xf32>
    %cst_27 = arith.constant 1.000000e+00 : f32
    %88 = vector.broadcast %cst_27 : f32 to vector<8x128xf32>
    %89 = arith.addf %88, %87 : vector<8x128xf32>
    %90 = arith.divf %88, %89 : vector<8x128xf32>
    %91 = vector.extract_strided_slice %80 {offsets = [0, 128], sizes = [8, 128], strides = [1, 1]} : vector<8x384xf32> to vector<8x128xf32>
    %92 = vector.extract_strided_slice %82 {offsets = [0, 128], sizes = [8, 128], strides = [1, 1]} : vector<8x384xf32> to vector<8x128xf32>
    %93 = arith.addf %91, %92 : vector<8x128xf32>
    %94 = arith.negf %93 : vector<8x128xf32>
    %95 = math.exp %94 : vector<8x128xf32>
    %cst_28 = arith.constant 1.000000e+00 : f32
    %96 = vector.broadcast %cst_28 : f32 to vector<8x128xf32>
    %97 = arith.addf %96, %95 : vector<8x128xf32>
    %98 = arith.divf %96, %97 : vector<8x128xf32>
    %99 = vector.extract_strided_slice %80 {offsets = [0, 256], sizes = [8, 128], strides = [1, 1]} : vector<8x384xf32> to vector<8x128xf32>
    %100 = vector.extract_strided_slice %82 {offsets = [0, 256], sizes = [8, 128], strides = [1, 1]} : vector<8x384xf32> to vector<8x128xf32>
    %101 = vector.broadcast %11 : vector<1x128xf32> to vector<8x128xf32>
    %102 = arith.addf %100, %101 : vector<8x128xf32>
    %103 = arith.mulf %90, %102 : vector<8x128xf32>
    %104 = arith.addf %99, %103 : vector<8x128xf32>
    %105 = math.tanh %104 : vector<8x128xf32>
    %106 = arith.subf %76, %105 : vector<8x128xf32>
    %107 = arith.mulf %98, %106 : vector<8x128xf32>
    %108 = arith.addf %105, %107 : vector<8x128xf32>
    %c3_i32 = arith.constant 3 : i32
    %c8_i32_29 = arith.constant 8 : i32
    %109 = arith.muli %c3_i32, %c8_i32_29 : i32
    %110 = tpu.assume_multiple %109, 8 : i32
    %111 = arith.index_cast %110 : i32 to index
    %c0_30 = arith.constant 0 : index
    %112 = vector.load %arg15[%111, %c0_30] : memref<64x384xf32, #tpu.memory_space<vmem>>, vector<8x384xf32>
    %113 = arith.truncf %108 : vector<8x128xf32> to vector<8x128xbf16>
    %cst_31 = arith.constant dense<0.000000e+00> : vector<8x384xf32>
    %114 = tpu.matmul %113, %10, %cst_31 {dimension_numbers = #tpu.dot_dimension_numbers<[1], [0], [0], [1], [0, 0, 1, 1], [], []>} : vector<8x128xbf16>, vector<128x384xbf16>, vector<8x384xf32> -> vector<8x384xf32>
    %115 = vector.extract_strided_slice %112 {offsets = [0, 0], sizes = [8, 128], strides = [1, 1]} : vector<8x384xf32> to vector<8x128xf32>
    %116 = vector.extract_strided_slice %114 {offsets = [0, 0], sizes = [8, 128], strides = [1, 1]} : vector<8x384xf32> to vector<8x128xf32>
    %117 = arith.addf %115, %116 : vector<8x128xf32>
    %118 = arith.negf %117 : vector<8x128xf32>
    %119 = math.exp %118 : vector<8x128xf32>
    %cst_32 = arith.constant 1.000000e+00 : f32
    %120 = vector.broadcast %cst_32 : f32 to vector<8x128xf32>
    %121 = arith.addf %120, %119 : vector<8x128xf32>
    %122 = arith.divf %120, %121 : vector<8x128xf32>
    %123 = vector.extract_strided_slice %112 {offsets = [0, 128], sizes = [8, 128], strides = [1, 1]} : vector<8x384xf32> to vector<8x128xf32>
    %124 = vector.extract_strided_slice %114 {offsets = [0, 128], sizes = [8, 128], strides = [1, 1]} : vector<8x384xf32> to vector<8x128xf32>
    %125 = arith.addf %123, %124 : vector<8x128xf32>
    %126 = arith.negf %125 : vector<8x128xf32>
    %127 = math.exp %126 : vector<8x128xf32>
    %cst_33 = arith.constant 1.000000e+00 : f32
    %128 = vector.broadcast %cst_33 : f32 to vector<8x128xf32>
    %129 = arith.addf %128, %127 : vector<8x128xf32>
    %130 = arith.divf %128, %129 : vector<8x128xf32>
    %131 = vector.extract_strided_slice %112 {offsets = [0, 256], sizes = [8, 128], strides = [1, 1]} : vector<8x384xf32> to vector<8x128xf32>
    %132 = vector.extract_strided_slice %114 {offsets = [0, 256], sizes = [8, 128], strides = [1, 1]} : vector<8x384xf32> to vector<8x128xf32>
    %133 = vector.broadcast %11 : vector<1x128xf32> to vector<8x128xf32>
    %134 = arith.addf %132, %133 : vector<8x128xf32>
    %135 = arith.mulf %122, %134 : vector<8x128xf32>
    %136 = arith.addf %131, %135 : vector<8x128xf32>
    %137 = math.tanh %136 : vector<8x128xf32>
    %138 = arith.subf %108, %137 : vector<8x128xf32>
    %139 = arith.mulf %130, %138 : vector<8x128xf32>
    %140 = arith.addf %137, %139 : vector<8x128xf32>
    %c4_i32 = arith.constant 4 : i32
    %c8_i32_34 = arith.constant 8 : i32
    %141 = arith.muli %c4_i32, %c8_i32_34 : i32
    %142 = tpu.assume_multiple %141, 8 : i32
    %143 = arith.index_cast %142 : i32 to index
    %c0_35 = arith.constant 0 : index
    %144 = vector.load %arg15[%143, %c0_35] : memref<64x384xf32, #tpu.memory_space<vmem>>, vector<8x384xf32>
    %145 = arith.truncf %140 : vector<8x128xf32> to vector<8x128xbf16>
    %cst_36 = arith.constant dense<0.000000e+00> : vector<8x384xf32>
    %146 = tpu.matmul %145, %10, %cst_36 {dimension_numbers = #tpu.dot_dimension_numbers<[1], [0], [0], [1], [0, 0, 1, 1], [], []>} : vector<8x128xbf16>, vector<128x384xbf16>, vector<8x384xf32> -> vector<8x384xf32>
    %147 = vector.extract_strided_slice %144 {offsets = [0, 0], sizes = [8, 128], strides = [1, 1]} : vector<8x384xf32> to vector<8x128xf32>
    %148 = vector.extract_strided_slice %146 {offsets = [0, 0], sizes = [8, 128], strides = [1, 1]} : vector<8x384xf32> to vector<8x128xf32>
    %149 = arith.addf %147, %148 : vector<8x128xf32>
    %150 = arith.negf %149 : vector<8x128xf32>
    %151 = math.exp %150 : vector<8x128xf32>
    %cst_37 = arith.constant 1.000000e+00 : f32
    %152 = vector.broadcast %cst_37 : f32 to vector<8x128xf32>
    %153 = arith.addf %152, %151 : vector<8x128xf32>
    %154 = arith.divf %152, %153 : vector<8x128xf32>
    %155 = vector.extract_strided_slice %144 {offsets = [0, 128], sizes = [8, 128], strides = [1, 1]} : vector<8x384xf32> to vector<8x128xf32>
    %156 = vector.extract_strided_slice %146 {offsets = [0, 128], sizes = [8, 128], strides = [1, 1]} : vector<8x384xf32> to vector<8x128xf32>
    %157 = arith.addf %155, %156 : vector<8x128xf32>
    %158 = arith.negf %157 : vector<8x128xf32>
    %159 = math.exp %158 : vector<8x128xf32>
    %cst_38 = arith.constant 1.000000e+00 : f32
    %160 = vector.broadcast %cst_38 : f32 to vector<8x128xf32>
    %161 = arith.addf %160, %159 : vector<8x128xf32>
    %162 = arith.divf %160, %161 : vector<8x128xf32>
    %163 = vector.extract_strided_slice %144 {offsets = [0, 256], sizes = [8, 128], strides = [1, 1]} : vector<8x384xf32> to vector<8x128xf32>
    %164 = vector.extract_strided_slice %146 {offsets = [0, 256], sizes = [8, 128], strides = [1, 1]} : vector<8x384xf32> to vector<8x128xf32>
    %165 = vector.broadcast %11 : vector<1x128xf32> to vector<8x128xf32>
    %166 = arith.addf %164, %165 : vector<8x128xf32>
    %167 = arith.mulf %154, %166 : vector<8x128xf32>
    %168 = arith.addf %163, %167 : vector<8x128xf32>
    %169 = math.tanh %168 : vector<8x128xf32>
    %170 = arith.subf %140, %169 : vector<8x128xf32>
    %171 = arith.mulf %162, %170 : vector<8x128xf32>
    %172 = arith.addf %169, %171 : vector<8x128xf32>
    %c5_i32 = arith.constant 5 : i32
    %c8_i32_39 = arith.constant 8 : i32
    %173 = arith.muli %c5_i32, %c8_i32_39 : i32
    %174 = tpu.assume_multiple %173, 8 : i32
    %175 = arith.index_cast %174 : i32 to index
    %c0_40 = arith.constant 0 : index
    %176 = vector.load %arg15[%175, %c0_40] : memref<64x384xf32, #tpu.memory_space<vmem>>, vector<8x384xf32>
    %177 = arith.truncf %172 : vector<8x128xf32> to vector<8x128xbf16>
    %cst_41 = arith.constant dense<0.000000e+00> : vector<8x384xf32>
    %178 = tpu.matmul %177, %10, %cst_41 {dimension_numbers = #tpu.dot_dimension_numbers<[1], [0], [0], [1], [0, 0, 1, 1], [], []>} : vector<8x128xbf16>, vector<128x384xbf16>, vector<8x384xf32> -> vector<8x384xf32>
    %179 = vector.extract_strided_slice %176 {offsets = [0, 0], sizes = [8, 128], strides = [1, 1]} : vector<8x384xf32> to vector<8x128xf32>
    %180 = vector.extract_strided_slice %178 {offsets = [0, 0], sizes = [8, 128], strides = [1, 1]} : vector<8x384xf32> to vector<8x128xf32>
    %181 = arith.addf %179, %180 : vector<8x128xf32>
    %182 = arith.negf %181 : vector<8x128xf32>
    %183 = math.exp %182 : vector<8x128xf32>
    %cst_42 = arith.constant 1.000000e+00 : f32
    %184 = vector.broadcast %cst_42 : f32 to vector<8x128xf32>
    %185 = arith.addf %184, %183 : vector<8x128xf32>
    %186 = arith.divf %184, %185 : vector<8x128xf32>
    %187 = vector.extract_strided_slice %176 {offsets = [0, 128], sizes = [8, 128], strides = [1, 1]} : vector<8x384xf32> to vector<8x128xf32>
    %188 = vector.extract_strided_slice %178 {offsets = [0, 128], sizes = [8, 128], strides = [1, 1]} : vector<8x384xf32> to vector<8x128xf32>
    %189 = arith.addf %187, %188 : vector<8x128xf32>
    %190 = arith.negf %189 : vector<8x128xf32>
    %191 = math.exp %190 : vector<8x128xf32>
    %cst_43 = arith.constant 1.000000e+00 : f32
    %192 = vector.broadcast %cst_43 : f32 to vector<8x128xf32>
    %193 = arith.addf %192, %191 : vector<8x128xf32>
    %194 = arith.divf %192, %193 : vector<8x128xf32>
    %195 = vector.extract_strided_slice %176 {offsets = [0, 256], sizes = [8, 128], strides = [1, 1]} : vector<8x384xf32> to vector<8x128xf32>
    %196 = vector.extract_strided_slice %178 {offsets = [0, 256], sizes = [8, 128], strides = [1, 1]} : vector<8x384xf32> to vector<8x128xf32>
    %197 = vector.broadcast %11 : vector<1x128xf32> to vector<8x128xf32>
    %198 = arith.addf %196, %197 : vector<8x128xf32>
    %199 = arith.mulf %186, %198 : vector<8x128xf32>
    %200 = arith.addf %195, %199 : vector<8x128xf32>
    %201 = math.tanh %200 : vector<8x128xf32>
    %202 = arith.subf %172, %201 : vector<8x128xf32>
    %203 = arith.mulf %194, %202 : vector<8x128xf32>
    %204 = arith.addf %201, %203 : vector<8x128xf32>
    %c6_i32 = arith.constant 6 : i32
    %c8_i32_44 = arith.constant 8 : i32
    %205 = arith.muli %c6_i32, %c8_i32_44 : i32
    %206 = tpu.assume_multiple %205, 8 : i32
    %207 = arith.index_cast %206 : i32 to index
    %c0_45 = arith.constant 0 : index
    %208 = vector.load %arg15[%207, %c0_45] : memref<64x384xf32, #tpu.memory_space<vmem>>, vector<8x384xf32>
    %209 = arith.truncf %204 : vector<8x128xf32> to vector<8x128xbf16>
    %cst_46 = arith.constant dense<0.000000e+00> : vector<8x384xf32>
    %210 = tpu.matmul %209, %10, %cst_46 {dimension_numbers = #tpu.dot_dimension_numbers<[1], [0], [0], [1], [0, 0, 1, 1], [], []>} : vector<8x128xbf16>, vector<128x384xbf16>, vector<8x384xf32> -> vector<8x384xf32>
    %211 = vector.extract_strided_slice %208 {offsets = [0, 0], sizes = [8, 128], strides = [1, 1]} : vector<8x384xf32> to vector<8x128xf32>
    %212 = vector.extract_strided_slice %210 {offsets = [0, 0], sizes = [8, 128], strides = [1, 1]} : vector<8x384xf32> to vector<8x128xf32>
    %213 = arith.addf %211, %212 : vector<8x128xf32>
    %214 = arith.negf %213 : vector<8x128xf32>
    %215 = math.exp %214 : vector<8x128xf32>
    %cst_47 = arith.constant 1.000000e+00 : f32
    %216 = vector.broadcast %cst_47 : f32 to vector<8x128xf32>
    %217 = arith.addf %216, %215 : vector<8x128xf32>
    %218 = arith.divf %216, %217 : vector<8x128xf32>
    %219 = vector.extract_strided_slice %208 {offsets = [0, 128], sizes = [8, 128], strides = [1, 1]} : vector<8x384xf32> to vector<8x128xf32>
    %220 = vector.extract_strided_slice %210 {offsets = [0, 128], sizes = [8, 128], strides = [1, 1]} : vector<8x384xf32> to vector<8x128xf32>
    %221 = arith.addf %219, %220 : vector<8x128xf32>
    %222 = arith.negf %221 : vector<8x128xf32>
    %223 = math.exp %222 : vector<8x128xf32>
    %cst_48 = arith.constant 1.000000e+00 : f32
    %224 = vector.broadcast %cst_48 : f32 to vector<8x128xf32>
    %225 = arith.addf %224, %223 : vector<8x128xf32>
    %226 = arith.divf %224, %225 : vector<8x128xf32>
    %227 = vector.extract_strided_slice %208 {offsets = [0, 256], sizes = [8, 128], strides = [1, 1]} : vector<8x384xf32> to vector<8x128xf32>
    %228 = vector.extract_strided_slice %210 {offsets = [0, 256], sizes = [8, 128], strides = [1, 1]} : vector<8x384xf32> to vector<8x128xf32>
    %229 = vector.broadcast %11 : vector<1x128xf32> to vector<8x128xf32>
    %230 = arith.addf %228, %229 : vector<8x128xf32>
    %231 = arith.mulf %218, %230 : vector<8x128xf32>
    %232 = arith.addf %227, %231 : vector<8x128xf32>
    %233 = math.tanh %232 : vector<8x128xf32>
    %234 = arith.subf %204, %233 : vector<8x128xf32>
    %235 = arith.mulf %226, %234 : vector<8x128xf32>
    %236 = arith.addf %233, %235 : vector<8x128xf32>
    %c7_i32 = arith.constant 7 : i32
    %c8_i32_49 = arith.constant 8 : i32
    %237 = arith.muli %c7_i32, %c8_i32_49 : i32
    %238 = tpu.assume_multiple %237, 8 : i32
    %239 = arith.index_cast %238 : i32 to index
    %c0_50 = arith.constant 0 : index
    %240 = vector.load %arg15[%239, %c0_50] : memref<64x384xf32, #tpu.memory_space<vmem>>, vector<8x384xf32>
    %241 = arith.truncf %236 : vector<8x128xf32> to vector<8x128xbf16>
    %cst_51 = arith.constant dense<0.000000e+00> : vector<8x384xf32>
    %242 = tpu.matmul %241, %10, %cst_51 {dimension_numbers = #tpu.dot_dimension_numbers<[1], [0], [0], [1], [0, 0, 1, 1], [], []>} : vector<8x128xbf16>, vector<128x384xbf16>, vector<8x384xf32> -> vector<8x384xf32>
    %243 = vector.extract_strided_slice %240 {offsets = [0, 0], sizes = [8, 128], strides = [1, 1]} : vector<8x384xf32> to vector<8x128xf32>
    %244 = vector.extract_strided_slice %242 {offsets = [0, 0], sizes = [8, 128], strides = [1, 1]} : vector<8x384xf32> to vector<8x128xf32>
    %245 = arith.addf %243, %244 : vector<8x128xf32>
    %246 = arith.negf %245 : vector<8x128xf32>
    %247 = math.exp %246 : vector<8x128xf32>
    %cst_52 = arith.constant 1.000000e+00 : f32
    %248 = vector.broadcast %cst_52 : f32 to vector<8x128xf32>
    %249 = arith.addf %248, %247 : vector<8x128xf32>
    %250 = arith.divf %248, %249 : vector<8x128xf32>
    %251 = vector.extract_strided_slice %240 {offsets = [0, 128], sizes = [8, 128], strides = [1, 1]} : vector<8x384xf32> to vector<8x128xf32>
    %252 = vector.extract_strided_slice %242 {offsets = [0, 128], sizes = [8, 128], strides = [1, 1]} : vector<8x384xf32> to vector<8x128xf32>
    %253 = arith.addf %251, %252 : vector<8x128xf32>
    %254 = arith.negf %253 : vector<8x128xf32>
    %255 = math.exp %254 : vector<8x128xf32>
    %cst_53 = arith.constant 1.000000e+00 : f32
    %256 = vector.broadcast %cst_53 : f32 to vector<8x128xf32>
    %257 = arith.addf %256, %255 : vector<8x128xf32>
    %258 = arith.divf %256, %257 : vector<8x128xf32>
    %259 = vector.extract_strided_slice %240 {offsets = [0, 256], sizes = [8, 128], strides = [1, 1]} : vector<8x384xf32> to vector<8x128xf32>
    %260 = vector.extract_strided_slice %242 {offsets = [0, 256], sizes = [8, 128], strides = [1, 1]} : vector<8x384xf32> to vector<8x128xf32>
    %261 = vector.broadcast %11 : vector<1x128xf32> to vector<8x128xf32>
    %262 = arith.addf %260, %261 : vector<8x128xf32>
    %263 = arith.mulf %250, %262 : vector<8x128xf32>
    %264 = arith.addf %259, %263 : vector<8x128xf32>
    %265 = math.tanh %264 : vector<8x128xf32>
    %266 = arith.subf %236, %265 : vector<8x128xf32>
    %267 = arith.mulf %258, %266 : vector<8x128xf32>
    %268 = arith.addf %265, %267 : vector<8x128xf32>
    %c8_i32_54 = arith.constant 8 : i32
    %c0_55 = arith.constant 0 : index
    %c0_56 = arith.constant 0 : index
    %269 = vector.load %arg14[%c0_55, %c0_56] : memref<8x128xf32, #tpu.memory_space<vmem>>, vector<8x128xf32>
    tpu.vector_store %arg14[%c0_55, %c0_56], %268 {strides = array<i32>} : memref<8x128xf32, #tpu.memory_space<vmem>>, vector<8x128xf32>,
    %c0_i32_57 = arith.constant 0 : i32
    %270 = arith.cmpi eq, %arg1, %c0_i32_57 : i32
    %271 = arith.extui %270 : i1 to i32
    %c0_i32_58 = arith.constant 0 : i32
    %272 = arith.cmpi ne, %271, %c0_i32_58 : i32
    scf.if %272 {
      %c0_59 = arith.constant 0 : index
      %c0_60 = arith.constant 0 : index
      %273 = vector.load %arg13[%c0_59, %c0_60] : memref<8x128xf32, #tpu.memory_space<vmem>>, vector<8x128xf32>
      tpu.vector_store %arg13[%c0_59, %c0_60], %268 {strides = array<i32>} : memref<8x128xf32, #tpu.memory_space<vmem>>, vector<8x128xf32>,
      %274 = arith.truncf %268 : vector<8x128xf32> to vector<8x128xbf16>
      %c0_61 = arith.constant 0 : index
      %c0_62 = arith.constant 0 : index
      %275 = vector.load %arg8[%c0_61, %c0_62] : memref<128x32xbf16, #tpu.memory_space<vmem>>, vector<128x32xbf16>
      %cst_63 = arith.constant dense<0.000000e+00> : vector<8x32xf32>
      %276 = tpu.matmul %274, %275, %cst_63 {dimension_numbers = #tpu.dot_dimension_numbers<[1], [0], [0], [1], [0, 0, 1, 1], [], []>} : vector<8x128xbf16>, vector<128x32xbf16>, vector<8x32xf32> -> vector<8x32xf32>
      %c0_64 = arith.constant 0 : index
      %c0_65 = arith.constant 0 : index
      %277 = vector.load %arg9[%c0_64, %c0_65] : memref<1x32xf32, #tpu.memory_space<vmem>>, vector<1x32xf32>
      %278 = vector.broadcast %277 : vector<1x32xf32> to vector<8x32xf32>
      %279 = arith.addf %276, %278 : vector<8x32xf32>
      %cst_66 = arith.constant 0.000000e+00 : f32
      %280 = vector.broadcast %cst_66 : f32 to vector<8x32xf32>
      %281 = arith.maximumf %279, %280 : vector<8x32xf32>
      %282 = arith.truncf %281 : vector<8x32xf32> to vector<8x32xbf16>
      %c0_67 = arith.constant 0 : index
      %c0_68 = arith.constant 0 : index
      %283 = vector.load %arg10[%c0_67, %c0_68] : memref<32x4xbf16, #tpu.memory_space<vmem>>, vector<32x4xbf16>
      %cst_69 = arith.constant dense<0.000000e+00> : vector<8x4xf32>
      %284 = tpu.matmul %282, %283, %cst_69 {dimension_numbers = #tpu.dot_dimension_numbers<[1], [0], [0], [1], [0, 0, 1, 1], [], []>} : vector<8x32xbf16>, vector<32x4xbf16>, vector<8x4xf32> -> vector<8x4xf32>
      %c0_70 = arith.constant 0 : index
      %c0_71 = arith.constant 0 : index
      %285 = vector.load %arg11[%c0_70, %c0_71] : memref<1x4xf32, #tpu.memory_space<vmem>>, vector<1x4xf32>
      %286 = vector.broadcast %285 : vector<1x4xf32> to vector<8x4xf32>
      %287 = arith.addf %284, %286 : vector<8x4xf32>
      %c0_72 = arith.constant 0 : index
      %c0_73 = arith.constant 0 : index
      %288 = vector.load %arg12[%c0_72, %c0_73] : memref<8x4xf32, #tpu.memory_space<vmem>>, vector<8x4xf32>
      tpu.vector_store %arg12[%c0_72, %c0_73], %287 {strides = array<i32>} : memref<8x4xf32, #tpu.memory_space<vmem>>, vector<8x4xf32>,
    } else {
    }
    return
  }
  func.func @transform_0(%arg0: i32, %arg1: i32) -> (i32, i32) {
    %c1_i32 = arith.constant 1 : i32
    %0 = arith.muli %arg0, %c1_i32 : i32
    %1 = arith.addi %0, %arg1 : i32
    %c0_i32 = arith.constant 0 : i32
    %c0_i32_0 = arith.constant 0 : i32
    return %1, %c0_i32 : i32, i32
  }
  func.func @transform_1(%arg0: i32, %arg1: i32) -> (i32, i32) {
    %c0_i32 = arith.constant 0 : i32
    %c0_i32_0 = arith.constant 0 : i32
    %c0_i32_1 = arith.constant 0 : i32
    return %c0_i32, %c0_i32_0 : i32, i32
  }
  func.func @transform_2(%arg0: i32, %arg1: i32) -> (i32, i32) {
    %c0_i32 = arith.constant 0 : i32
    %c0_i32_0 = arith.constant 0 : i32
    %c0_i32_1 = arith.constant 0 : i32
    return %c0_i32, %c0_i32_0 : i32, i32
  }
  func.func @transform_3(%arg0: i32, %arg1: i32) -> (i32, i32) {
    %c0_i32 = arith.constant 0 : i32
    %c0_i32_0 = arith.constant 0 : i32
    %c0_i32_1 = arith.constant 0 : i32
    return %c0_i32, %c0_i32_0 : i32, i32
  }
  func.func @transform_4(%arg0: i32, %arg1: i32) -> (i32, i32) {
    %c0_i32 = arith.constant 0 : i32
    %c0_i32_0 = arith.constant 0 : i32
    %c0_i32_1 = arith.constant 0 : i32
    return %c0_i32, %c0_i32_0 : i32, i32
  }
  func.func @transform_5(%arg0: i32, %arg1: i32) -> (i32, i32) {
    %c0_i32 = arith.constant 0 : i32
    %c0_i32_0 = arith.constant 0 : i32
    return %arg0, %c0_i32 : i32, i32
  }
  func.func @transform_6(%arg0: i32, %arg1: i32) -> (i32, i32) {
    %c0_i32 = arith.constant 0 : i32
    %c0_i32_0 = arith.constant 0 : i32
    %c0_i32_1 = arith.constant 0 : i32
    return %c0_i32, %c0_i32_0 : i32, i32
  }
  func.func @transform_7(%arg0: i32, %arg1: i32) -> (i32, i32) {
    %c0_i32 = arith.constant 0 : i32
    %c0_i32_0 = arith.constant 0 : i32
    %c0_i32_1 = arith.constant 0 : i32
    return %c0_i32, %c0_i32_0 : i32, i32
  }
  func.func @transform_8(%arg0: i32, %arg1: i32) -> (i32, i32) {
    %c0_i32 = arith.constant 0 : i32
    %c0_i32_0 = arith.constant 0 : i32
    %c0_i32_1 = arith.constant 0 : i32
    return %c0_i32, %c0_i32_0 : i32, i32
  }
  func.func @transform_9(%arg0: i32, %arg1: i32) -> (i32, i32) {
    %c0_i32 = arith.constant 0 : i32
    %c0_i32_0 = arith.constant 0 : i32
    %c0_i32_1 = arith.constant 0 : i32
    return %c0_i32, %c0_i32_0 : i32, i32
  }
  func.func @transform_10(%arg0: i32, %arg1: i32) -> (i32, i32) {
    %c0_i32 = arith.constant 0 : i32
    %c0_i32_0 = arith.constant 0 : i32
    return %arg0, %c0_i32 : i32, i32
  }
  func.func @transform_11(%arg0: i32, %arg1: i32) -> (i32, i32) {
    %c0_i32 = arith.constant 0 : i32
    %c0_i32_0 = arith.constant 0 : i32
    return %arg0, %c0_i32 : i32, i32
  }
}

</mosaic_0001>

<llo_original>
// kernel: tpu_custom_call.1
$region0: #{tpu_custom_call.1}
  #allocation0 [shape = 'u32[]', space=smem, size = 0x4, offset = 0x4, fixed_abs, tag = 'smem constant byte address 0x4 - core index']
  #allocation1 [shape = 'u32[72,128]{1,0:T(1,128)}', space=vmem, size = 0x9000, scoped, tag = 'internal scratch']
  #allocation2 [shape = 'f32[8,128]{1,0:T(8,128)}', space=vmem, size = 0x1000, scoped, tag = 'scratch operand']
  #allocation3 [shape = 'f32[64,384]{1,0:T(8,128)}', space=vmem, size = 0x18000, scoped, tag = 'scratch operand']
  %s0 = inlined_call_operand.vmem [shape: bf16[64,16], index: 0, kind: input, shape index: {}]
  %s1 = inlined_call_operand.vmem [shape: bf16[16,384], index: 1, kind: input, shape index: {}]
  %s2 = inlined_call_operand.hbm [shape: bf16[128,384], index: 2, kind: input, shape index: {}]
  %s3 = inlined_call_operand.vmem [shape: f32[1,384], index: 3, kind: input, shape index: {}]
  %s4 = inlined_call_operand.vmem [shape: f32[1,128], index: 4, kind: input, shape index: {}]
  %s5 = inlined_call_operand.vmem [shape: f32[8,128], index: 5, kind: input, shape index: {}]
  %s6 = inlined_call_operand.vmem [shape: bf16[128,32], index: 6, kind: input, shape index: {}]
  %s7 = inlined_call_operand.vmem [shape: f32[1,32], index: 7, kind: input, shape index: {}]
  %s8 = inlined_call_operand.vmem [shape: bf16[32,4], index: 8, kind: input, shape index: {}]
  %s9 = inlined_call_operand.vmem [shape: f32[1,4], index: 9, kind: input, shape index: {}]
  %s10 = inlined_call_operand.vmem [shape: f32[8,4], index: 10, kind: output, shape index: {0}]
  %s11 = inlined_call_operand.hbm [shape: f32[8,128], index: 11, kind: output, shape index: {1}]
  %12 = xla_tuple %s10, %s11
  %s13 = sld [smem:[#allocation0]]
  $region70: #{tpu_custom_call.1} parent=0
    _
  %s15 = ssub.s32 1, %s13
  %s16 = scalar_select 0, %s15, %s13
  $region1: #{tpu_custom_call.1} parent=0
    #allocation4 [shape = 'u8[98304]{0}', space=vmem, size = 0x18000, scoped, tag = 'input window, operand 2, single buffered']
    #allocation5 [shape = 's32[1]{0}', space=sflag, size = 0x4, scoped, tag = 'scoped memory for tpu_custom_call.1']
    #allocation6 [shape = 's32[1]{0}', space=sflag, size = 0x4, scoped, tag = 'scoped memory for tpu_custom_call.1']
    #allocation7 [shape = 'u8[4096]{0}', space=vmem, size = 0x1000, scoped, tag = 'output window, operand 1, single buffered']
    %17 = vsyncpa [#allocation5], 0
    %18 = vsyncpa [#allocation6], 0
    // Predicated region
    $region2: #{tpu_custom_call.1} parent=1 // pred_check
      _
    $region3: #{tpu_custom_call.1} parent=1 // pred_check_branch
      %20 = sbr.rel (0) target = $region5
    $region4: #{tpu_custom_call.1} parent=1 // pred_region
      %s21 = sadd.s32 0, 0
      %s22 = smul.u32 8, %s21
      %p23 = scmp.lt.s32.totalorder %s22, 7
      %s24 = scalar_select %p23, %s22, 7
      %s25 = smul.addr %s24, 4
      %s26 = scalar_lea.vmem %s0, %s25
      %s27 = sadd.s32 0, 0
      %s28 = smul.u32 8, %s27
    $region5: #{tpu_custom_call.1} parent=1 // pred_fallthru
      _
    // Predicated region
    $region6: #{tpu_custom_call.1} parent=1 // pred_check
      _
    $region7: #{tpu_custom_call.1} parent=1 // pred_check_branch
      %30 = sbr.rel (0) target = $region9
    $region8: #{tpu_custom_call.1} parent=1 // pred_region
      _
    $region9: #{tpu_custom_call.1} parent=1 // pred_fallthru
      _
    // Predicated region
    $region10: #{tpu_custom_call.1} parent=1 // pred_check
      _
    $region11: #{tpu_custom_call.1} parent=1 // pred_check_branch
      %32 = sbr.rel (0) target = $region13
    $region12: #{tpu_custom_call.1} parent=1 // pred_region
      %34 = vsyncadd [#allocation5], 0
      %s35 = sshll.u32 %s2, 4
      %s36 = int_to_ptr.hbm [resolvable:$true] %s35
      %s37 = sshll.u32 [#allocation4], 4
      %s38 = int_to_ptr.vmem [resolvable:$true] %s37
      %43 = dma.hbm_to_vmem [thread:$0]  %s36, 3072, %s38, [#allocation5], 192, 192, 12
    $region13: #{tpu_custom_call.1} parent=1 // pred_fallthru
      _
    // Predicated region
    $region14: #{tpu_custom_call.1} parent=1 // pred_check
      _
    $region15: #{tpu_custom_call.1} parent=1 // pred_check_branch
      %45 = sbr.rel (0) target = $region17
    $region16: #{tpu_custom_call.1} parent=1 // pred_region
      _
    $region17: #{tpu_custom_call.1} parent=1 // pred_fallthru
      _
    // Predicated region
    $region18: #{tpu_custom_call.1} parent=1 // pred_check
      _
    $region19: #{tpu_custom_call.1} parent=1 // pred_check_branch
      %47 = sbr.rel (0) target = $region21
    $region20: #{tpu_custom_call.1} parent=1 // pred_region
      _
    $region21: #{tpu_custom_call.1} parent=1 // pred_fallthru
      _
    // Predicated region
    $region22: #{tpu_custom_call.1} parent=1 // pred_check
      _
    $region23: #{tpu_custom_call.1} parent=1 // pred_check_branch
      %49 = sbr.rel (0) target = $region25
    $region24: #{tpu_custom_call.1} parent=1 // pred_region
      _
    $region25: #{tpu_custom_call.1} parent=1 // pred_fallthru
      _
    // Predicated region
    $region26: #{tpu_custom_call.1} parent=1 // pred_check
      _
    $region27: #{tpu_custom_call.1} parent=1 // pred_check_branch
      %51 = sbr.rel (0) target = $region29
    $region28: #{tpu_custom_call.1} parent=1 // pred_region
      _
    $region29: #{tpu_custom_call.1} parent=1 // pred_fallthru
      _
    // Predicated region
    $region30: #{tpu_custom_call.1} parent=1 // pred_check
      _
    $region31: #{tpu_custom_call.1} parent=1 // pred_check_branch
      %53 = sbr.rel (0) target = $region33
    $region32: #{tpu_custom_call.1} parent=1 // pred_region
      _
    $region33: #{tpu_custom_call.1} parent=1 // pred_fallthru
      _
    // Predicated region
    $region34: #{tpu_custom_call.1} parent=1 // pred_check
      _
    $region35: #{tpu_custom_call.1} parent=1 // pred_check_branch
      %55 = sbr.rel (0) target = $region37
    $region36: #{tpu_custom_call.1} parent=1 // pred_region
      _
    $region37: #{tpu_custom_call.1} parent=1 // pred_fallthru
      _
    // Predicated region
    $region38: #{tpu_custom_call.1} parent=1 // pred_check
      _
    $region39: #{tpu_custom_call.1} parent=1 // pred_check_branch
      %57 = sbr.rel (0) target = $region41
    $region40: #{tpu_custom_call.1} parent=1 // pred_region
      _
    $region41: #{tpu_custom_call.1} parent=1 // pred_fallthru
      _
    // Predicated region
    $region42: #{tpu_custom_call.1} parent=1 // pred_check
      _
    $region43: #{tpu_custom_call.1} parent=1 // pred_check_branch
      %59 = sbr.rel (0) target = $region45
    $region44: #{tpu_custom_call.1} parent=1 // pred_region
      %61 = dma.done [#allocation5], 3072
    $region45: #{tpu_custom_call.1} parent=1 // pred_fallthru
      _
    %s62 = sadd.s32 0, 0
    %s63 = smul.u32 8, %s62
    %p64 = scmp.lt.s32.totalorder %s63, 7
    %s65 = scalar_select %p64, %s63, 7
    %s66 = smul.addr %s65, 4
    %s67 = scalar_lea.vmem %s0, %s66
    %s68 = sadd.s32 0, 0
    %s69 = smul.u32 8, %s68
    %p70 = scmp.lt.s32.totalorder %s69, 7
    %s71 = scalar_select %p70, %s69, 7
    %s72 = smul.addr %s71, 4
    %s73 = scalar_lea.vmem %s0, %s72
    %s74 = sadd.s32 0, 0
    %s75 = smul.u32 8, %s74
    %p77 = scmp.eq.s32.totalorder 0, 0
    // Predicated region
    $region46: #{tpu_custom_call.1} parent=1 // pred_check
      %p78 = pneg %p77
    $region47: #{tpu_custom_call.1} parent=1 // pred_check_branch
      %80 = sbr.rel (%p78) target = $region49
    $region48: #{tpu_custom_call.1} parent=1 // pred_region
      %v81 = vld [vmem:[%s5] sm:$0xff]
      %82 = vst [vmem:[#allocation2] sm:$0xff] %v81
    $region49: #{tpu_custom_call.1} parent=1 // pred_fallthru
      _
    %v83 = vld [vmem:[%s73] sm:$0xf]
    %v84 = vld [vmem:[%s73 + $0x4] sm:$0xf]
    %v85 = vld [vmem:[%s73 + $0x8] sm:$0xf]
    %v86 = vld [vmem:[%s73 + $0xc] sm:$0xf]
    %v87 = vld [vmem:[%s73 + $0x10] sm:$0xf]
    %v88 = vld [vmem:[%s73 + $0x14] sm:$0xf]
    %v89 = vld [vmem:[%s73 + $0x18] sm:$0xf]
    %v90 = vld [vmem:[%s73 + $0x1c] sm:$0xf]
    %v91 = vld [vmem:[%s1] sm:$0xff]
    %v92 = vld [vmem:[%s1 + $0x8] sm:$0xf]
    %v93 = vld [vmem:[%s1 + $0xc] sm:$0xff]
    %v94 = vld [vmem:[%s1 + $0x14] sm:$0xf]
    %v95 = vld [vmem:[%s3] sm:$0x7]
    %v97 = vperm.slane %v95, 0
    %v98 = vperm.slane %v95, 1
    %v99 = vperm.slane %v95, 2
    %v111 = vunpack.c.l.b16 %v83
    %v112 = vunpack.c.l.b16 %v84
    %v113 = vunpack.c.l.b16 %v85
    %v114 = vunpack.c.l.b16 %v86
    %v115 = vunpack.c.l.b16 %v87
    %v116 = vunpack.c.l.b16 %v88
    %v117 = vunpack.c.l.b16 %v89
    %v118 = vunpack.c.l.b16 %v90
    %v119 = vpack.c.b16 %v112, %v111
    %v120 = vpack.c.b16 %v114, %v113
    %v121 = vpack.c.b16 %v116, %v115
    %v122 = vpack.c.b16 %v118, %v117
    %v127 = vunpack.c.l.b16 %v91
    %v128 = vunpack.c.h.b16 %v91
    %v129 = vunpack.c.l.b16 %v92
    %v130 = vunpack.c.l.b16 %v93
    %v131 = vunpack.c.h.b16 %v93
    %v132 = vunpack.c.l.b16 %v94
    %v133 = vpack.c.b16 %v130, %v127
    %v134 = vpack.c.b16 %v131, %v128
    %v135 = vpack.c.b16 %v132, %v129
    %vm139 = vcmask 130048
    %v141 = vsel %vm139, %v119, 0
    %v144 = vsel %vm139, %v120, 0
    %v147 = vsel %vm139, %v121, 0
    %v150 = vsel %vm139, %v122, 0
    %152 = vmatpush.bf16.msra.mxu0 0
    %153 = vmatpush.bf16.msra.mxu0 0
    %154 = vmatpush.bf16.msra.mxu0 0
    %155 = vmatpush.bf16.msra.mxu0 0
    %156 = vmatpush.bf16.msra.mxu0 0
    %157 = vmatpush.bf16.msra.mxu0 0
    %158 = vmatpush.bf16.msra.mxu0 0
    %159 = vmatpush.bf16.msra.mxu0 %v133
    %160 = vmatmul.bf16.gmra.mxu0 %v141
    %v161 = vpop.f32.mrf.mxu0
    %v162 = vadd.f32 %v97, %v161
    %v163 = vpop.f32.mrf.mxu0
    %v164 = vadd.f32 %v97, %v163
    %165 = vmatmul.bf16.gmra.mxu0 %v144
    %v166 = vpop.f32.mrf.mxu0
    %v167 = vadd.f32 %v97, %v166
    %v168 = vpop.f32.mrf.mxu0
    %v169 = vadd.f32 %v97, %v168
    %170 = vmatmul.bf16.gmra.mxu0 %v147
    %v171 = vpop.f32.mrf.mxu0
    %v172 = vadd.f32 %v97, %v171
    %v173 = vpop.f32.mrf.mxu0
    %v174 = vadd.f32 %v97, %v173
    %175 = vmatmul.bf16.gmra.mxu0 %v150
    %v176 = vpop.f32.mrf.mxu0
    %v177 = vadd.f32 %v97, %v176
    %v178 = vpop.f32.mrf.mxu0
    %v179 = vadd.f32 %v97, %v178
    %180 = vdwg.mxu0
    %181 = vmatpush.bf16.msra.mxu0 0
    %182 = vmatpush.bf16.msra.mxu0 0
    %183 = vmatpush.bf16.msra.mxu0 0
    %184 = vmatpush.bf16.msra.mxu0 0
    %185 = vmatpush.bf16.msra.mxu0 0
    %186 = vmatpush.bf16.msra.mxu0 0
    %187 = vmatpush.bf16.msra.mxu0 0
    %188 = vmatpush.bf16.msra.mxu0 %v134
    %189 = vmatmul.bf16.gmra.mxu0 %v141
    %v190 = vpop.f32.mrf.mxu0
    %v191 = vadd.f32 %v98, %v190
    %v192 = vpop.f32.mrf.mxu0
    %v193 = vadd.f32 %v98, %v192
    %194 = vmatmul.bf16.gmra.mxu0 %v144
    %v195 = vpop.f32.mrf.mxu0
    %v196 = vadd.f32 %v98, %v195
    %v197 = vpop.f32.mrf.mxu0
    %v198 = vadd.f32 %v98, %v197
    %199 = vmatmul.bf16.gmra.mxu0 %v147
    %v200 = vpop.f32.mrf.mxu0
    %v201 = vadd.f32 %v98, %v200
    %v202 = vpop.f32.mrf.mxu0
    %v203 = vadd.f32 %v98, %v202
    %204 = vmatmul.bf16.gmra.mxu0 %v150
    %v205 = vpop.f32.mrf.mxu0
    %v206 = vadd.f32 %v98, %v205
    %v207 = vpop.f32.mrf.mxu0
    %v208 = vadd.f32 %v98, %v207
    %209 = vdwg.mxu0
    %210 = vmatpush.bf16.msra.mxu0 0
    %211 = vmatpush.bf16.msra.mxu0 0
    %212 = vmatpush.bf16.msra.mxu0 0
    %213 = vmatpush.bf16.msra.mxu0 0
    %214 = vmatpush.bf16.msra.mxu0 0
    %215 = vmatpush.bf16.msra.mxu0 0
    %216 = vmatpush.bf16.msra.mxu0 0
    %217 = vmatpush.bf16.msra.mxu0 %v135
    %218 = vmatmul.bf16.gmra.mxu0 %v141
    %v219 = vpop.f32.mrf.mxu0
    %v220 = vadd.f32 %v99, %v219
    %v221 = vpop.f32.mrf.mxu0
    %v222 = vadd.f32 %v99, %v221
    %223 = vmatmul.bf16.gmra.mxu0 %v144
    %v224 = vpop.f32.mrf.mxu0
    %v225 = vadd.f32 %v99, %v224
    %v226 = vpop.f32.mrf.mxu0
    %v227 = vadd.f32 %v99, %v226
    %228 = vmatmul.bf16.gmra.mxu0 %v147
    %v229 = vpop.f32.mrf.mxu0
    %v230 = vadd.f32 %v99, %v229
    %v231 = vpop.f32.mrf.mxu0
    %v232 = vadd.f32 %v99, %v231
    %233 = vmatmul.bf16.gmra.mxu0 %v150
    %v234 = vpop.f32.mrf.mxu0
    %v235 = vadd.f32 %v99, %v234
    %v236 = vpop.f32.mrf.mxu0
    %v237 = vadd.f32 %v99, %v236
    %238 = vdwg.mxu0
    %239 = vst [vmem:[#allocation3] sm:$0xff] %v162
    %240 = vst [vmem:[#allocation3 + $0x8] sm:$0xff] %v191
    %241 = vst [vmem:[#allocation3 + $0x10] sm:$0xff] %v220
    %242 = vst [vmem:[#allocation3 + $0x18] sm:$0xff] %v164
    %243 = vst [vmem:[#allocation3 + $0x20] sm:$0xff] %v193
    %244 = vst [vmem:[#allocation3 + $0x28] sm:$0xff] %v222
    %245 = vst [vmem:[#allocation3 + $0x30] sm:$0xff] %v167
    %246 = vst [vmem:[#allocation3 + $0x38] sm:$0xff] %v196
    %247 = vst [vmem:[#allocation3 + $0x40] sm:$0xff] %v225
    %248 = vst [vmem:[#allocation3 + $0x48] sm:$0xff] %v169
    %249 = vst [vmem:[#allocation3 + $0x50] sm:$0xff] %v198
    %250 = vst [vmem:[#allocation3 + $0x58] sm:$0xff] %v227
    %251 = vst [vmem:[#allocation3 + $0x60] sm:$0xff] %v172
    %252 = vst [vmem:[#allocation3 + $0x68] sm:$0xff] %v201
    %253 = vst [vmem:[#allocation3 + $0x70] sm:$0xff] %v230
    %254 = vst [vmem:[#allocation3 + $0x78] sm:$0xff] %v174
    %255 = vst [vmem:[#allocation3 + $0x80] sm:$0xff] %v203
    %256 = vst [vmem:[#allocation3 + $0x88] sm:$0xff] %v232
    %257 = vst [vmem:[#allocation3 + $0x90] sm:$0xff] %v177
    %258 = vst [vmem:[#allocation3 + $0x98] sm:$0xff] %v206
    %259 = vst [vmem:[#allocation3 + $0xa0] sm:$0xff] %v235
    %260 = vst [vmem:[#allocation3 + $0xa8] sm:$0xff] %v179
    %261 = vst [vmem:[#allocation3 + $0xb0] sm:$0xff] %v208
    %262 = vst [vmem:[#allocation3 + $0xb8] sm:$0xff] %v237
    %v263 = vld [vmem:[#allocation4] sm:$0xff]
    %v264 = vld [vmem:[#allocation4 + $0x8] sm:$0xf]
    %v265 = vld [vmem:[#allocation4 + $0xc] sm:$0xff]
    %v266 = vld [vmem:[#allocation4 + $0x14] sm:$0xf]
    %v267 = vld [vmem:[#allocation4 + $0x18] sm:$0xff]
    %v268 = vld [vmem:[#allocation4 + $0x20] sm:$0xf]
    %v269 = vld [vmem:[#allocation4 + $0x24] sm:$0xff]
    %v270 = vld [vmem:[#allocation4 + $0x2c] sm:$0xf]
    %v271 = vld [vmem:[#allocation4 + $0x30] sm:$0xff]
    %v272 = vld [vmem:[#allocation4 + $0x38] sm:$0xf]
    %v273 = vld [vmem:[#allocation4 + $0x3c] sm:$0xff]
    %v274 = vld [vmem:[#allocation4 + $0x44] sm:$0xf]
    %v275 = vld [vmem:[#allocation4 + $0x48] sm:$0xff]
    %v276 = vld [vmem:[#allocation4 + $0x50] sm:$0xf]
    %v277 = vld [vmem:[#allocation4 + $0x54] sm:$0xff]
    %v278 = vld [vmem:[#allocation4 + $0x5c] sm:$0xf]
    %v279 = vld [vmem:[#allocation4 + $0x60] sm:$0xff]
    %v280 = vld [vmem:[#allocation4 + $0x68] sm:$0xf]
    %v281 = vld [vmem:[#allocation4 + $0x6c] sm:$0xff]
    %v282 = vld [vmem:[#allocation4 + $0x74] sm:$0xf]
    %v283 = vld [vmem:[#allocation4 + $0x78] sm:$0xff]
    %v284 = vld [vmem:[#allocation4 + $0x80] sm:$0xf]
    %v285 = vld [vmem:[#allocation4 + $0x84] sm:$0xff]
    %v286 = vld [vmem:[#allocation4 + $0x8c] sm:$0xf]
    %v287 = vld [vmem:[#allocation4 + $0x90] sm:$0xff]
    %v288 = vld [vmem:[#allocation4 + $0x98] sm:$0xf]
    %v289 = vld [vmem:[#allocation4 + $0x9c] sm:$0xff]
    %v290 = vld [vmem:[#allocation4 + $0xa4] sm:$0xf]
    %v291 = vld [vmem:[#allocation4 + $0xa8] sm:$0xff]
    %v292 = vld [vmem:[#allocation4 + $0xb0] sm:$0xf]
    %v293 = vld [vmem:[#allocation4 + $0xb4] sm:$0xff]
    %v294 = vld [vmem:[#allocation4 + $0xbc] sm:$0xf]
    %v295 = vld [vmem:[%s4] sm:$0x1]
    %v296 = vld [vmem:[#allocation2] sm:$0xff]
    %s297 = smul.u32 0, 3
    %s298 = smul.addr %s297, 8
    %s299 = scalar_lea.vmem [#allocation3], %s298
    %v300 = vld [vmem:[%s299] sm:$0xff]
    %v301 = vld [vmem:[%s299 + $0x8] sm:$0xff]
    %v302 = vld [vmem:[%s299 + $0x10] sm:$0xff]
    %v303 = vpack.c.bf16 %v296, %v296
    %v336 = vunpack.c.l.b16 %v263
    %v337 = vunpack.c.h.b16 %v263
    %v338 = vunpack.c.l.b16 %v264
    %v339 = vunpack.c.l.b16 %v265
    %v340 = vunpack.c.h.b16 %v265
    %v341 = vunpack.c.l.b16 %v266
    %v342 = vunpack.c.l.b16 %v267
    %v343 = vunpack.c.h.b16 %v267
    %v344 = vunpack.c.l.b16 %v268
    %v345 = vunpack.c.l.b16 %v269
    %v346 = vunpack.c.h.b16 %v269
    %v347 = vunpack.c.l.b16 %v270
    %v348 = vunpack.c.l.b16 %v271
    %v349 = vunpack.c.h.b16 %v271
    %v350 = vunpack.c.l.b16 %v272
    %v351 = vunpack.c.l.b16 %v273
    %v352 = vunpack.c.h.b16 %v273
    %v353 = vunpack.c.l.b16 %v274
    %v354 = vunpack.c.l.b16 %v275
    %v355 = vunpack.c.h.b16 %v275
    %v356 = vunpack.c.l.b16 %v276
    %v357 = vunpack.c.l.b16 %v277
    %v358 = vunpack.c.h.b16 %v277
    %v359 = vunpack.c.l.b16 %v278
    %v360 = vunpack.c.l.b16 %v279
    %v361 = vunpack.c.h.b16 %v279
    %v362 = vunpack.c.l.b16 %v280
    %v363 = vunpack.c.l.b16 %v281
    %v364 = vunpack.c.h.b16 %v281
    %v365 = vunpack.c.l.b16 %v282
    %v366 = vunpack.c.l.b16 %v283
    %v367 = vunpack.c.h.b16 %v283
    %v368 = vunpack.c.l.b16 %v284
    %v369 = vunpack.c.l.b16 %v285
    %v370 = vunpack.c.h.b16 %v285
    %v371 = vunpack.c.l.b16 %v286
    %v372 = vunpack.c.l.b16 %v287
    %v373 = vunpack.c.h.b16 %v287
    %v374 = vunpack.c.l.b16 %v288
    %v375 = vunpack.c.l.b16 %v289
    %v376 = vunpack.c.h.b16 %v289
    %v377 = vunpack.c.l.b16 %v290
    %v378 = vunpack.c.l.b16 %v291
    %v379 = vunpack.c.h.b16 %v291
    %v380 = vunpack.c.l.b16 %v292
    %v381 = vunpack.c.l.b16 %v293
    %v382 = vunpack.c.h.b16 %v293
    %v383 = vunpack.c.l.b16 %v294
    %v384 = vpack.c.b16 %v339, %v336
    %v385 = vpack.c.b16 %v340, %v337
    %v386 = vpack.c.b16 %v341, %v338
    %v387 = vpack.c.b16 %v345, %v342
    %v388 = vpack.c.b16 %v346, %v343
    %v389 = vpack.c.b16 %v347, %v344
    %v390 = vpack.c.b16 %v351, %v348
    %v391 = vpack.c.b16 %v352, %v349
    %v392 = vpack.c.b16 %v353, %v350
    %v393 = vpack.c.b16 %v357, %v354
    %v394 = vpack.c.b16 %v358, %v355
    %v395 = vpack.c.b16 %v359, %v356
    %v396 = vpack.c.b16 %v363, %v360
    %v397 = vpack.c.b16 %v364, %v361
    %v398 = vpack.c.b16 %v365, %v362
    %v399 = vpack.c.b16 %v369, %v366
    %v400 = vpack.c.b16 %v370, %v367
    %v401 = vpack.c.b16 %v371, %v368
    %v402 = vpack.c.b16 %v375, %v372
    %v403 = vpack.c.b16 %v376, %v373
    %v404 = vpack.c.b16 %v377, %v374
    %v405 = vpack.c.b16 %v381, %v378
    %v406 = vpack.c.b16 %v382, %v379
    %v407 = vpack.c.b16 %v383, %v380
    %432 = vmatpush.bf16.msra.mxu0 %v405
    %433 = vmatpush.bf16.msra.mxu0 %v402
    %434 = vmatpush.bf16.msra.mxu0 %v399
    %435 = vmatpush.bf16.msra.mxu0 %v396
    %436 = vmatpush.bf16.msra.mxu0 %v393
    %437 = vmatpush.bf16.msra.mxu0 %v390
    %438 = vmatpush.bf16.msra.mxu0 %v387
    %439 = vmatpush.bf16.msra.mxu0 %v384
    %440 = vmatmul.bf16.gmra.mxu0 %v303
    %v441 = vpop.f32.mrf.mxu0
    %v442 = vadd.f32 0.0, %v441
    %v443 = vpop.f32.mrf.mxu0
    %444 = vdwg.mxu0
    %445 = vmatpush.bf16.msra.mxu0 %v406
    %446 = vmatpush.bf16.msra.mxu0 %v403
    %447 = vmatpush.bf16.msra.mxu0 %v400
    %448 = vmatpush.bf16.msra.mxu0 %v397
    %449 = vmatpush.bf16.msra.mxu0 %v394
    %450 = vmatpush.bf16.msra.mxu0 %v391
    %451 = vmatpush.bf16.msra.mxu0 %v388
    %452 = vmatpush.bf16.msra.mxu0 %v385
    %453 = vmatmul.bf16.gmra.mxu0 %v303
    %v454 = vpop.f32.mrf.mxu0
    %v455 = vadd.f32 0.0, %v454
    %v456 = vpop.f32.mrf.mxu0
    %457 = vdwg.mxu0
    %458 = vmatpush.bf16.msra.mxu0 %v407
    %459 = vmatpush.bf16.msra.mxu0 %v404
    %460 = vmatpush.bf16.msra.mxu0 %v401
    %461 = vmatpush.bf16.msra.mxu0 %v398
    %462 = vmatpush.bf16.msra.mxu0 %v395
    %463 = vmatpush.bf16.msra.mxu0 %v392
    %464 = vmatpush.bf16.msra.mxu0 %v389
    %465 = vmatpush.bf16.msra.mxu0 %v386
    %466 = vmatmul.bf16.gmra.mxu0 %v303
    %v467 = vpop.f32.mrf.mxu0
    %v468 = vadd.f32 0.0, %v467
    %v469 = vpop.f32.mrf.mxu0
    %470 = vdwg.mxu0
    %v471 = vadd.f32 %v300, %v442
    %v472 = vxor.u32 %v471, 2147483648
    %v473 = vmul.f32 %v472, 1.442695
    %v474 = vpow.pop %v473
    %v475 = vadd.f32 %v474, 1.0
    %v476 = vrcp.pop %v475
    %v477 = vmul.f32 %v475, %v476
    %v478 = vsub.f32 1.0, %v477
    %v479 = vmul.f32 %v476, %v478
    %v480 = vadd.f32 %v476, %v479
    %vm481 = vweird.f32 %v475
    %vm482 = vweird.f32 %v476
    %vm483 = vmor %vm481, %vm482
    %v484 = vsel %vm483, %v476, %v480
    %v485 = vand.u32 2147483647, %v475
    %vm486 = vcmp.eq.f32.partialorder %v485, 8.507059e+37
    %v487 = vand.u32 %v475, 2147483648
    %v488 = vor.u32 1.1754944e-38, %v487
    %v489 = vsel %vm486, %v488, %v484
    %v490 = vmul.f32 1.0, %v489
    %v491 = vadd.f32 %v301, %v455
    %v492 = vxor.u32 %v491, 2147483648
    %v493 = vmul.f32 %v492, 1.442695
    %v494 = vpow.pop %v493
    %v495 = vadd.f32 %v494, 1.0
    %v496 = vrcp.pop %v495
    %v497 = vmul.f32 %v495, %v496
    %v498 = vsub.f32 1.0, %v497
    %v499 = vmul.f32 %v496, %v498
    %v500 = vadd.f32 %v496, %v499
    %vm501 = vweird.f32 %v495
    %vm502 = vweird.f32 %v496
    %vm503 = vmor %vm501, %vm502
    %v504 = vsel %vm503, %v496, %v500
    %v505 = vand.u32 2147483647, %v495
    %vm506 = vcmp.eq.f32.partialorder %v505, 8.507059e+37
    %v507 = vand.u32 %v495, 2147483648
    %v508 = vor.u32 1.1754944e-38, %v507
    %v509 = vsel %vm506, %v508, %v504
    %v510 = vmul.f32 1.0, %v509
    %v512 = vperm.slane %v295, 0
    %v514 = vadd.f32 %v468, %v512
    %v515 = vmul.f32 %v490, %v514
    %v516 = vadd.f32 %v302, %v515
    %v517 = vtanh.pop %v516
    %v518 = vsub.f32 %v296, %v517
    %v519 = vmul.f32 %v510, %v518
    %v520 = vadd.f32 %v517, %v519
    %s521 = smul.u32 1, 3
    %s522 = smul.addr %s521, 8
    %s523 = scalar_lea.vmem [#allocation3], %s522
    %v524 = vld [vmem:[%s523] sm:$0xff]
    %v525 = vld [vmem:[%s523 + $0x8] sm:$0xff]
    %v526 = vld [vmem:[%s523 + $0x10] sm:$0xff]
    %v527 = vpack.c.bf16 %v520, %v520
    %528 = vmatpush.bf16.msra.mxu0 %v405
    %529 = vmatpush.bf16.msra.mxu0 %v402
    %530 = vmatpush.bf16.msra.mxu0 %v399
    %531 = vmatpush.bf16.msra.mxu0 %v396
    %532 = vmatpush.bf16.msra.mxu0 %v393
    %533 = vmatpush.bf16.msra.mxu0 %v390
    %534 = vmatpush.bf16.msra.mxu0 %v387
    %535 = vmatpush.bf16.msra.mxu0 %v384
    %536 = vmatmul.bf16.gmra.mxu0 %v527
    %v537 = vpop.f32.mrf.mxu0
    %v538 = vadd.f32 0.0, %v537
    %v539 = vpop.f32.mrf.mxu0
    %540 = vdwg.mxu0
    %541 = vmatpush.bf16.msra.mxu0 %v406
    %542 = vmatpush.bf16.msra.mxu0 %v403
    %543 = vmatpush.bf16.msra.mxu0 %v400
    %544 = vmatpush.bf16.msra.mxu0 %v397
    %545 = vmatpush.bf16.msra.mxu0 %v394
    %546 = vmatpush.bf16.msra.mxu0 %v391
    %547 = vmatpush.bf16.msra.mxu0 %v388
    %548 = vmatpush.bf16.msra.mxu0 %v385
    %549 = vmatmul.bf16.gmra.mxu0 %v527
    %v550 = vpop.f32.mrf.mxu0
    %v551 = vadd.f32 0.0, %v550
    %v552 = vpop.f32.mrf.mxu0
    %553 = vdwg.mxu0
    %554 = vmatpush.bf16.msra.mxu0 %v407
    %555 = vmatpush.bf16.msra.mxu0 %v404
    %556 = vmatpush.bf16.msra.mxu0 %v401
    %557 = vmatpush.bf16.msra.mxu0 %v398
    %558 = vmatpush.bf16.msra.mxu0 %v395
    %559 = vmatpush.bf16.msra.mxu0 %v392
    %560 = vmatpush.bf16.msra.mxu0 %v389
    %561 = vmatpush.bf16.msra.mxu0 %v386
    %562 = vmatmul.bf16.gmra.mxu0 %v527
    %v563 = vpop.f32.mrf.mxu0
    %v564 = vadd.f32 0.0, %v563
    %v565 = vpop.f32.mrf.mxu0
    %566 = vdwg.mxu0
    %v567 = vadd.f32 %v524, %v538
    %v568 = vxor.u32 %v567, 2147483648
    %v569 = vmul.f32 %v568, 1.442695
    %v570 = vpow.pop %v569
    %v571 = vadd.f32 %v570, 1.0
    %v572 = vrcp.pop %v571
    %v573 = vmul.f32 %v571, %v572
    %v574 = vsub.f32 1.0, %v573
    %v575 = vmul.f32 %v572, %v574
    %v576 = vadd.f32 %v572, %v575
    %vm577 = vweird.f32 %v571
    %vm578 = vweird.f32 %v572
    %vm579 = vmor %vm577, %vm578
    %v580 = vsel %vm579, %v572, %v576
    %v581 = vand.u32 2147483647, %v571
    %vm582 = vcmp.eq.f32.partialorder %v581, 8.507059e+37
    %v583 = vand.u32 %v571, 2147483648
    %v584 = vor.u32 1.1754944e-38, %v583
    %v585 = vsel %vm582, %v584, %v580
    %v586 = vmul.f32 1.0, %v585
    %v587 = vadd.f32 %v525, %v551
    %v588 = vxor.u32 %v587, 2147483648
    %v589 = vmul.f32 %v588, 1.442695
    %v590 = vpow.pop %v589
    %v591 = vadd.f32 %v590, 1.0
    %v592 = vrcp.pop %v591
    %v593 = vmul.f32 %v591, %v592
    %v594 = vsub.f32 1.0, %v593
    %v595 = vmul.f32 %v592, %v594
    %v596 = vadd.f32 %v592, %v595
    %vm597 = vweird.f32 %v591
    %vm598 = vweird.f32 %v592
    %vm599 = vmor %vm597, %vm598
    %v600 = vsel %vm599, %v592, %v596
    %v601 = vand.u32 2147483647, %v591
    %vm602 = vcmp.eq.f32.partialorder %v601, 8.507059e+37
    %v603 = vand.u32 %v591, 2147483648
    %v604 = vor.u32 1.1754944e-38, %v603
    %v605 = vsel %vm602, %v604, %v600
    %v606 = vmul.f32 1.0, %v605
    %v607 = vadd.f32 %v564, %v512
    %v608 = vmul.f32 %v586, %v607
    %v609 = vadd.f32 %v526, %v608
    %v610 = vtanh.pop %v609
    %v611 = vsub.f32 %v520, %v610
    %v612 = vmul.f32 %v606, %v611
    %v613 = vadd.f32 %v610, %v612
    %s614 = smul.u32 2, 3
    %s615 = smul.addr %s614, 8
    %s616 = scalar_lea.vmem [#allocation3], %s615
    %v617 = vld [vmem:[%s616] sm:$0xff]
    %v618 = vld [vmem:[%s616 + $0x8] sm:$0xff]
    %v619 = vld [vmem:[%s616 + $0x10] sm:$0xff]
    %v620 = vpack.c.bf16 %v613, %v613
    %621 = vmatpush.bf16.msra.mxu0 %v405
    %622 = vmatpush.bf16.msra.mxu0 %v402
    %623 = vmatpush.bf16.msra.mxu0 %v399
    %624 = vmatpush.bf16.msra.mxu0 %v396
    %625 = vmatpush.bf16.msra.mxu0 %v393
    %626 = vmatpush.bf16.msra.mxu0 %v390
    %627 = vmatpush.bf16.msra.mxu0 %v387
    %628 = vmatpush.bf16.msra.mxu0 %v384
    %629 = vmatmul.bf16.gmra.mxu0 %v620
    %v630 = vpop.f32.mrf.mxu0
    %v631 = vadd.f32 0.0, %v630
    %v632 = vpop.f32.mrf.mxu0
    %633 = vdwg.mxu0
    %634 = vmatpush.bf16.msra.mxu0 %v406
    %635 = vmatpush.bf16.msra.mxu0 %v403
    %636 = vmatpush.bf16.msra.mxu0 %v400
    %637 = vmatpush.bf16.msra.mxu0 %v397
    %638 = vmatpush.bf16.msra.mxu0 %v394
    %639 = vmatpush.bf16.msra.mxu0 %v391
    %640 = vmatpush.bf16.msra.mxu0 %v388
    %641 = vmatpush.bf16.msra.mxu0 %v385
    %642 = vmatmul.bf16.gmra.mxu0 %v620
    %v643 = vpop.f32.mrf.mxu0
    %v644 = vadd.f32 0.0, %v643
    %v645 = vpop.f32.mrf.mxu0
    %646 = vdwg.mxu0
    %647 = vmatpush.bf16.msra.mxu0 %v407
    %648 = vmatpush.bf16.msra.mxu0 %v404
    %649 = vmatpush.bf16.msra.mxu0 %v401
    %650 = vmatpush.bf16.msra.mxu0 %v398
    %651 = vmatpush.bf16.msra.mxu0 %v395
    %652 = vmatpush.bf16.msra.mxu0 %v392
    %653 = vmatpush.bf16.msra.mxu0 %v389
    %654 = vmatpush.bf16.msra.mxu0 %v386
    %655 = vmatmul.bf16.gmra.mxu0 %v620
    %v656 = vpop.f32.mrf.mxu0
    %v657 = vadd.f32 0.0, %v656
    %v658 = vpop.f32.mrf.mxu0
    %659 = vdwg.mxu0
    %v660 = vadd.f32 %v617, %v631
    %v661 = vxor.u32 %v660, 2147483648
    %v662 = vmul.f32 %v661, 1.442695
    %v663 = vpow.pop %v662
    %v664 = vadd.f32 %v663, 1.0
    %v665 = vrcp.pop %v664
    %v666 = vmul.f32 %v664, %v665
    %v667 = vsub.f32 1.0, %v666
    %v668 = vmul.f32 %v665, %v667
    %v669 = vadd.f32 %v665, %v668
    %vm670 = vweird.f32 %v664
    %vm671 = vweird.f32 %v665
    %vm672 = vmor %vm670, %vm671
    %v673 = vsel %vm672, %v665, %v669
    %v674 = vand.u32 2147483647, %v664
    %vm675 = vcmp.eq.f32.partialorder %v674, 8.507059e+37
    %v676 = vand.u32 %v664, 2147483648
    %v677 = vor.u32 1.1754944e-38, %v676
    %v678 = vsel %vm675, %v677, %v673
    %v679 = vmul.f32 1.0, %v678
    %v680 = vadd.f32 %v618, %v644
    %v681 = vxor.u32 %v680, 2147483648
    %v682 = vmul.f32 %v681, 1.442695
    %v683 = vpow.pop %v682
    %v684 = vadd.f32 %v683, 1.0
    %v685 = vrcp.pop %v684
    %v686 = vmul.f32 %v684, %v685
    %v687 = vsub.f32 1.0, %v686
    %v688 = vmul.f32 %v685, %v687
    %v689 = vadd.f32 %v685, %v688
    %vm690 = vweird.f32 %v684
    %vm691 = vweird.f32 %v685
    %vm692 = vmor %vm690, %vm691
    %v693 = vsel %vm692, %v685, %v689
    %v694 = vand.u32 2147483647, %v684
    %vm695 = vcmp.eq.f32.partialorder %v694, 8.507059e+37
    %v696 = vand.u32 %v684, 2147483648
    %v697 = vor.u32 1.1754944e-38, %v696
    %v698 = vsel %vm695, %v697, %v693
    %v699 = vmul.f32 1.0, %v698
    %v700 = vadd.f32 %v657, %v512
    %v701 = vmul.f32 %v679, %v700
    %v702 = vadd.f32 %v619, %v701
    %v703 = vtanh.pop %v702
    %v704 = vsub.f32 %v613, %v703
    %v705 = vmul.f32 %v699, %v704
    %v706 = vadd.f32 %v703, %v705
    %s707 = smul.u32 3, 3
    %s708 = smul.addr %s707, 8
    %s709 = scalar_lea.vmem [#allocation3], %s708
    %v710 = vld [vmem:[%s709] sm:$0xff]
    %v711 = vld [vmem:[%s709 + $0x8] sm:$0xff]
    %v712 = vld [vmem:[%s709 + $0x10] sm:$0xff]
    %v713 = vpack.c.bf16 %v706, %v706
    %714 = vmatpush.bf16.msra.mxu0 %v405
    %715 = vmatpush.bf16.msra.mxu0 %v402
    %716 = vmatpush.bf16.msra.mxu0 %v399
    %717 = vmatpush.bf16.msra.mxu0 %v396
    %718 = vmatpush.bf16.msra.mxu0 %v393
    %719 = vmatpush.bf16.msra.mxu0 %v390
    %720 = vmatpush.bf16.msra.mxu0 %v387
    %721 = vmatpush.bf16.msra.mxu0 %v384
    %722 = vmatmul.bf16.gmra.mxu0 %v713
    %v723 = vpop.f32.mrf.mxu0
    %v724 = vadd.f32 0.0, %v723
    %v725 = vpop.f32.mrf.mxu0
    %726 = vdwg.mxu0
    %727 = vmatpush.bf16.msra.mxu0 %v406
    %728 = vmatpush.bf16.msra.mxu0 %v403
    %729 = vmatpush.bf16.msra.mxu0 %v400
    %730 = vmatpush.bf16.msra.mxu0 %v397
    %731 = vmatpush.bf16.msra.mxu0 %v394
    %732 = vmatpush.bf16.msra.mxu0 %v391
    %733 = vmatpush.bf16.msra.mxu0 %v388
    %734 = vmatpush.bf16.msra.mxu0 %v385
    %735 = vmatmul.bf16.gmra.mxu0 %v713
    %v736 = vpop.f32.mrf.mxu0
    %v737 = vadd.f32 0.0, %v736
    %v738 = vpop.f32.mrf.mxu0
    %739 = vdwg.mxu0
    %740 = vmatpush.bf16.msra.mxu0 %v407
    %741 = vmatpush.bf16.msra.mxu0 %v404
    %742 = vmatpush.bf16.msra.mxu0 %v401
    %743 = vmatpush.bf16.msra.mxu0 %v398
    %744 = vmatpush.bf16.msra.mxu0 %v395
    %745 = vmatpush.bf16.msra.mxu0 %v392
    %746 = vmatpush.bf16.msra.mxu0 %v389
    %747 = vmatpush.bf16.msra.mxu0 %v386
    %748 = vmatmul.bf16.gmra.mxu0 %v713
    %v749 = vpop.f32.mrf.mxu0
    %v750 = vadd.f32 0.0, %v749
    %v751 = vpop.f32.mrf.mxu0
    %752 = vdwg.mxu0
    %v753 = vadd.f32 %v710, %v724
    %v754 = vxor.u32 %v753, 2147483648
    %v755 = vmul.f32 %v754, 1.442695
    %v756 = vpow.pop %v755
    %v757 = vadd.f32 %v756, 1.0
    %v758 = vrcp.pop %v757
    %v759 = vmul.f32 %v757, %v758
    %v760 = vsub.f32 1.0, %v759
    %v761 = vmul.f32 %v758, %v760
    %v762 = vadd.f32 %v758, %v761
    %vm763 = vweird.f32 %v757
    %vm764 = vweird.f32 %v758
    %vm765 = vmor %vm763, %vm764
    %v766 = vsel %vm765, %v758, %v762
    %v767 = vand.u32 2147483647, %v757
    %vm768 = vcmp.eq.f32.partialorder %v767, 8.507059e+37
    %v769 = vand.u32 %v757, 2147483648
    %v770 = vor.u32 1.1754944e-38, %v769
    %v771 = vsel %vm768, %v770, %v766
    %v772 = vmul.f32 1.0, %v771
    %v773 = vadd.f32 %v711, %v737
    %v774 = vxor.u32 %v773, 2147483648
    %v775 = vmul.f32 %v774, 1.442695
    %v776 = vpow.pop %v775
    %v777 = vadd.f32 %v776, 1.0
    %v778 = vrcp.pop %v777
    %v779 = vmul.f32 %v777, %v778
    %v780 = vsub.f32 1.0, %v779
    %v781 = vmul.f32 %v778, %v780
    %v782 = vadd.f32 %v778, %v781
    %vm783 = vweird.f32 %v777
    %vm784 = vweird.f32 %v778
    %vm785 = vmor %vm783, %vm784
    %v786 = vsel %vm785, %v778, %v782
    %v787 = vand.u32 2147483647, %v777
    %vm788 = vcmp.eq.f32.partialorder %v787, 8.507059e+37
    %v789 = vand.u32 %v777, 2147483648
    %v790 = vor.u32 1.1754944e-38, %v789
    %v791 = vsel %vm788, %v790, %v786
    %v792 = vmul.f32 1.0, %v791
    %v793 = vadd.f32 %v750, %v512
    %v794 = vmul.f32 %v772, %v793
    %v795 = vadd.f32 %v712, %v794
    %v796 = vtanh.pop %v795
    %v797 = vsub.f32 %v706, %v796
    %v798 = vmul.f32 %v792, %v797
    %v799 = vadd.f32 %v796, %v798
    %s800 = smul.u32 4, 3
    %s801 = smul.addr %s800, 8
    %s802 = scalar_lea.vmem [#allocation3], %s801
    %v803 = vld [vmem:[%s802] sm:$0xff]
    %v804 = vld [vmem:[%s802 + $0x8] sm:$0xff]
    %v805 = vld [vmem:[%s802 + $0x10] sm:$0xff]
    %v806 = vpack.c.bf16 %v799, %v799
    %807 = vmatpush.bf16.msra.mxu0 %v405
    %808 = vmatpush.bf16.msra.mxu0 %v402
    %809 = vmatpush.bf16.msra.mxu0 %v399
    %810 = vmatpush.bf16.msra.mxu0 %v396
    %811 = vmatpush.bf16.msra.mxu0 %v393
    %812 = vmatpush.bf16.msra.mxu0 %v390
    %813 = vmatpush.bf16.msra.mxu0 %v387
    %814 = vmatpush.bf16.msra.mxu0 %v384
    %815 = vmatmul.bf16.gmra.mxu0 %v806
    %v816 = vpop.f32.mrf.mxu0
    %v817 = vadd.f32 0.0, %v816
    %v818 = vpop.f32.mrf.mxu0
    %819 = vdwg.mxu0
    %820 = vmatpush.bf16.msra.mxu0 %v406
    %821 = vmatpush.bf16.msra.mxu0 %v403
    %822 = vmatpush.bf16.msra.mxu0 %v400
    %823 = vmatpush.bf16.msra.mxu0 %v397
    %824 = vmatpush.bf16.msra.mxu0 %v394
    %825 = vmatpush.bf16.msra.mxu0 %v391
    %826 = vmatpush.bf16.msra.mxu0 %v388
    %827 = vmatpush.bf16.msra.mxu0 %v385
    %828 = vmatmul.bf16.gmra.mxu0 %v806
    %v829 = vpop.f32.mrf.mxu0
    %v830 = vadd.f32 0.0, %v829
    %v831 = vpop.f32.mrf.mxu0
    %832 = vdwg.mxu0
    %833 = vmatpush.bf16.msra.mxu0 %v407
    %834 = vmatpush.bf16.msra.mxu0 %v404
    %835 = vmatpush.bf16.msra.mxu0 %v401
    %836 = vmatpush.bf16.msra.mxu0 %v398
    %837 = vmatpush.bf16.msra.mxu0 %v395
    %838 = vmatpush.bf16.msra.mxu0 %v392
    %839 = vmatpush.bf16.msra.mxu0 %v389
    %840 = vmatpush.bf16.msra.mxu0 %v386
    %841 = vmatmul.bf16.gmra.mxu0 %v806
    %v842 = vpop.f32.mrf.mxu0
    %v843 = vadd.f32 0.0, %v842
    %v844 = vpop.f32.mrf.mxu0
    %845 = vdwg.mxu0
    %v846 = vadd.f32 %v803, %v817
    %v847 = vxor.u32 %v846, 2147483648
    %v848 = vmul.f32 %v847, 1.442695
    %v849 = vpow.pop %v848
    %v850 = vadd.f32 %v849, 1.0
    %v851 = vrcp.pop %v850
    %v852 = vmul.f32 %v850, %v851
    %v853 = vsub.f32 1.0, %v852
    %v854 = vmul.f32 %v851, %v853
    %v855 = vadd.f32 %v851, %v854
    %vm856 = vweird.f32 %v850
    %vm857 = vweird.f32 %v851
    %vm858 = vmor %vm856, %vm857
    %v859 = vsel %vm858, %v851, %v855
    %v860 = vand.u32 2147483647, %v850
    %vm861 = vcmp.eq.f32.partialorder %v860, 8.507059e+37
    %v862 = vand.u32 %v850, 2147483648
    %v863 = vor.u32 1.1754944e-38, %v862
    %v864 = vsel %vm861, %v863, %v859
    %v865 = vmul.f32 1.0, %v864
    %v866 = vadd.f32 %v804, %v830
    %v867 = vxor.u32 %v866, 2147483648
    %v868 = vmul.f32 %v867, 1.442695
    %v869 = vpow.pop %v868
    %v870 = vadd.f32 %v869, 1.0
    %v871 = vrcp.pop %v870
    %v872 = vmul.f32 %v870, %v871
    %v873 = vsub.f32 1.0, %v872
    %v874 = vmul.f32 %v871, %v873
    %v875 = vadd.f32 %v871, %v874
    %vm876 = vweird.f32 %v870
    %vm877 = vweird.f32 %v871
    %vm878 = vmor %vm876, %vm877
    %v879 = vsel %vm878, %v871, %v875
    %v880 = vand.u32 2147483647, %v870
    %vm881 = vcmp.eq.f32.partialorder %v880, 8.507059e+37
    %v882 = vand.u32 %v870, 2147483648
    %v883 = vor.u32 1.1754944e-38, %v882
    %v884 = vsel %vm881, %v883, %v879
    %v885 = vmul.f32 1.0, %v884
    %v886 = vadd.f32 %v843, %v512
    %v887 = vmul.f32 %v865, %v886
    %v888 = vadd.f32 %v805, %v887
    %v889 = vtanh.pop %v888
    %v890 = vsub.f32 %v799, %v889
    %v891 = vmul.f32 %v885, %v890
    %v892 = vadd.f32 %v889, %v891
    %s893 = smul.u32 5, 3
    %s894 = smul.addr %s893, 8
    %s895 = scalar_lea.vmem [#allocation3], %s894
    %v896 = vld [vmem:[%s895] sm:$0xff]
    %v897 = vld [vmem:[%s895 + $0x8] sm:$0xff]
    %v898 = vld [vmem:[%s895 + $0x10] sm:$0xff]
    %v899 = vpack.c.bf16 %v892, %v892
    %900 = vmatpush.bf16.msra.mxu0 %v405
    %901 = vmatpush.bf16.msra.mxu0 %v402
    %902 = vmatpush.bf16.msra.mxu0 %v399
    %903 = vmatpush.bf16.msra.mxu0 %v396
    %904 = vmatpush.bf16.msra.mxu0 %v393
    %905 = vmatpush.bf16.msra.mxu0 %v390
    %906 = vmatpush.bf16.msra.mxu0 %v387
    %907 = vmatpush.bf16.msra.mxu0 %v384
    %908 = vmatmul.bf16.gmra.mxu0 %v899
    %v909 = vpop.f32.mrf.mxu0
    %v910 = vadd.f32 0.0, %v909
    %v911 = vpop.f32.mrf.mxu0
    %912 = vdwg.mxu0
    %913 = vmatpush.bf16.msra.mxu0 %v406
    %914 = vmatpush.bf16.msra.mxu0 %v403
    %915 = vmatpush.bf16.msra.mxu0 %v400
    %916 = vmatpush.bf16.msra.mxu0 %v397
    %917 = vmatpush.bf16.msra.mxu0 %v394
    %918 = vmatpush.bf16.msra.mxu0 %v391
    %919 = vmatpush.bf16.msra.mxu0 %v388
    %920 = vmatpush.bf16.msra.mxu0 %v385
    %921 = vmatmul.bf16.gmra.mxu0 %v899
    %v922 = vpop.f32.mrf.mxu0
    %v923 = vadd.f32 0.0, %v922
    %v924 = vpop.f32.mrf.mxu0
    %925 = vdwg.mxu0
    %926 = vmatpush.bf16.msra.mxu0 %v407
    %927 = vmatpush.bf16.msra.mxu0 %v404
    %928 = vmatpush.bf16.msra.mxu0 %v401
    %929 = vmatpush.bf16.msra.mxu0 %v398
    %930 = vmatpush.bf16.msra.mxu0 %v395
    %931 = vmatpush.bf16.msra.mxu0 %v392
    %932 = vmatpush.bf16.msra.mxu0 %v389
    %933 = vmatpush.bf16.msra.mxu0 %v386
    %934 = vmatmul.bf16.gmra.mxu0 %v899
    %v935 = vpop.f32.mrf.mxu0
    %v936 = vadd.f32 0.0, %v935
    %v937 = vpop.f32.mrf.mxu0
    %938 = vdwg.mxu0
    %v939 = vadd.f32 %v896, %v910
    %v940 = vxor.u32 %v939, 2147483648
    %v941 = vmul.f32 %v940, 1.442695
    %v942 = vpow.pop %v941
    %v943 = vadd.f32 %v942, 1.0
    %v944 = vrcp.pop %v943
    %v945 = vmul.f32 %v943, %v944
    %v946 = vsub.f32 1.0, %v945
    %v947 = vmul.f32 %v944, %v946
    %v948 = vadd.f32 %v944, %v947
    %vm949 = vweird.f32 %v943
    %vm950 = vweird.f32 %v944
    %vm951 = vmor %vm949, %vm950
    %v952 = vsel %vm951, %v944, %v948
    %v953 = vand.u32 2147483647, %v943
    %vm954 = vcmp.eq.f32.partialorder %v953, 8.507059e+37
    %v955 = vand.u32 %v943, 2147483648
    %v956 = vor.u32 1.1754944e-38, %v955
    %v957 = vsel %vm954, %v956, %v952
    %v958 = vmul.f32 1.0, %v957
    %v959 = vadd.f32 %v897, %v923
    %v960 = vxor.u32 %v959, 2147483648
    %v961 = vmul.f32 %v960, 1.442695
    %v962 = vpow.pop %v961
    %v963 = vadd.f32 %v962, 1.0
    %v964 = vrcp.pop %v963
    %v965 = vmul.f32 %v963, %v964
    %v966 = vsub.f32 1.0, %v965
    %v967 = vmul.f32 %v964, %v966
    %v968 = vadd.f32 %v964, %v967
    %vm969 = vweird.f32 %v963
    %vm970 = vweird.f32 %v964
    %vm971 = vmor %vm969, %vm970
    %v972 = vsel %vm971, %v964, %v968
    %v973 = vand.u32 2147483647, %v963
    %vm974 = vcmp.eq.f32.partialorder %v973, 8.507059e+37
    %v975 = vand.u32 %v963, 2147483648
    %v976 = vor.u32 1.1754944e-38, %v975
    %v977 = vsel %vm974, %v976, %v972
    %v978 = vmul.f32 1.0, %v977
    %v979 = vadd.f32 %v936, %v512
    %v980 = vmul.f32 %v958, %v979
    %v981 = vadd.f32 %v898, %v980
    %v982 = vtanh.pop %v981
    %v983 = vsub.f32 %v892, %v982
    %v984 = vmul.f32 %v978, %v983
    %v985 = vadd.f32 %v982, %v984
    %s986 = smul.u32 6, 3
    %s987 = smul.addr %s986, 8
    %s988 = scalar_lea.vmem [#allocation3], %s987
    %v989 = vld [vmem:[%s988] sm:$0xff]
    %v990 = vld [vmem:[%s988 + $0x8] sm:$0xff]
    %v991 = vld [vmem:[%s988 + $0x10] sm:$0xff]
    %v992 = vpack.c.bf16 %v985, %v985
    %993 = vmatpush.bf16.msra.mxu0 %v405
    %994 = vmatpush.bf16.msra.mxu0 %v402
    %995 = vmatpush.bf16.msra.mxu0 %v399
    %996 = vmatpush.bf16.msra.mxu0 %v396
    %997 = vmatpush.bf16.msra.mxu0 %v393
    %998 = vmatpush.bf16.msra.mxu0 %v390
    %999 = vmatpush.bf16.msra.mxu0 %v387
    %1000 = vmatpush.bf16.msra.mxu0 %v384
    %1001 = vmatmul.bf16.gmra.mxu0 %v992
    %v1002 = vpop.f32.mrf.mxu0
    %v1003 = vadd.f32 0.0, %v1002
    %v1004 = vpop.f32.mrf.mxu0
    %1005 = vdwg.mxu0
    %1006 = vmatpush.bf16.msra.mxu0 %v406
    %1007 = vmatpush.bf16.msra.mxu0 %v403
    %1008 = vmatpush.bf16.msra.mxu0 %v400
    %1009 = vmatpush.bf16.msra.mxu0 %v397
    %1010 = vmatpush.bf16.msra.mxu0 %v394
    %1011 = vmatpush.bf16.msra.mxu0 %v391
    %1012 = vmatpush.bf16.msra.mxu0 %v388
    %1013 = vmatpush.bf16.msra.mxu0 %v385
    %1014 = vmatmul.bf16.gmra.mxu0 %v992
    %v1015 = vpop.f32.mrf.mxu0
    %v1016 = vadd.f32 0.0, %v1015
    %v1017 = vpop.f32.mrf.mxu0
    %1018 = vdwg.mxu0
    %1019 = vmatpush.bf16.msra.mxu0 %v407
    %1020 = vmatpush.bf16.msra.mxu0 %v404
    %1021 = vmatpush.bf16.msra.mxu0 %v401
    %1022 = vmatpush.bf16.msra.mxu0 %v398
    %1023 = vmatpush.bf16.msra.mxu0 %v395
    %1024 = vmatpush.bf16.msra.mxu0 %v392
    %1025 = vmatpush.bf16.msra.mxu0 %v389
    %1026 = vmatpush.bf16.msra.mxu0 %v386
    %1027 = vmatmul.bf16.gmra.mxu0 %v992
    %v1028 = vpop.f32.mrf.mxu0
    %v1029 = vadd.f32 0.0, %v1028
    %v1030 = vpop.f32.mrf.mxu0
    %1031 = vdwg.mxu0
    %v1032 = vadd.f32 %v989, %v1003
    %v1033 = vxor.u32 %v1032, 2147483648
    %v1034 = vmul.f32 %v1033, 1.442695
    %v1035 = vpow.pop %v1034
    %v1036 = vadd.f32 %v1035, 1.0
    %v1037 = vrcp.pop %v1036
    %v1038 = vmul.f32 %v1036, %v1037
    %v1039 = vsub.f32 1.0, %v1038
    %v1040 = vmul.f32 %v1037, %v1039
    %v1041 = vadd.f32 %v1037, %v1040
    %vm1042 = vweird.f32 %v1036
    %vm1043 = vweird.f32 %v1037
    %vm1044 = vmor %vm1042, %vm1043
    %v1045 = vsel %vm1044, %v1037, %v1041
    %v1046 = vand.u32 2147483647, %v1036
    %vm1047 = vcmp.eq.f32.partialorder %v1046, 8.507059e+37
    %v1048 = vand.u32 %v1036, 2147483648
    %v1049 = vor.u32 1.1754944e-38, %v1048
    %v1050 = vsel %vm1047, %v1049, %v1045
    %v1051 = vmul.f32 1.0, %v1050
    %v1052 = vadd.f32 %v990, %v1016
    %v1053 = vxor.u32 %v1052, 2147483648
    %v1054 = vmul.f32 %v1053, 1.442695
    %v1055 = vpow.pop %v1054
    %v1056 = vadd.f32 %v1055, 1.0
    %v1057 = vrcp.pop %v1056
    %v1058 = vmul.f32 %v1056, %v1057
    %v1059 = vsub.f32 1.0, %v1058
    %v1060 = vmul.f32 %v1057, %v1059
    %v1061 = vadd.f32 %v1057, %v1060
    %vm1062 = vweird.f32 %v1056
    %vm1063 = vweird.f32 %v1057
    %vm1064 = vmor %vm1062, %vm1063
    %v1065 = vsel %vm1064, %v1057, %v1061
    %v1066 = vand.u32 2147483647, %v1056
    %vm1067 = vcmp.eq.f32.partialorder %v1066, 8.507059e+37
    %v1068 = vand.u32 %v1056, 2147483648
    %v1069 = vor.u32 1.1754944e-38, %v1068
    %v1070 = vsel %vm1067, %v1069, %v1065
    %v1071 = vmul.f32 1.0, %v1070
    %v1072 = vadd.f32 %v1029, %v512
    %v1073 = vmul.f32 %v1051, %v1072
    %v1074 = vadd.f32 %v991, %v1073
    %v1075 = vtanh.pop %v1074
    %v1076 = vsub.f32 %v985, %v1075
    %v1077 = vmul.f32 %v1071, %v1076
    %v1078 = vadd.f32 %v1075, %v1077
    %s1079 = smul.u32 7, 3
    %s1080 = smul.addr %s1079, 8
    %s1081 = scalar_lea.vmem [#allocation3], %s1080
    %v1082 = vld [vmem:[%s1081] sm:$0xff]
    %v1083 = vld [vmem:[%s1081 + $0x8] sm:$0xff]
    %v1084 = vld [vmem:[%s1081 + $0x10] sm:$0xff]
    %v1085 = vpack.c.bf16 %v1078, %v1078
    %1086 = vmatpush.bf16.msra.mxu0 %v405
    %1087 = vmatpush.bf16.msra.mxu0 %v402
    %1088 = vmatpush.bf16.msra.mxu0 %v399
    %1089 = vmatpush.bf16.msra.mxu0 %v396
    %1090 = vmatpush.bf16.msra.mxu0 %v393
    %1091 = vmatpush.bf16.msra.mxu0 %v390
    %1092 = vmatpush.bf16.msra.mxu0 %v387
    %1093 = vmatpush.bf16.msra.mxu0 %v384
    %1094 = vmatmul.bf16.gmra.mxu0 %v1085
    %v1095 = vpop.f32.mrf.mxu0
    %v1096 = vadd.f32 0.0, %v1095
    %v1097 = vpop.f32.mrf.mxu0
    %1098 = vdwg.mxu0
    %1099 = vmatpush.bf16.msra.mxu0 %v406
    %1100 = vmatpush.bf16.msra.mxu0 %v403
    %1101 = vmatpush.bf16.msra.mxu0 %v400
    %1102 = vmatpush.bf16.msra.mxu0 %v397
    %1103 = vmatpush.bf16.msra.mxu0 %v394
    %1104 = vmatpush.bf16.msra.mxu0 %v391
    %1105 = vmatpush.bf16.msra.mxu0 %v388
    %1106 = vmatpush.bf16.msra.mxu0 %v385
    %1107 = vmatmul.bf16.gmra.mxu0 %v1085
    %v1108 = vpop.f32.mrf.mxu0
    %v1109 = vadd.f32 0.0, %v1108
    %v1110 = vpop.f32.mrf.mxu0
    %1111 = vdwg.mxu0
    %1112 = vmatpush.bf16.msra.mxu0 %v407
    %1113 = vmatpush.bf16.msra.mxu0 %v404
    %1114 = vmatpush.bf16.msra.mxu0 %v401
    %1115 = vmatpush.bf16.msra.mxu0 %v398
    %1116 = vmatpush.bf16.msra.mxu0 %v395
    %1117 = vmatpush.bf16.msra.mxu0 %v392
    %1118 = vmatpush.bf16.msra.mxu0 %v389
    %1119 = vmatpush.bf16.msra.mxu0 %v386
    %1120 = vmatmul.bf16.gmra.mxu0 %v1085
    %v1121 = vpop.f32.mrf.mxu0
    %v1122 = vadd.f32 0.0, %v1121
    %v1123 = vpop.f32.mrf.mxu0
    %1124 = vdwg.mxu0
    %v1125 = vadd.f32 %v1082, %v1096
    %v1126 = vxor.u32 %v1125, 2147483648
    %v1127 = vmul.f32 %v1126, 1.442695
    %v1128 = vpow.pop %v1127
    %v1129 = vadd.f32 %v1128, 1.0
    %v1130 = vrcp.pop %v1129
    %v1131 = vmul.f32 %v1129, %v1130
    %v1132 = vsub.f32 1.0, %v1131
    %v1133 = vmul.f32 %v1130, %v1132
    %v1134 = vadd.f32 %v1130, %v1133
    %vm1135 = vweird.f32 %v1129
    %vm1136 = vweird.f32 %v1130
    %vm1137 = vmor %vm1135, %vm1136
    %v1138 = vsel %vm1137, %v1130, %v1134
    %v1139 = vand.u32 2147483647, %v1129
    %vm1140 = vcmp.eq.f32.partialorder %v1139, 8.507059e+37
    %v1141 = vand.u32 %v1129, 2147483648
    %v1142 = vor.u32 1.1754944e-38, %v1141
    %v1143 = vsel %vm1140, %v1142, %v1138
    %v1144 = vmul.f32 1.0, %v1143
    %v1145 = vadd.f32 %v1083, %v1109
    %v1146 = vxor.u32 %v1145, 2147483648
    %v1147 = vmul.f32 %v1146, 1.442695
    %v1148 = vpow.pop %v1147
    %v1149 = vadd.f32 %v1148, 1.0
    %v1150 = vrcp.pop %v1149
    %v1151 = vmul.f32 %v1149, %v1150
    %v1152 = vsub.f32 1.0, %v1151
    %v1153 = vmul.f32 %v1150, %v1152
    %v1154 = vadd.f32 %v1150, %v1153
    %vm1155 = vweird.f32 %v1149
    %vm1156 = vweird.f32 %v1150
    %vm1157 = vmor %vm1155, %vm1156
    %v1158 = vsel %vm1157, %v1150, %v1154
    %v1159 = vand.u32 2147483647, %v1149
    %vm1160 = vcmp.eq.f32.partialorder %v1159, 8.507059e+37
    %v1161 = vand.u32 %v1149, 2147483648
    %v1162 = vor.u32 1.1754944e-38, %v1161
    %v1163 = vsel %vm1160, %v1162, %v1158
    %v1164 = vmul.f32 1.0, %v1163
    %v1165 = vadd.f32 %v1122, %v512
    %v1166 = vmul.f32 %v1144, %v1165
    %v1167 = vadd.f32 %v1084, %v1166
    %v1168 = vtanh.pop %v1167
    %v1169 = vsub.f32 %v1078, %v1168
    %v1170 = vmul.f32 %v1164, %v1169
    %v1171 = vadd.f32 %v1168, %v1170
    %1172 = vst [vmem:[#allocation2] sm:$0xff] %v1171
    // Predicated region
    $region50: #{tpu_custom_call.1} parent=1 // pred_check
      %p1173 = pneg %p77
    $region51: #{tpu_custom_call.1} parent=1 // pred_check_branch
      %1175 = sbr.rel (%p1173) target = $region53
    $region52: #{tpu_custom_call.1} parent=1 // pred_region
      %1176 = vst [vmem:[#allocation7] sm:$0xff] %v1171
      %v1177 = vpack.c.bf16 %v1171, %v1171
      %v1178 = vld [vmem:[%s6] sm:$0xf]
      %v1179 = vld [vmem:[%s6 + $0x4] sm:$0xf]
      %v1180 = vld [vmem:[%s6 + $0x8] sm:$0xf]
      %v1181 = vld [vmem:[%s6 + $0xc] sm:$0xf]
      %v1182 = vld [vmem:[%s6 + $0x10] sm:$0xf]
      %v1183 = vld [vmem:[%s6 + $0x14] sm:$0xf]
      %v1184 = vld [vmem:[%s6 + $0x18] sm:$0xf]
      %v1185 = vld [vmem:[%s6 + $0x1c] sm:$0xf]
      %v1186 = vld [vmem:[%s6 + $0x20] sm:$0xf]
      %v1187 = vld [vmem:[%s6 + $0x24] sm:$0xf]
      %v1188 = vld [vmem:[%s6 + $0x28] sm:$0xf]
      %v1189 = vld [vmem:[%s6 + $0x2c] sm:$0xf]
      %v1190 = vld [vmem:[%s6 + $0x30] sm:$0xf]
      %v1191 = vld [vmem:[%s6 + $0x34] sm:$0xf]
      %v1192 = vld [vmem:[%s6 + $0x38] sm:$0xf]
      %v1193 = vld [vmem:[%s6 + $0x3c] sm:$0xf]
      %v1194 = vld [vmem:[%s7] sm:$0x1]
      %v1196 = vperm.slane %v1194, 0
      %v1214 = vunpack.c.l.b16 %v1178
      %v1215 = vunpack.c.l.b16 %v1179
      %v1216 = vunpack.c.l.b16 %v1180
      %v1217 = vunpack.c.l.b16 %v1181
      %v1218 = vunpack.c.l.b16 %v1182
      %v1219 = vunpack.c.l.b16 %v1183
      %v1220 = vunpack.c.l.b16 %v1184
      %v1221 = vunpack.c.l.b16 %v1185
      %v1222 = vunpack.c.l.b16 %v1186
      %v1223 = vunpack.c.l.b16 %v1187
      %v1224 = vunpack.c.l.b16 %v1188
      %v1225 = vunpack.c.l.b16 %v1189
      %v1226 = vunpack.c.l.b16 %v1190
      %v1227 = vunpack.c.l.b16 %v1191
      %v1228 = vunpack.c.l.b16 %v1192
      %v1229 = vunpack.c.l.b16 %v1193
      %v1230 = vpack.c.b16 %v1215, %v1214
      %v1231 = vpack.c.b16 %v1217, %v1216
      %v1232 = vpack.c.b16 %v1219, %v1218
      %v1233 = vpack.c.b16 %v1221, %v1220
      %v1234 = vpack.c.b16 %v1223, %v1222
      %v1235 = vpack.c.b16 %v1225, %v1224
      %v1236 = vpack.c.b16 %v1227, %v1226
      %v1237 = vpack.c.b16 %v1229, %v1228
      %1246 = vmatpush.bf16.msra.mxu0 %v1237
      %1247 = vmatpush.bf16.msra.mxu0 %v1236
      %1248 = vmatpush.bf16.msra.mxu0 %v1235
      %1249 = vmatpush.bf16.msra.mxu0 %v1234
      %1250 = vmatpush.bf16.msra.mxu0 %v1233
      %1251 = vmatpush.bf16.msra.mxu0 %v1232
      %1252 = vmatpush.bf16.msra.mxu0 %v1231
      %1253 = vmatpush.bf16.msra.mxu0 %v1230
      %1254 = vmatmul.bf16.gmra.mxu0 %v1177
      %v1255 = vpop.f32.mrf.mxu0
      %v1256 = vadd.f32 %v1196, %v1255
      %v1257 = vpop.f32.mrf.mxu0
      %1258 = vdwg.mxu0
      %v1259 = vmax.f32 %v1256, 0.0
      %v1260 = vpack.c.bf16 %v1259, %v1259
      %v1261 = vld [vmem:[%s8] sm:$0xf]
      %v1262 = vld [vmem:[%s8 + $0x4] sm:$0xf]
      %v1263 = vld [vmem:[%s8 + $0x8] sm:$0xf]
      %v1264 = vld [vmem:[%s8 + $0xc] sm:$0xf]
      %v1265 = vld [vmem:[%s9] sm:$0x1]
      %v1267 = vperm.slane %v1265, 0
      %v1273 = vunpack.c.l.b16 %v1261
      %v1274 = vunpack.c.l.b16 %v1262
      %v1275 = vunpack.c.l.b16 %v1263
      %v1276 = vunpack.c.l.b16 %v1264
      %v1277 = vpack.c.b16 %v1274, %v1273
      %v1278 = vpack.c.b16 %v1276, %v1275
      %vm1281 = vcmask 261120
      %v1283 = vsel %vm1281, %v1260, 0
      %1285 = vmatpush.bf16.msra.mxu0 0
      %1286 = vmatpush.bf16.msra.mxu0 0
      %1287 = vmatpush.bf16.msra.mxu0 0
      %1288 = vmatpush.bf16.msra.mxu0 0
      %1289 = vmatpush.bf16.msra.mxu0 0
      %1290 = vmatpush.bf16.msra.mxu0 0
      %1291 = vmatpush.bf16.msra.mxu0 %v1278
      %1292 = vmatpush.bf16.msra.mxu0 %v1277
      %1293 = vmatmul.bf16.gmra.mxu0 %v1283
      %v1294 = vpop.f32.mrf.mxu0
      %v1295 = vadd.f32 %v1267, %v1294
      %v1296 = vpop.f32.mrf.mxu0
      %1297 = vdwg.mxu0
      %vm1298 = vcmask 31744
      %1299 = vst.msk [vmem:[%s10] sm:$0xff] %vm1298, %v1295
    $region53: #{tpu_custom_call.1} parent=1 // pred_fallthru
      _
    // Predicated region
    $region54: #{tpu_custom_call.1} parent=1 // pred_check
      _
    $region55: #{tpu_custom_call.1} parent=1 // pred_check_branch
      %1301 = sbr.rel (0) target = $region57
    $region56: #{tpu_custom_call.1} parent=1 // pred_region
      _
    $region57: #{tpu_custom_call.1} parent=1 // pred_fallthru
      _
    // Predicated region
    $region58: #{tpu_custom_call.1} parent=1 // pred_check
      _
    $region59: #{tpu_custom_call.1} parent=1 // pred_check_branch
      %1303 = sbr.rel (0) target = $region61
    $region60: #{tpu_custom_call.1} parent=1 // pred_region
      %1305 = vsyncadd [#allocation6], 0
      %s1307 = sshll.u32 [#allocation7], 4
      %s1308 = int_to_ptr.vmem [resolvable:$true] %s1307
      %s1309 = sshll.u32 %s11, 4
      %s1310 = int_to_ptr.hbm [resolvable:$true] %s1309
      %1312 = dma.vmem_to_hbm [thread:$0]  %s1308, 128, %s1310, [#allocation6]
    $region61: #{tpu_custom_call.1} parent=1 // pred_fallthru
      _
    // Predicated region
    $region62: #{tpu_custom_call.1} parent=1 // pred_check
      _
    $region63: #{tpu_custom_call.1} parent=1 // pred_check_branch
      %1314 = sbr.rel (0) target = $region65
    $region64: #{tpu_custom_call.1} parent=1 // pred_region
      _
    $region65: #{tpu_custom_call.1} parent=1 // pred_fallthru
      _
    // Predicated region
    $region66: #{tpu_custom_call.1} parent=1 // pred_check
      _
    $region67: #{tpu_custom_call.1} parent=1 // pred_check_branch
      %1316 = sbr.rel (0) target = $region69
    $region68: #{tpu_custom_call.1} parent=1 // pred_region
      %1318 = dma.done [#allocation6], 128
    $region69: #{tpu_custom_call.1} parent=1 // pred_fallthru
      _
    %1319 = vsyncpa [#allocation5], 1
    %1320 = vsyncpa [#allocation6], 1

// kernel: tpu_custom_call.1
$region0: #{tpu_custom_call.1}
  #allocation0 [shape = 'u32[]', space=smem, size = 0x4, offset = 0x4, fixed_abs, tag = 'smem constant byte address 0x4 - core index']
  #allocation1 [shape = 'u32[72,128]{1,0:T(1,128)}', space=vmem, size = 0x9000, scoped, tag = 'internal scratch']
  #allocation2 [shape = 'f32[8,128]{1,0:T(8,128)}', space=vmem, size = 0x1000, scoped, tag = 'scratch operand']
  #allocation3 [shape = 'f32[64,384]{1,0:T(8,128)}', space=vmem, size = 0x18000, scoped, tag = 'scratch operand']
  %s0 = inlined_call_operand.vmem [shape: bf16[64,16], index: 0, kind: input, shape index: {}]
  %s1 = inlined_call_operand.vmem [shape: bf16[16,384], index: 1, kind: input, shape index: {}]
  %s2 = inlined_call_operand.hbm [shape: bf16[128,384], index: 2, kind: input, shape index: {}]
  %s3 = inlined_call_operand.vmem [shape: f32[1,384], index: 3, kind: input, shape index: {}]
  %s4 = inlined_call_operand.vmem [shape: f32[1,128], index: 4, kind: input, shape index: {}]
  %s5 = inlined_call_operand.vmem [shape: f32[8,128], index: 5, kind: input, shape index: {}]
  %s6 = inlined_call_operand.vmem [shape: bf16[128,32], index: 6, kind: input, shape index: {}]
  %s7 = inlined_call_operand.vmem [shape: f32[1,32], index: 7, kind: input, shape index: {}]
  %s8 = inlined_call_operand.vmem [shape: bf16[32,4], index: 8, kind: input, shape index: {}]
  %s9 = inlined_call_operand.vmem [shape: f32[1,4], index: 9, kind: input, shape index: {}]
  %s10 = inlined_call_operand.vmem [shape: f32[8,4], index: 10, kind: output, shape index: {0}]
  %s11 = inlined_call_operand.hbm [shape: f32[8,128], index: 11, kind: output, shape index: {1}]
  %12 = xla_tuple %s10, %s11
  %s13 = sld [smem:[#allocation0]]
  $region70: #{tpu_custom_call.1} parent=0
    _
  %s15 = ssub.s32 1, %s13
  %s16 = scalar_select 0, %s15, %s13
  $region1: #{tpu_custom_call.1} parent=0
    #allocation4 [shape = 'u8[98304]{0}', space=vmem, size = 0x18000, scoped, tag = 'input window, operand 2, single buffered']
    #allocation5 [shape = 's32[1]{0}', space=sflag, size = 0x4, scoped, tag = 'scoped memory for tpu_custom_call.1']
    #allocation6 [shape = 's32[1]{0}', space=sflag, size = 0x4, scoped, tag = 'scoped memory for tpu_custom_call.1']
    #allocation7 [shape = 'u8[4096]{0}', space=vmem, size = 0x1000, scoped, tag = 'output window, operand 1, single buffered']
    %17 = vsyncpa [#allocation5], 0
    %18 = vsyncpa [#allocation6], 0
    // Predicated region
    $region2: #{tpu_custom_call.1} parent=1 // pred_check
      _
    $region3: #{tpu_custom_call.1} parent=1 // pred_check_branch
      %20 = sbr.rel (0) target = $region5
    $region4: #{tpu_custom_call.1} parent=1 // pred_region
      %s21 = sadd.s32 0, 0
      %s22 = smul.u32 8, %s21
      %p23 = scmp.lt.s32.totalorder %s22, 7
      %s24 = scalar_select %p23, %s22, 7
      %s25 = smul.addr %s24, 4
      %s26 = scalar_lea.vmem %s0, %s25
      %s27 = sadd.s32 0, 0
      %s28 = smul.u32 8, %s27
    $region5: #{tpu_custom_call.1} parent=1 // pred_fallthru
      _
    // Predicated region
    $region6: #{tpu_custom_call.1} parent=1 // pred_check
      _
    $region7: #{tpu_custom_call.1} parent=1 // pred_check_branch
      %30 = sbr.rel (0) target = $region9
    $region8: #{tpu_custom_call.1} parent=1 // pred_region
      _
    $region9: #{tpu_custom_call.1} parent=1 // pred_fallthru
      _
    // Predicated region
    $region10: #{tpu_custom_call.1} parent=1 // pred_check
      _
    $region11: #{tpu_custom_call.1} parent=1 // pred_check_branch
      %32 = sbr.rel (0) target = $region13
    $region12: #{tpu_custom_call.1} parent=1 // pred_region
      %34 = vsyncadd [#allocation5], 0
      %s35 = sshll.u32 %s2, 4
      %s36 = int_to_ptr.hbm [resolvable:$true] %s35
      %s37 = sshll.u32 [#allocation4], 4
      %s38 = int_to_ptr.vmem [resolvable:$true] %s37
      %43 = dma.hbm_to_vmem [thread:$0]  %s36, 3072, %s38, [#allocation5], 192, 192, 12
    $region13: #{tpu_custom_call.1} parent=1 // pred_fallthru
      _
    // Predicated region
    $region14: #{tpu_custom_call.1} parent=1 // pred_check
      _
    $region15: #{tpu_custom_call.1} parent=1 // pred_check_branch
      %45 = sbr.rel (0) target = $region17
    $region16: #{tpu_custom_call.1} parent=1 // pred_region
      _
    $region17: #{tpu_custom_call.1} parent=1 // pred_fallthru
      _
    // Predicated region
    $region18: #{tpu_custom_call.1} parent=1 // pred_check
      _
    $region19: #{tpu_custom_call.1} parent=1 // pred_check_branch
      %47 = sbr.rel (0) target = $region21
    $region20: #{tpu_custom_call.1} parent=1 // pred_region
      _
    $region21: #{tpu_custom_call.1} parent=1 // pred_fallthru
      _
    // Predicated region
    $region22: #{tpu_custom_call.1} parent=1 // pred_check
      _
    $region23: #{tpu_custom_call.1} parent=1 // pred_check_branch
      %49 = sbr.rel (0) target = $region25
    $region24: #{tpu_custom_call.1} parent=1 // pred_region
      _
    $region25: #{tpu_custom_call.1} parent=1 // pred_fallthru
      _
    // Predicated region
    $region26: #{tpu_custom_call.1} parent=1 // pred_check
      _
    $region27: #{tpu_custom_call.1} parent=1 // pred_check_branch
      %51 = sbr.rel (0) target = $region29
    $region28: #{tpu_custom_call.1} parent=1 // pred_region
      _
    $region29: #{tpu_custom_call.1} parent=1 // pred_fallthru
      _
    // Predicated region
    $region30: #{tpu_custom_call.1} parent=1 // pred_check
      _
    $region31: #{tpu_custom_call.1} parent=1 // pred_check_branch
      %53 = sbr.rel (0) target = $region33
    $region32: #{tpu_custom_call.1} parent=1 // pred_region
      _
    $region33: #{tpu_custom_call.1} parent=1 // pred_fallthru
      _
    // Predicated region
    $region34: #{tpu_custom_call.1} parent=1 // pred_check
      _
    $region35: #{tpu_custom_call.1} parent=1 // pred_check_branch
      %55 = sbr.rel (0) target = $region37
    $region36: #{tpu_custom_call.1} parent=1 // pred_region
      _
    $region37: #{tpu_custom_call.1} parent=1 // pred_fallthru
      _
    // Predicated region
    $region38: #{tpu_custom_call.1} parent=1 // pred_check
      _
    $region39: #{tpu_custom_call.1} parent=1 // pred_check_branch
      %57 = sbr.rel (0) target = $region41
    $region40: #{tpu_custom_call.1} parent=1 // pred_region
      _
    $region41: #{tpu_custom_call.1} parent=1 // pred_fallthru
      _
    // Predicated region
    $region42: #{tpu_custom_call.1} parent=1 // pred_check
      _
    $region43: #{tpu_custom_call.1} parent=1 // pred_check_branch
      %59 = sbr.rel (0) target = $region45
    $region44: #{tpu_custom_call.1} parent=1 // pred_region
      %61 = dma.done [#allocation5], 3072
    $region45: #{tpu_custom_call.1} parent=1 // pred_fallthru
      _
    %s62 = sadd.s32 0, 0
    %s63 = smul.u32 8, %s62
    %p64 = scmp.lt.s32.totalorder %s63, 7
    %s65 = scalar_select %p64, %s63, 7
    %s66 = smul.addr %s65, 4
    %s67 = scalar_lea.vmem %s0, %s66
    %s68 = sadd.s32 0, 0
    %s69 = smul.u32 8, %s68
    %p70 = scmp.lt.s32.totalorder %s69, 7
    %s71 = scalar_select %p70, %s69, 7
    %s72 = smul.addr %s71, 4
    %s73 = scalar_lea.vmem %s0, %s72
    %s74 = sadd.s32 0, 0
    %s75 = smul.u32 8, %s74
    %p77 = scmp.eq.s32.totalorder 0, 0
    // Predicated region
    $region46: #{tpu_custom_call.1} parent=1 // pred_check
      %p78 = pneg %p77
    $region47: #{tpu_custom_call.1} parent=1 // pred_check_branch
      %80 = sbr.rel (%p78) target = $region49
    $region48: #{tpu_custom_call.1} parent=1 // pred_region
      %v81 = vld [vmem:[%s5] sm:$0xff]
      %82 = vst [vmem:[#allocation2] sm:$0xff] %v81
    $region49: #{tpu_custom_call.1} parent=1 // pred_fallthru
      _
    %v83 = vld [vmem:[%s73] sm:$0xf]
    %v84 = vld [vmem:[%s73 + $0x4] sm:$0xf]
    %v85 = vld [vmem:[%s73 + $0x8] sm:$0xf]
    %v86 = vld [vmem:[%s73 + $0xc] sm:$0xf]
    %v87 = vld [vmem:[%s73 + $0x10] sm:$0xf]
    %v88 = vld [vmem:[%s73 + $0x14] sm:$0xf]
    %v89 = vld [vmem:[%s73 + $0x18] sm:$0xf]
    %v90 = vld [vmem:[%s73 + $0x1c] sm:$0xf]
    %v91 = vld [vmem:[%s1] sm:$0xff]
    %v92 = vld [vmem:[%s1 + $0x8] sm:$0xf]
    %v93 = vld [vmem:[%s1 + $0xc] sm:$0xff]
    %v94 = vld [vmem:[%s1 + $0x14] sm:$0xf]
    %v95 = vld [vmem:[%s3] sm:$0x7]
    %v97 = vperm.slane %v95, 0
    %v98 = vperm.slane %v95, 1
    %v99 = vperm.slane %v95, 2
    %v111 = vunpack.c.l.b16 %v83
    %v112 = vunpack.c.l.b16 %v84
    %v113 = vunpack.c.l.b16 %v85
    %v114 = vunpack.c.l.b16 %v86
    %v115 = vunpack.c.l.b16 %v87
    %v116 = vunpack.c.l.b16 %v88
    %v117 = vunpack.c.l.b16 %v89
    %v118 = vunpack.c.l.b16 %v90
    %v119 = vpack.c.b16 %v112, %v111
    %v120 = vpack.c.b16 %v114, %v113
    %v121 = vpack.c.b16 %v116, %v115
    %v122 = vpack.c.b16 %v118, %v117
    %v127 = vunpack.c.l.b16 %v91
    %v128 = vunpack.c.h.b16 %v91
    %v129 = vunpack.c.l.b16 %v92
    %v130 = vunpack.c.l.b16 %v93
    %v131 = vunpack.c.h.b16 %v93
    %v132 = vunpack.c.l.b16 %v94
    %v133 = vpack.c.b16 %v130, %v127
    %v134 = vpack.c.b16 %v131, %v128
    %v135 = vpack.c.b16 %v132, %v129
    %vm139 = vcmask 130048
    %v141 = vsel %vm139, %v119, 0
    %v144 = vsel %vm139, %v120, 0
    %v147 = vsel %vm139, %v121, 0
    %v150 = vsel %vm139, %v122, 0
    %152 = vmatpush.bf16.msra.mxu0 0
    %153 = vmatpush.bf16.msra.mxu0 0
    %154 = vmatpush.bf16.msra.mxu0 0
    %155 = vmatpush.bf16.msra.mxu0 0
    %156 = vmatpush.bf16.msra.mxu0 0
    %157 = vmatpush.bf16.msra.mxu0 0
    %158 = vmatpush.bf16.msra.mxu0 0
    %159 = vmatpush.bf16.msra.mxu0 %v133
    %160 = vmatmul.bf16.gmra.mxu0 %v141
    %v161 = vpop.f32.mrf.mxu0
    %v162 = vadd.f32 %v97, %v161
    %v163 = vpop.f32.mrf.mxu0
    %v164 = vadd.f32 %v97, %v163
    %165 = vmatmul.bf16.gmra.mxu0 %v144
    %v166 = vpop.f32.mrf.mxu0
    %v167 = vadd.f32 %v97, %v166
    %v168 = vpop.f32.mrf.mxu0
    %v169 = vadd.f32 %v97, %v168
    %170 = vmatmul.bf16.gmra.mxu0 %v147
    %v171 = vpop.f32.mrf.mxu0
    %v172 = vadd.f32 %v97, %v171
    %v173 = vpop.f32.mrf.mxu0
    %v174 = vadd.f32 %v97, %v173
    %175 = vmatmul.bf16.gmra.mxu0 %v150
    %v176 = vpop.f32.mrf.mxu0
    %v177 = vadd.f32 %v97, %v176
    %v178 = vpop.f32.mrf.mxu0
    %v179 = vadd.f32 %v97, %v178
    %180 = vdwg.mxu0
    %181 = vmatpush.bf16.msra.mxu0 0
    %182 = vmatpush.bf16.msra.mxu0 0
    %183 = vmatpush.bf16.msra.mxu0 0
    %184 = vmatpush.bf16.msra.mxu0 0
    %185 = vmatpush.bf16.msra.mxu0 0
    %186 = vmatpush.bf16.msra.mxu0 0
    %187 = vmatpush.bf16.msra.mxu0 0
    %188 = vmatpush.bf16.msra.mxu0 %v134
    %189 = vmatmul.bf16.gmra.mxu0 %v141
    %v190 = vpop.f32.mrf.mxu0
    %v191 = vadd.f32 %v98, %v190
    %v192 = vpop.f32.mrf.mxu0
    %v193 = vadd.f32 %v98, %v192
    %194 = vmatmul.bf16.gmra.mxu0 %v144
    %v195 = vpop.f32.mrf.mxu0
    %v196 = vadd.f32 %v98, %v195
    %v197 = vpop.f32.mrf.mxu0
    %v198 = vadd.f32 %v98, %v197
    %199 = vmatmul.bf16.gmra.mxu0 %v147
    %v200 = vpop.f32.mrf.mxu0
    %v201 = vadd.f32 %v98, %v200
    %v202 = vpop.f32.mrf.mxu0
    %v203 = vadd.f32 %v98, %v202
    %204 = vmatmul.bf16.gmra.mxu0 %v150
    %v205 = vpop.f32.mrf.mxu0
    %v206 = vadd.f32 %v98, %v205
    %v207 = vpop.f32.mrf.mxu0
    %v208 = vadd.f32 %v98, %v207
    %209 = vdwg.mxu0
    %210 = vmatpush.bf16.msra.mxu0 0
    %211 = vmatpush.bf16.msra.mxu0 0
    %212 = vmatpush.bf16.msra.mxu0 0
    %213 = vmatpush.bf16.msra.mxu0 0
    %214 = vmatpush.bf16.msra.mxu0 0
    %215 = vmatpush.bf16.msra.mxu0 0
    %216 = vmatpush.bf16.msra.mxu0 0
    %217 = vmatpush.bf16.msra.mxu0 %v135
    %218 = vmatmul.bf16.gmra.mxu0 %v141
    %v219 = vpop.f32.mrf.mxu0
    %v220 = vadd.f32 %v99, %v219
    %v221 = vpop.f32.mrf.mxu0
    %v222 = vadd.f32 %v99, %v221
    %223 = vmatmul.bf16.gmra.mxu0 %v144
    %v224 = vpop.f32.mrf.mxu0
    %v225 = vadd.f32 %v99, %v224
    %v226 = vpop.f32.mrf.mxu0
    %v227 = vadd.f32 %v99, %v226
    %228 = vmatmul.bf16.gmra.mxu0 %v147
    %v229 = vpop.f32.mrf.mxu0
    %v230 = vadd.f32 %v99, %v229
    %v231 = vpop.f32.mrf.mxu0
    %v232 = vadd.f32 %v99, %v231
    %233 = vmatmul.bf16.gmra.mxu0 %v150
    %v234 = vpop.f32.mrf.mxu0
    %v235 = vadd.f32 %v99, %v234
    %v236 = vpop.f32.mrf.mxu0
    %v237 = vadd.f32 %v99, %v236
    %238 = vdwg.mxu0
    %239 = vst [vmem:[#allocation3] sm:$0xff] %v162
    %240 = vst [vmem:[#allocation3 + $0x8] sm:$0xff] %v191
    %241 = vst [vmem:[#allocation3 + $0x10] sm:$0xff] %v220
    %242 = vst [vmem:[#allocation3 + $0x18] sm:$0xff] %v164
    %243 = vst [vmem:[#allocation3 + $0x20] sm:$0xff] %v193
    %244 = vst [vmem:[#allocation3 + $0x28] sm:$0xff] %v222
    %245 = vst [vmem:[#allocation3 + $0x30] sm:$0xff] %v167
    %246 = vst [vmem:[#allocation3 + $0x38] sm:$0xff] %v196
    %247 = vst [vmem:[#allocation3 + $0x40] sm:$0xff] %v225
    %248 = vst [vmem:[#allocation3 + $0x48] sm:$0xff] %v169
    %249 = vst [vmem:[#allocation3 + $0x50] sm:$0xff] %v198
    %250 = vst [vmem:[#allocation3 + $0x58] sm:$0xff] %v227
    %251 = vst [vmem:[#allocation3 + $0x60] sm:$0xff] %v172
    %252 = vst [vmem:[#allocation3 + $0x68] sm:$0xff] %v201
    %253 = vst [vmem:[#allocation3 + $0x70] sm:$0xff] %v230
    %254 = vst [vmem:[#allocation3 + $0x78] sm:$0xff] %v174
    %255 = vst [vmem:[#allocation3 + $0x80] sm:$0xff] %v203
    %256 = vst [vmem:[#allocation3 + $0x88] sm:$0xff] %v232
    %257 = vst [vmem:[#allocation3 + $0x90] sm:$0xff] %v177
    %258 = vst [vmem:[#allocation3 + $0x98] sm:$0xff] %v206
    %259 = vst [vmem:[#allocation3 + $0xa0] sm:$0xff] %v235
    %260 = vst [vmem:[#allocation3 + $0xa8] sm:$0xff] %v179
    %261 = vst [vmem:[#allocation3 + $0xb0] sm:$0xff] %v208
    %262 = vst [vmem:[#allocation3 + $0xb8] sm:$0xff] %v237
    %v263 = vld [vmem:[#allocation4] sm:$0xff]
    %v264 = vld [vmem:[#allocation4 + $0x8] sm:$0xf]
    %v265 = vld [vmem:[#allocation4 + $0xc] sm:$0xff]
    %v266 = vld [vmem:[#allocation4 + $0x14] sm:$0xf]
    %v267 = vld [vmem:[#allocation4 + $0x18] sm:$0xff]
    %v268 = vld [vmem:[#allocation4 + $0x20] sm:$0xf]
    %v269 = vld [vmem:[#allocation4 + $0x24] sm:$0xff]
    %v270 = vld [vmem:[#allocation4 + $0x2c] sm:$0xf]
    %v271 = vld [vmem:[#allocation4 + $0x30] sm:$0xff]
    %v272 = vld [vmem:[#allocation4 + $0x38] sm:$0xf]
    %v273 = vld [vmem:[#allocation4 + $0x3c] sm:$0xff]
    %v274 = vld [vmem:[#allocation4 + $0x44] sm:$0xf]
    %v275 = vld [vmem:[#allocation4 + $0x48] sm:$0xff]
    %v276 = vld [vmem:[#allocation4 + $0x50] sm:$0xf]
    %v277 = vld [vmem:[#allocation4 + $0x54] sm:$0xff]
    %v278 = vld [vmem:[#allocation4 + $0x5c] sm:$0xf]
    %v279 = vld [vmem:[#allocation4 + $0x60] sm:$0xff]
    %v280 = vld [vmem:[#allocation4 + $0x68] sm:$0xf]
    %v281 = vld [vmem:[#allocation4 + $0x6c] sm:$0xff]
    %v282 = vld [vmem:[#allocation4 + $0x74] sm:$0xf]
    %v283 = vld [vmem:[#allocation4 + $0x78] sm:$0xff]
    %v284 = vld [vmem:[#allocation4 + $0x80] sm:$0xf]
    %v285 = vld [vmem:[#allocation4 + $0x84] sm:$0xff]
    %v286 = vld [vmem:[#allocation4 + $0x8c] sm:$0xf]
    %v287 = vld [vmem:[#allocation4 + $0x90] sm:$0xff]
    %v288 = vld [vmem:[#allocation4 + $0x98] sm:$0xf]
    %v289 = vld [vmem:[#allocation4 + $0x9c] sm:$0xff]
    %v290 = vld [vmem:[#allocation4 + $0xa4] sm:$0xf]
    %v291 = vld [vmem:[#allocation4 + $0xa8] sm:$0xff]
    %v292 = vld [vmem:[#allocation4 + $0xb0] sm:$0xf]
    %v293 = vld [vmem:[#allocation4 + $0xb4] sm:$0xff]
    %v294 = vld [vmem:[#allocation4 + $0xbc] sm:$0xf]
    %v295 = vld [vmem:[%s4] sm:$0x1]
    %v296 = vld [vmem:[#allocation2] sm:$0xff]
    %s297 = smul.u32 0, 3
    %s298 = smul.addr %s297, 8
    %s299 = scalar_lea.vmem [#allocation3], %s298
    %v300 = vld [vmem:[%s299] sm:$0xff]
    %v301 = vld [vmem:[%s299 + $0x8] sm:$0xff]
    %v302 = vld [vmem:[%s299 + $0x10] sm:$0xff]
    %v303 = vpack.c.bf16 %v296, %v296
    %v336 = vunpack.c.l.b16 %v263
    %v337 = vunpack.c.h.b16 %v263
    %v338 = vunpack.c.l.b16 %v264
    %v339 = vunpack.c.l.b16 %v265
    %v340 = vunpack.c.h.b16 %v265
    %v341 = vunpack.c.l.b16 %v266
    %v342 = vunpack.c.l.b16 %v267
    %v343 = vunpack.c.h.b16 %v267
    %v344 = vunpack.c.l.b16 %v268
    %v345 = vunpack.c.l.b16 %v269
    %v346 = vunpack.c.h.b16 %v269
    %v347 = vunpack.c.l.b16 %v270
    %v348 = vunpack.c.l.b16 %v271
    %v349 = vunpack.c.h.b16 %v271
    %v350 = vunpack.c.l.b16 %v272
    %v351 = vunpack.c.l.b16 %v273
    %v352 = vunpack.c.h.b16 %v273
    %v353 = vunpack.c.l.b16 %v274
    %v354 = vunpack.c.l.b16 %v275
    %v355 = vunpack.c.h.b16 %v275
    %v356 = vunpack.c.l.b16 %v276
    %v357 = vunpack.c.l.b16 %v277
    %v358 = vunpack.c.h.b16 %v277
    %v359 = vunpack.c.l.b16 %v278
    %v360 = vunpack.c.l.b16 %v279
    %v361 = vunpack.c.h.b16 %v279
    %v362 = vunpack.c.l.b16 %v280
    %v363 = vunpack.c.l.b16 %v281
    %v364 = vunpack.c.h.b16 %v281
    %v365 = vunpack.c.l.b16 %v282
    %v366 = vunpack.c.l.b16 %v283
    %v367 = vunpack.c.h.b16 %v283
    %v368 = vunpack.c.l.b16 %v284
    %v369 = vunpack.c.l.b16 %v285
    %v370 = vunpack.c.h.b16 %v285
    %v371 = vunpack.c.l.b16 %v286
    %v372 = vunpack.c.l.b16 %v287
    %v373 = vunpack.c.h.b16 %v287
    %v374 = vunpack.c.l.b16 %v288
    %v375 = vunpack.c.l.b16 %v289
    %v376 = vunpack.c.h.b16 %v289
    %v377 = vunpack.c.l.b16 %v290
    %v378 = vunpack.c.l.b16 %v291
    %v379 = vunpack.c.h.b16 %v291
    %v380 = vunpack.c.l.b16 %v292
    %v381 = vunpack.c.l.b16 %v293
    %v382 = vunpack.c.h.b16 %v293
    %v383 = vunpack.c.l.b16 %v294
    %v384 = vpack.c.b16 %v339, %v336
    %v385 = vpack.c.b16 %v340, %v337
    %v386 = vpack.c.b16 %v341, %v338
    %v387 = vpack.c.b16 %v345, %v342
    %v388 = vpack.c.b16 %v346, %v343
    %v389 = vpack.c.b16 %v347, %v344
    %v390 = vpack.c.b16 %v351, %v348
    %v391 = vpack.c.b16 %v352, %v349
    %v392 = vpack.c.b16 %v353, %v350
    %v393 = vpack.c.b16 %v357, %v354
    %v394 = vpack.c.b16 %v358, %v355
    %v395 = vpack.c.b16 %v359, %v356
    %v396 = vpack.c.b16 %v363, %v360
    %v397 = vpack.c.b16 %v364, %v361
    %v398 = vpack.c.b16 %v365, %v362
    %v399 = vpack.c.b16 %v369, %v366
    %v400 = vpack.c.b16 %v370, %v367
    %v401 = vpack.c.b16 %v371, %v368
    %v402 = vpack.c.b16 %v375, %v372
    %v403 = vpack.c.b16 %v376, %v373
    %v404 = vpack.c.b16 %v377, %v374
    %v405 = vpack.c.b16 %v381, %v378
    %v406 = vpack.c.b16 %v382, %v379
    %v407 = vpack.c.b16 %v383, %v380
    %432 = vmatpush.bf16.msra.mxu0 %v405
    %433 = vmatpush.bf16.msra.mxu0 %v402
    %434 = vmatpush.bf16.msra.mxu0 %v399
    %435 = vmatpush.bf16.msra.mxu0 %v396
    %436 = vmatpush.bf16.msra.mxu0 %v393
    %437 = vmatpush.bf16.msra.mxu0 %v390
    %438 = vmatpush.bf16.msra.mxu0 %v387
    %439 = vmatpush.bf16.msra.mxu0 %v384
    %440 = vmatmul.bf16.gmra.mxu0 %v303
    %v441 = vpop.f32.mrf.mxu0
    %v442 = vadd.f32 0.0, %v441
    %v443 = vpop.f32.mrf.mxu0
    %444 = vdwg.mxu0
    %445 = vmatpush.bf16.msra.mxu0 %v406
    %446 = vmatpush.bf16.msra.mxu0 %v403
    %447 = vmatpush.bf16.msra.mxu0 %v400
    %448 = vmatpush.bf16.msra.mxu0 %v397
    %449 = vmatpush.bf16.msra.mxu0 %v394
    %450 = vmatpush.bf16.msra.mxu0 %v391
    %451 = vmatpush.bf16.msra.mxu0 %v388
    %452 = vmatpush.bf16.msra.mxu0 %v385
    %453 = vmatmul.bf16.gmra.mxu0 %v303
    %v454 = vpop.f32.mrf.mxu0
    %v455 = vadd.f32 0.0, %v454
    %v456 = vpop.f32.mrf.mxu0
    %457 = vdwg.mxu0
    %458 = vmatpush.bf16.msra.mxu0 %v407
    %459 = vmatpush.bf16.msra.mxu0 %v404
    %460 = vmatpush.bf16.msra.mxu0 %v401
    %461 = vmatpush.bf16.msra.mxu0 %v398
    %462 = vmatpush.bf16.msra.mxu0 %v395
    %463 = vmatpush.bf16.msra.mxu0 %v392
    %464 = vmatpush.bf16.msra.mxu0 %v389
    %465 = vmatpush.bf16.msra.mxu0 %v386
    %466 = vmatmul.bf16.gmra.mxu0 %v303
    %v467 = vpop.f32.mrf.mxu0
    %v468 = vadd.f32 0.0, %v467
    %v469 = vpop.f32.mrf.mxu0
    %470 = vdwg.mxu0
    %v471 = vadd.f32 %v300, %v442
    %v472 = vxor.u32 %v471, 2147483648
    %v473 = vmul.f32 %v472, 1.442695
    %v474 = vpow.pop %v473
    %v475 = vadd.f32 %v474, 1.0
    %v476 = vrcp.pop %v475
    %v477 = vmul.f32 %v475, %v476
    %v478 = vsub.f32 1.0, %v477
    %v479 = vmul.f32 %v476, %v478
    %v480 = vadd.f32 %v476, %v479
    %vm481 = vweird.f32 %v475
    %vm482 = vweird.f32 %v476
    %vm483 = vmor %vm481, %vm482
    %v484 = vsel %vm483, %v476, %v480
    %v485 = vand.u32 2147483647, %v475
    %vm486 = vcmp.eq.f32.partialorder %v485, 8.507059e+37
    %v487 = vand.u32 %v475, 2147483648
    %v488 = vor.u32 1.1754944e-38, %v487
    %v489 = vsel %vm486, %v488, %v484
    %v490 = vmul.f32 1.0, %v489
    %v491 = vadd.f32 %v301, %v455
    %v492 = vxor.u32 %v491, 2147483648
    %v493 = vmul.f32 %v492, 1.442695
    %v494 = vpow.pop %v493
    %v495 = vadd.f32 %v494, 1.0
    %v496 = vrcp.pop %v495
    %v497 = vmul.f32 %v495, %v496
    %v498 = vsub.f32 1.0, %v497
    %v499 = vmul.f32 %v496, %v498
    %v500 = vadd.f32 %v496, %v499
    %vm501 = vweird.f32 %v495
    %vm502 = vweird.f32 %v496
    %vm503 = vmor %vm501, %vm502
    %v504 = vsel %vm503, %v496, %v500
    %v505 = vand.u32 2147483647, %v495
    %vm506 = vcmp.eq.f32.partialorder %v505, 8.507059e+37
    %v507 = vand.u32 %v495, 2147483648
    %v508 = vor.u32 1.1754944e-38, %v507
    %v509 = vsel %vm506, %v508, %v504
    %v510 = vmul.f32 1.0, %v509
    %v512 = vperm.slane %v295, 0
    %v514 = vadd.f32 %v468, %v512
    %v515 = vmul.f32 %v490, %v514
    %v516 = vadd.f32 %v302, %v515
    %v517 = vtanh.pop %v516
    %v518 = vsub.f32 %v296, %v517
    %v519 = vmul.f32 %v510, %v518
    %v520 = vadd.f32 %v517, %v519
    %s521 = smul.u32 1, 3
    %s522 = smul.addr %s521, 8
    %s523 = scalar_lea.vmem [#allocation3], %s522
    %v524 = vld [vmem:[%s523] sm:$0xff]
    %v525 = vld [vmem:[%s523 + $0x8] sm:$0xff]
    %v526 = vld [vmem:[%s523 + $0x10] sm:$0xff]
    %v527 = vpack.c.bf16 %v520, %v520
    %528 = vmatpush.bf16.msra.mxu0 %v405
    %529 = vmatpush.bf16.msra.mxu0 %v402
    %530 = vmatpush.bf16.msra.mxu0 %v399
    %531 = vmatpush.bf16.msra.mxu0 %v396
    %532 = vmatpush.bf16.msra.mxu0 %v393
    %533 = vmatpush.bf16.msra.mxu0 %v390
    %534 = vmatpush.bf16.msra.mxu0 %v387
    %535 = vmatpush.bf16.msra.mxu0 %v384
    %536 = vmatmul.bf16.gmra.mxu0 %v527
    %v537 = vpop.f32.mrf.mxu0
    %v538 = vadd.f32 0.0, %v537
    %v539 = vpop.f32.mrf.mxu0
    %540 = vdwg.mxu0
    %541 = vmatpush.bf16.msra.mxu0 %v406
    %542 = vmatpush.bf16.msra.mxu0 %v403
    %543 = vmatpush.bf16.msra.mxu0 %v400
    %544 = vmatpush.bf16.msra.mxu0 %v397
    %545 = vmatpush.bf16.msra.mxu0 %v394
    %546 = vmatpush.bf16.msra.mxu0 %v391
    %547 = vmatpush.bf16.msra.mxu0 %v388
    %548 = vmatpush.bf16.msra.mxu0 %v385
    %549 = vmatmul.bf16.gmra.mxu0 %v527
    %v550 = vpop.f32.mrf.mxu0
    %v551 = vadd.f32 0.0, %v550
    %v552 = vpop.f32.mrf.mxu0
    %553 = vdwg.mxu0
    %554 = vmatpush.bf16.msra.mxu0 %v407
    %555 = vmatpush.bf16.msra.mxu0 %v404
    %556 = vmatpush.bf16.msra.mxu0 %v401
    %557 = vmatpush.bf16.msra.mxu0 %v398
    %558 = vmatpush.bf16.msra.mxu0 %v395
    %559 = vmatpush.bf16.msra.mxu0 %v392
    %560 = vmatpush.bf16.msra.mxu0 %v389
    %561 = vmatpush.bf16.msra.mxu0 %v386
    %562 = vmatmul.bf16.gmra.mxu0 %v527
    %v563 = vpop.f32.mrf.mxu0
    %v564 = vadd.f32 0.0, %v563
    %v565 = vpop.f32.mrf.mxu0
    %566 = vdwg.mxu0
    %v567 = vadd.f32 %v524, %v538
    %v568 = vxor.u32 %v567, 2147483648
    %v569 = vmul.f32 %v568, 1.442695
    %v570 = vpow.pop %v569
    %v571 = vadd.f32 %v570, 1.0
    %v572 = vrcp.pop %v571
    %v573 = vmul.f32 %v571, %v572
    %v574 = vsub.f32 1.0, %v573
    %v575 = vmul.f32 %v572, %v574
    %v576 = vadd.f32 %v572, %v575
    %vm577 = vweird.f32 %v571
    %vm578 = vweird.f32 %v572
    %vm579 = vmor %vm577, %vm578
    %v580 = vsel %vm579, %v572, %v576
    %v581 = vand.u32 2147483647, %v571
    %vm582 = vcmp.eq.f32.partialorder %v581, 8.507059e+37
    %v583 = vand.u32 %v571, 2147483648
    %v584 = vor.u32 1.1754944e-38, %v583
    %v585 = vsel %vm582, %v584, %v580
    %v586 = vmul.f32 1.0, %v585
    %v587 = vadd.f32 %v525, %v551
    %v588 = vxor.u32 %v587, 2147483648
    %v589 = vmul.f32 %v588, 1.442695
    %v590 = vpow.pop %v589
    %v591 = vadd.f32 %v590, 1.0
    %v592 = vrcp.pop %v591
    %v593 = vmul.f32 %v591, %v592
    %v594 = vsub.f32 1.0, %v593
    %v595 = vmul.f32 %v592, %v594
    %v596 = vadd.f32 %v592, %v595
    %vm597 = vweird.f32 %v591
    %vm598 = vweird.f32 %v592
    %vm599 = vmor %vm597, %vm598
    %v600 = vsel %vm599, %v592, %v596
    %v601 = vand.u32 2147483647, %v591
    %vm602 = vcmp.eq.f32.partialorder %v601, 8.507059e+37
    %v603 = vand.u32 %v591, 2147483648
    %v604 = vor.u32 1.1754944e-38, %v603
    %v605 = vsel %vm602, %v604, %v600
    %v606 = vmul.f32 1.0, %v605
    %v607 = vadd.f32 %v564, %v512
    %v608 = vmul.f32 %v586, %v607
    %v609 = vadd.f32 %v526, %v608
    %v610 = vtanh.pop %v609
    %v611 = vsub.f32 %v520, %v610
    %v612 = vmul.f32 %v606, %v611
    %v613 = vadd.f32 %v610, %v612
    %s614 = smul.u32 2, 3
    %s615 = smul.addr %s614, 8
    %s616 = scalar_lea.vmem [#allocation3], %s615
    %v617 = vld [vmem:[%s616] sm:$0xff]
    %v618 = vld [vmem:[%s616 + $0x8] sm:$0xff]
    %v619 = vld [vmem:[%s616 + $0x10] sm:$0xff]
    %v620 = vpack.c.bf16 %v613, %v613
    %621 = vmatpush.bf16.msra.mxu0 %v405
    %622 = vmatpush.bf16.msra.mxu0 %v402
    %623 = vmatpush.bf16.msra.mxu0 %v399
    %624 = vmatpush.bf16.msra.mxu0 %v396
    %625 = vmatpush.bf16.msra.mxu0 %v393
    %626 = vmatpush.bf16.msra.mxu0 %v390
    %627 = vmatpush.bf16.msra.mxu0 %v387
    %628 = vmatpush.bf16.msra.mxu0 %v384
    %629 = vmatmul.bf16.gmra.mxu0 %v620
    %v630 = vpop.f32.mrf.mxu0
    %v631 = vadd.f32 0.0, %v630
    %v632 = vpop.f32.mrf.mxu0
    %633 = vdwg.mxu0
    %634 = vmatpush.bf16.msra.mxu0 %v406
    %635 = vmatpush.bf16.msra.mxu0 %v403
    %636 = vmatpush.bf16.msra.mxu0 %v400
    %637 = vmatpush.bf16.msra.mxu0 %v397
    %638 = vmatpush.bf16.msra.mxu0 %v394
    %639 = vmatpush.bf16.msra.mxu0 %v391
    %640 = vmatpush.bf16.msra.mxu0 %v388
    %641 = vmatpush.bf16.msra.mxu0 %v385
    %642 = vmatmul.bf16.gmra.mxu0 %v620
    %v643 = vpop.f32.mrf.mxu0
    %v644 = vadd.f32 0.0, %v643
    %v645 = vpop.f32.mrf.mxu0
    %646 = vdwg.mxu0
    %647 = vmatpush.bf16.msra.mxu0 %v407
    %648 = vmatpush.bf16.msra.mxu0 %v404
    %649 = vmatpush.bf16.msra.mxu0 %v401
    %650 = vmatpush.bf16.msra.mxu0 %v398
    %651 = vmatpush.bf16.msra.mxu0 %v395
    %652 = vmatpush.bf16.msra.mxu0 %v392
    %653 = vmatpush.bf16.msra.mxu0 %v389
    %654 = vmatpush.bf16.msra.mxu0 %v386
    %655 = vmatmul.bf16.gmra.mxu0 %v620
    %v656 = vpop.f32.mrf.mxu0
    %v657 = vadd.f32 0.0, %v656
    %v658 = vpop.f32.mrf.mxu0
    %659 = vdwg.mxu0
    %v660 = vadd.f32 %v617, %v631
    %v661 = vxor.u32 %v660, 2147483648
    %v662 = vmul.f32 %v661, 1.442695
    %v663 = vpow.pop %v662
    %v664 = vadd.f32 %v663, 1.0
    %v665 = vrcp.pop %v664
    %v666 = vmul.f32 %v664, %v665
    %v667 = vsub.f32 1.0, %v666
    %v668 = vmul.f32 %v665, %v667
    %v669 = vadd.f32 %v665, %v668
    %vm670 = vweird.f32 %v664
    %vm671 = vweird.f32 %v665
    %vm672 = vmor %vm670, %vm671
    %v673 = vsel %vm672, %v665, %v669
    %v674 = vand.u32 2147483647, %v664
    %vm675 = vcmp.eq.f32.partialorder %v674, 8.507059e+37
    %v676 = vand.u32 %v664, 2147483648
    %v677 = vor.u32 1.1754944e-38, %v676
    %v678 = vsel %vm675, %v677, %v673
    %v679 = vmul.f32 1.0, %v678
    %v680 = vadd.f32 %v618, %v644
    %v681 = vxor.u32 %v680, 2147483648
    %v682 = vmul.f32 %v681, 1.442695
    %v683 = vpow.pop %v682
    %v684 = vadd.f32 %v683, 1.0
    %v685 = vrcp.pop %v684
    %v686 = vmul.f32 %v684, %v685
    %v687 = vsub.f32 1.0, %v686
    %v688 = vmul.f32 %v685, %v687
    %v689 = vadd.f32 %v685, %v688
    %vm690 = vweird.f32 %v684
    %vm691 = vweird.f32 %v685
    %vm692 = vmor %vm690, %vm691
    %v693 = vsel %vm692, %v685, %v689
    %v694 = vand.u32 2147483647, %v684
    %vm695 = vcmp.eq.f32.partialorder %v694, 8.507059e+37
    %v696 = vand.u32 %v684, 2147483648
    %v697 = vor.u32 1.1754944e-38, %v696
    %v698 = vsel %vm695, %v697, %v693
    %v699 = vmul.f32 1.0, %v698
    %v700 = vadd.f32 %v657, %v512
    %v701 = vmul.f32 %v679, %v700
    %v702 = vadd.f32 %v619, %v701
    %v703 = vtanh.pop %v702
    %v704 = vsub.f32 %v613, %v703
    %v705 = vmul.f32 %v699, %v704
    %v706 = vadd.f32 %v703, %v705
    %s707 = smul.u32 3, 3
    %s708 = smul.addr %s707, 8
    %s709 = scalar_lea.vmem [#allocation3], %s708
    %v710 = vld [vmem:[%s709] sm:$0xff]
    %v711 = vld [vmem:[%s709 + $0x8] sm:$0xff]
    %v712 = vld [vmem:[%s709 + $0x10] sm:$0xff]
    %v713 = vpack.c.bf16 %v706, %v706
    %714 = vmatpush.bf16.msra.mxu0 %v405
    %715 = vmatpush.bf16.msra.mxu0 %v402
    %716 = vmatpush.bf16.msra.mxu0 %v399
    %717 = vmatpush.bf16.msra.mxu0 %v396
    %718 = vmatpush.bf16.msra.mxu0 %v393
    %719 = vmatpush.bf16.msra.mxu0 %v390
    %720 = vmatpush.bf16.msra.mxu0 %v387
    %721 = vmatpush.bf16.msra.mxu0 %v384
    %722 = vmatmul.bf16.gmra.mxu0 %v713
    %v723 = vpop.f32.mrf.mxu0
    %v724 = vadd.f32 0.0, %v723
    %v725 = vpop.f32.mrf.mxu0
    %726 = vdwg.mxu0
    %727 = vmatpush.bf16.msra.mxu0 %v406
    %728 = vmatpush.bf16.msra.mxu0 %v403
    %729 = vmatpush.bf16.msra.mxu0 %v400
    %730 = vmatpush.bf16.msra.mxu0 %v397
    %731 = vmatpush.bf16.msra.mxu0 %v394
    %732 = vmatpush.bf16.msra.mxu0 %v391
    %733 = vmatpush.bf16.msra.mxu0 %v388
    %734 = vmatpush.bf16.msra.mxu0 %v385
    %735 = vmatmul.bf16.gmra.mxu0 %v713
    %v736 = vpop.f32.mrf.mxu0
    %v737 = vadd.f32 0.0, %v736
    %v738 = vpop.f32.mrf.mxu0
    %739 = vdwg.mxu0
    %740 = vmatpush.bf16.msra.mxu0 %v407
    %741 = vmatpush.bf16.msra.mxu0 %v404
    %742 = vmatpush.bf16.msra.mxu0 %v401
    %743 = vmatpush.bf16.msra.mxu0 %v398
    %744 = vmatpush.bf16.msra.mxu0 %v395
    %745 = vmatpush.bf16.msra.mxu0 %v392
    %746 = vmatpush.bf16.msra.mxu0 %v389
    %747 = vmatpush.bf16.msra.mxu0 %v386
    %748 = vmatmul.bf16.gmra.mxu0 %v713
    %v749 = vpop.f32.mrf.mxu0
    %v750 = vadd.f32 0.0, %v749
    %v751 = vpop.f32.mrf.mxu0
    %752 = vdwg.mxu0
    %v753 = vadd.f32 %v710, %v724
    %v754 = vxor.u32 %v753, 2147483648
    %v755 = vmul.f32 %v754, 1.442695
    %v756 = vpow.pop %v755
    %v757 = vadd.f32 %v756, 1.0
    %v758 = vrcp.pop %v757
    %v759 = vmul.f32 %v757, %v758
    %v760 = vsub.f32 1.0, %v759
    %v761 = vmul.f32 %v758, %v760
    %v762 = vadd.f32 %v758, %v761
    %vm763 = vweird.f32 %v757
    %vm764 = vweird.f32 %v758
    %vm765 = vmor %vm763, %vm764
    %v766 = vsel %vm765, %v758, %v762
    %v767 = vand.u32 2147483647, %v757
    %vm768 = vcmp.eq.f32.partialorder %v767, 8.507059e+37
    %v769 = vand.u32 %v757, 2147483648
    %v770 = vor.u32 1.1754944e-38, %v769
    %v771 = vsel %vm768, %v770, %v766
    %v772 = vmul.f32 1.0, %v771
    %v773 = vadd.f32 %v711, %v737
    %v774 = vxor.u32 %v773, 2147483648
    %v775 = vmul.f32 %v774, 1.442695
    %v776 = vpow.pop %v775
    %v777 = vadd.f32 %v776, 1.0
    %v778 = vrcp.pop %v777
    %v779 = vmul.f32 %v777, %v778
    %v780 = vsub.f32 1.0, %v779
    %v781 = vmul.f32 %v778, %v780
    %v782 = vadd.f32 %v778, %v781
    %vm783 = vweird.f32 %v777
    %vm784 = vweird.f32 %v778
    %vm785 = vmor %vm783, %vm784
    %v786 = vsel %vm785, %v778, %v782
    %v787 = vand.u32 2147483647, %v777
    %vm788 = vcmp.eq.f32.partialorder %v787, 8.507059e+37
    %v789 = vand.u32 %v777, 2147483648
    %v790 = vor.u32 1.1754944e-38, %v789
    %v791 = vsel %vm788, %v790, %v786
    %v792 = vmul.f32 1.0, %v791
    %v793 = vadd.f32 %v750, %v512
    %v794 = vmul.f32 %v772, %v793
    %v795 = vadd.f32 %v712, %v794
    %v796 = vtanh.pop %v795
    %v797 = vsub.f32 %v706, %v796
    %v798 = vmul.f32 %v792, %v797
    %v799 = vadd.f32 %v796, %v798
    %s800 = smul.u32 4, 3
    %s801 = smul.addr %s800, 8
    %s802 = scalar_lea.vmem [#allocation3], %s801
    %v803 = vld [vmem:[%s802] sm:$0xff]
    %v804 = vld [vmem:[%s802 + $0x8] sm:$0xff]
    %v805 = vld [vmem:[%s802 + $0x10] sm:$0xff]
    %v806 = vpack.c.bf16 %v799, %v799
    %807 = vmatpush.bf16.msra.mxu0 %v405
    %808 = vmatpush.bf16.msra.mxu0 %v402
    %809 = vmatpush.bf16.msra.mxu0 %v399
    %810 = vmatpush.bf16.msra.mxu0 %v396
    %811 = vmatpush.bf16.msra.mxu0 %v393
    %812 = vmatpush.bf16.msra.mxu0 %v390
    %813 = vmatpush.bf16.msra.mxu0 %v387
    %814 = vmatpush.bf16.msra.mxu0 %v384
    %815 = vmatmul.bf16.gmra.mxu0 %v806
    %v816 = vpop.f32.mrf.mxu0
    %v817 = vadd.f32 0.0, %v816
    %v818 = vpop.f32.mrf.mxu0
    %819 = vdwg.mxu0
    %820 = vmatpush.bf16.msra.mxu0 %v406
    %821 = vmatpush.bf16.msra.mxu0 %v403
    %822 = vmatpush.bf16.msra.mxu0 %v400
    %823 = vmatpush.bf16.msra.mxu0 %v397
    %824 = vmatpush.bf16.msra.mxu0 %v394
    %825 = vmatpush.bf16.msra.mxu0 %v391
    %826 = vmatpush.bf16.msra.mxu0 %v388
    %827 = vmatpush.bf16.msra.mxu0 %v385
    %828 = vmatmul.bf16.gmra.mxu0 %v806
    %v829 = vpop.f32.mrf.mxu0
    %v830 = vadd.f32 0.0, %v829
    %v831 = vpop.f32.mrf.mxu0
    %832 = vdwg.mxu0
    %833 = vmatpush.bf16.msra.mxu0 %v407
    %834 = vmatpush.bf16.msra.mxu0 %v404
    %835 = vmatpush.bf16.msra.mxu0 %v401
    %836 = vmatpush.bf16.msra.mxu0 %v398
    %837 = vmatpush.bf16.msra.mxu0 %v395
    %838 = vmatpush.bf16.msra.mxu0 %v392
    %839 = vmatpush.bf16.msra.mxu0 %v389
    %840 = vmatpush.bf16.msra.mxu0 %v386
    %841 = vmatmul.bf16.gmra.mxu0 %v806
    %v842 = vpop.f32.mrf.mxu0
    %v843 = vadd.f32 0.0, %v842
    %v844 = vpop.f32.mrf.mxu0
    %845 = vdwg.mxu0
    %v846 = vadd.f32 %v803, %v817
    %v847 = vxor.u32 %v846, 2147483648
    %v848 = vmul.f32 %v847, 1.442695
    %v849 = vpow.pop %v848
    %v850 = vadd.f32 %v849, 1.0
    %v851 = vrcp.pop %v850
    %v852 = vmul.f32 %v850, %v851
    %v853 = vsub.f32 1.0, %v852
    %v854 = vmul.f32 %v851, %v853
    %v855 = vadd.f32 %v851, %v854
    %vm856 = vweird.f32 %v850
    %vm857 = vweird.f32 %v851
    %vm858 = vmor %vm856, %vm857
    %v859 = vsel %vm858, %v851, %v855
    %v860 = vand.u32 2147483647, %v850
    %vm861 = vcmp.eq.f32.partialorder %v860, 8.507059e+37
    %v862 = vand.u32 %v850, 2147483648
    %v863 = vor.u32 1.1754944e-38, %v862
    %v864 = vsel %vm861, %v863, %v859
    %v865 = vmul.f32 1.0, %v864
    %v866 = vadd.f32 %v804, %v830
    %v867 = vxor.u32 %v866, 2147483648
    %v868 = vmul.f32 %v867, 1.442695
    %v869 = vpow.pop %v868
    %v870 = vadd.f32 %v869, 1.0
    %v871 = vrcp.pop %v870
    %v872 = vmul.f32 %v870, %v871
    %v873 = vsub.f32 1.0, %v872
    %v874 = vmul.f32 %v871, %v873
    %v875 = vadd.f32 %v871, %v874
    %vm876 = vweird.f32 %v870
    %vm877 = vweird.f32 %v871
    %vm878 = vmor %vm876, %vm877
    %v879 = vsel %vm878, %v871, %v875
    %v880 = vand.u32 2147483647, %v870
    %vm881 = vcmp.eq.f32.partialorder %v880, 8.507059e+37
    %v882 = vand.u32 %v870, 2147483648
    %v883 = vor.u32 1.1754944e-38, %v882
    %v884 = vsel %vm881, %v883, %v879
    %v885 = vmul.f32 1.0, %v884
    %v886 = vadd.f32 %v843, %v512
    %v887 = vmul.f32 %v865, %v886
    %v888 = vadd.f32 %v805, %v887
    %v889 = vtanh.pop %v888
    %v890 = vsub.f32 %v799, %v889
    %v891 = vmul.f32 %v885, %v890
    %v892 = vadd.f32 %v889, %v891
    %s893 = smul.u32 5, 3
    %s894 = smul.addr %s893, 8
    %s895 = scalar_lea.vmem [#allocation3], %s894
    %v896 = vld [vmem:[%s895] sm:$0xff]
    %v897 = vld [vmem:[%s895 + $0x8] sm:$0xff]
    %v898 = vld [vmem:[%s895 + $0x10] sm:$0xff]
    %v899 = vpack.c.bf16 %v892, %v892
    %900 = vmatpush.bf16.msra.mxu0 %v405
    %901 = vmatpush.bf16.msra.mxu0 %v402
    %902 = vmatpush.bf16.msra.mxu0 %v399
    %903 = vmatpush.bf16.msra.mxu0 %v396
    %904 = vmatpush.bf16.msra.mxu0 %v393
    %905 = vmatpush.bf16.msra.mxu0 %v390
    %906 = vmatpush.bf16.msra.mxu0 %v387
    %907 = vmatpush.bf16.msra.mxu0 %v384
    %908 = vmatmul.bf16.gmra.mxu0 %v899
    %v909 = vpop.f32.mrf.mxu0
    %v910 = vadd.f32 0.0, %v909
    %v911 = vpop.f32.mrf.mxu0
    %912 = vdwg.mxu0
    %913 = vmatpush.bf16.msra.mxu0 %v406
    %914 = vmatpush.bf16.msra.mxu0 %v403
    %915 = vmatpush.bf16.msra.mxu0 %v400
    %916 = vmatpush.bf16.msra.mxu0 %v397
    %917 = vmatpush.bf16.msra.mxu0 %v394
    %918 = vmatpush.bf16.msra.mxu0 %v391
    %919 = vmatpush.bf16.msra.mxu0 %v388
    %920 = vmatpush.bf16.msra.mxu0 %v385
    %921 = vmatmul.bf16.gmra.mxu0 %v899
    %v922 = vpop.f32.mrf.mxu0
    %v923 = vadd.f32 0.0, %v922
    %v924 = vpop.f32.mrf.mxu0
    %925 = vdwg.mxu0
    %926 = vmatpush.bf16.msra.mxu0 %v407
    %927 = vmatpush.bf16.msra.mxu0 %v404
    %928 = vmatpush.bf16.msra.mxu0 %v401
    %929 = vmatpush.bf16.msra.mxu0 %v398
    %930 = vmatpush.bf16.msra.mxu0 %v395
    %931 = vmatpush.bf16.msra.mxu0 %v392
    %932 = vmatpush.bf16.msra.mxu0 %v389
    %933 = vmatpush.bf16.msra.mxu0 %v386
    %934 = vmatmul.bf16.gmra.mxu0 %v899
    %v935 = vpop.f32.mrf.mxu0
    %v936 = vadd.f32 0.0, %v935
    %v937 = vpop.f32.mrf.mxu0
    %938 = vdwg.mxu0
    %v939 = vadd.f32 %v896, %v910
    %v940 = vxor.u32 %v939, 2147483648
    %v941 = vmul.f32 %v940, 1.442695
    %v942 = vpow.pop %v941
    %v943 = vadd.f32 %v942, 1.0
    %v944 = vrcp.pop %v943
    %v945 = vmul.f32 %v943, %v944
    %v946 = vsub.f32 1.0, %v945
    %v947 = vmul.f32 %v944, %v946
    %v948 = vadd.f32 %v944, %v947
    %vm949 = vweird.f32 %v943
    %vm950 = vweird.f32 %v944
    %vm951 = vmor %vm949, %vm950
    %v952 = vsel %vm951, %v944, %v948
    %v953 = vand.u32 2147483647, %v943
    %vm954 = vcmp.eq.f32.partialorder %v953, 8.507059e+37
    %v955 = vand.u32 %v943, 2147483648
    %v956 = vor.u32 1.1754944e-38, %v955
    %v957 = vsel %vm954, %v956, %v952
    %v958 = vmul.f32 1.0, %v957
    %v959 = vadd.f32 %v897, %v923
    %v960 = vxor.u32 %v959, 2147483648
    %v961 = vmul.f32 %v960, 1.442695
    %v962 = vpow.pop %v961
    %v963 = vadd.f32 %v962, 1.0
    %v964 = vrcp.pop %v963
    %v965 = vmul.f32 %v963, %v964
    %v966 = vsub.f32 1.0, %v965
    %v967 = vmul.f32 %v964, %v966
    %v968 = vadd.f32 %v964, %v967
    %vm969 = vweird.f32 %v963
    %vm970 = vweird.f32 %v964
    %vm971 = vmor %vm969, %vm970
    %v972 = vsel %vm971, %v964, %v968
    %v973 = vand.u32 2147483647, %v963
    %vm974 = vcmp.eq.f32.partialorder %v973, 8.507059e+37
    %v975 = vand.u32 %v963, 2147483648
    %v976 = vor.u32 1.1754944e-38, %v975
    %v977 = vsel %vm974, %v976, %v972
    %v978 = vmul.f32 1.0, %v977
    %v979 = vadd.f32 %v936, %v512
    %v980 = vmul.f32 %v958, %v979
    %v981 = vadd.f32 %v898, %v980
    %v982 = vtanh.pop %v981
    %v983 = vsub.f32 %v892, %v982
    %v984 = vmul.f32 %v978, %v983
    %v985 = vadd.f32 %v982, %v984
    %s986 = smul.u32 6, 3
    %s987 = smul.addr %s986, 8
    %s988 = scalar_lea.vmem [#allocation3], %s987
    %v989 = vld [vmem:[%s988] sm:$0xff]
    %v990 = vld [vmem:[%s988 + $0x8] sm:$0xff]
    %v991 = vld [vmem:[%s988 + $0x10] sm:$0xff]
    %v992 = vpack.c.bf16 %v985, %v985
    %993 = vmatpush.bf16.msra.mxu0 %v405
    %994 = vmatpush.bf16.msra.mxu0 %v402
    %995 = vmatpush.bf16.msra.mxu0 %v399
    %996 = vmatpush.bf16.msra.mxu0 %v396
    %997 = vmatpush.bf16.msra.mxu0 %v393
    %998 = vmatpush.bf16.msra.mxu0 %v390
    %999 = vmatpush.bf16.msra.mxu0 %v387
    %1000 = vmatpush.bf16.msra.mxu0 %v384
    %1001 = vmatmul.bf16.gmra.mxu0 %v992
    %v1002 = vpop.f32.mrf.mxu0
    %v1003 = vadd.f32 0.0, %v1002
    %v1004 = vpop.f32.mrf.mxu0
    %1005 = vdwg.mxu0
    %1006 = vmatpush.bf16.msra.mxu0 %v406
    %1007 = vmatpush.bf16.msra.mxu0 %v403
    %1008 = vmatpush.bf16.msra.mxu0 %v400
    %1009 = vmatpush.bf16.msra.mxu0 %v397
    %1010 = vmatpush.bf16.msra.mxu0 %v394
    %1011 = vmatpush.bf16.msra.mxu0 %v391
    %1012 = vmatpush.bf16.msra.mxu0 %v388
    %1013 = vmatpush.bf16.msra.mxu0 %v385
    %1014 = vmatmul.bf16.gmra.mxu0 %v992
    %v1015 = vpop.f32.mrf.mxu0
    %v1016 = vadd.f32 0.0, %v1015
    %v1017 = vpop.f32.mrf.mxu0
    %1018 = vdwg.mxu0
    %1019 = vmatpush.bf16.msra.mxu0 %v407
    %1020 = vmatpush.bf16.msra.mxu0 %v404
    %1021 = vmatpush.bf16.msra.mxu0 %v401
    %1022 = vmatpush.bf16.msra.mxu0 %v398
    %1023 = vmatpush.bf16.msra.mxu0 %v395
    %1024 = vmatpush.bf16.msra.mxu0 %v392
    %1025 = vmatpush.bf16.msra.mxu0 %v389
    %1026 = vmatpush.bf16.msra.mxu0 %v386
    %1027 = vmatmul.bf16.gmra.mxu0 %v992
    %v1028 = vpop.f32.mrf.mxu0
    %v1029 = vadd.f32 0.0, %v1028
    %v1030 = vpop.f32.mrf.mxu0
    %1031 = vdwg.mxu0
    %v1032 = vadd.f32 %v989, %v1003
    %v1033 = vxor.u32 %v1032, 2147483648
    %v1034 = vmul.f32 %v1033, 1.442695
    %v1035 = vpow.pop %v1034
    %v1036 = vadd.f32 %v1035, 1.0
    %v1037 = vrcp.pop %v1036
    %v1038 = vmul.f32 %v1036, %v1037
    %v1039 = vsub.f32 1.0, %v1038
    %v1040 = vmul.f32 %v1037, %v1039
    %v1041 = vadd.f32 %v1037, %v1040
    %vm1042 = vweird.f32 %v1036
    %vm1043 = vweird.f32 %v1037
    %vm1044 = vmor %vm1042, %vm1043
    %v1045 = vsel %vm1044, %v1037, %v1041
    %v1046 = vand.u32 2147483647, %v1036
    %vm1047 = vcmp.eq.f32.partialorder %v1046, 8.507059e+37
    %v1048 = vand.u32 %v1036, 2147483648
    %v1049 = vor.u32 1.1754944e-38, %v1048
    %v1050 = vsel %vm1047, %v1049, %v1045
    %v1051 = vmul.f32 1.0, %v1050
    %v1052 = vadd.f32 %v990, %v1016
    %v1053 = vxor.u32 %v1052, 2147483648
    %v1054 = vmul.f32 %v1053, 1.442695
    %v1055 = vpow.pop %v1054
    %v1056 = vadd.f32 %v1055, 1.0
    %v1057 = vrcp.pop %v1056
    %v1058 = vmul.f32 %v1056, %v1057
    %v1059 = vsub.f32 1.0, %v1058
    %v1060 = vmul.f32 %v1057, %v1059
    %v1061 = vadd.f32 %v1057, %v1060
    %vm1062 = vweird.f32 %v1056
    %vm1063 = vweird.f32 %v1057
    %vm1064 = vmor %vm1062, %vm1063
    %v1065 = vsel %vm1064, %v1057, %v1061
    %v1066 = vand.u32 2147483647, %v1056
    %vm1067 = vcmp.eq.f32.partialorder %v1066, 8.507059e+37
    %v1068 = vand.u32 %v1056, 2147483648
    %v1069 = vor.u32 1.1754944e-38, %v1068
    %v1070 = vsel %vm1067, %v1069, %v1065
    %v1071 = vmul.f32 1.0, %v1070
    %v1072 = vadd.f32 %v1029, %v512
    %v1073 = vmul.f32 %v1051, %v1072
    %v1074 = vadd.f32 %v991, %v1073
    %v1075 = vtanh.pop %v1074
    %v1076 = vsub.f32 %v985, %v1075
    %v1077 = vmul.f32 %v1071, %v1076
    %v1078 = vadd.f32 %v1075, %v1077
    %s1079 = smul.u32 7, 3
    %s1080 = smul.addr %s1079, 8
    %s1081 = scalar_lea.vmem [#allocation3], %s1080
    %v1082 = vld [vmem:[%s1081] sm:$0xff]
    %v1083 = vld [vmem:[%s1081 + $0x8] sm:$0xff]
    %v1084 = vld [vmem:[%s1081 + $0x10] sm:$0xff]
    %v1085 = vpack.c.bf16 %v1078, %v1078
    %1086 = vmatpush.bf16.msra.mxu0 %v405
    %1087 = vmatpush.bf16.msra.mxu0 %v402
    %1088 = vmatpush.bf16.msra.mxu0 %v399
    %1089 = vmatpush.bf16.msra.mxu0 %v396
    %1090 = vmatpush.bf16.msra.mxu0 %v393
    %1091 = vmatpush.bf16.msra.mxu0 %v390
    %1092 = vmatpush.bf16.msra.mxu0 %v387
    %1093 = vmatpush.bf16.msra.mxu0 %v384
    %1094 = vmatmul.bf16.gmra.mxu0 %v1085
    %v1095 = vpop.f32.mrf.mxu0
    %v1096 = vadd.f32 0.0, %v1095
    %v1097 = vpop.f32.mrf.mxu0
    %1098 = vdwg.mxu0
    %1099 = vmatpush.bf16.msra.mxu0 %v406
    %1100 = vmatpush.bf16.msra.mxu0 %v403
    %1101 = vmatpush.bf16.msra.mxu0 %v400
    %1102 = vmatpush.bf16.msra.mxu0 %v397
    %1103 = vmatpush.bf16.msra.mxu0 %v394
    %1104 = vmatpush.bf16.msra.mxu0 %v391
    %1105 = vmatpush.bf16.msra.mxu0 %v388
    %1106 = vmatpush.bf16.msra.mxu0 %v385
    %1107 = vmatmul.bf16.gmra.mxu0 %v1085
    %v1108 = vpop.f32.mrf.mxu0
    %v1109 = vadd.f32 0.0, %v1108
    %v1110 = vpop.f32.mrf.mxu0
    %1111 = vdwg.mxu0
    %1112 = vmatpush.bf16.msra.mxu0 %v407
    %1113 = vmatpush.bf16.msra.mxu0 %v404
    %1114 = vmatpush.bf16.msra.mxu0 %v401
    %1115 = vmatpush.bf16.msra.mxu0 %v398
    %1116 = vmatpush.bf16.msra.mxu0 %v395
    %1117 = vmatpush.bf16.msra.mxu0 %v392
    %1118 = vmatpush.bf16.msra.mxu0 %v389
    %1119 = vmatpush.bf16.msra.mxu0 %v386
    %1120 = vmatmul.bf16.gmra.mxu0 %v1085
    %v1121 = vpop.f32.mrf.mxu0
    %v1122 = vadd.f32 0.0, %v1121
    %v1123 = vpop.f32.mrf.mxu0
    %1124 = vdwg.mxu0
    %v1125 = vadd.f32 %v1082, %v1096
    %v1126 = vxor.u32 %v1125, 2147483648
    %v1127 = vmul.f32 %v1126, 1.442695
    %v1128 = vpow.pop %v1127
    %v1129 = vadd.f32 %v1128, 1.0
    %v1130 = vrcp.pop %v1129
    %v1131 = vmul.f32 %v1129, %v1130
    %v1132 = vsub.f32 1.0, %v1131
    %v1133 = vmul.f32 %v1130, %v1132
    %v1134 = vadd.f32 %v1130, %v1133
    %vm1135 = vweird.f32 %v1129
    %vm1136 = vweird.f32 %v1130
    %vm1137 = vmor %vm1135, %vm1136
    %v1138 = vsel %vm1137, %v1130, %v1134
    %v1139 = vand.u32 2147483647, %v1129
    %vm1140 = vcmp.eq.f32.partialorder %v1139, 8.507059e+37
    %v1141 = vand.u32 %v1129, 2147483648
    %v1142 = vor.u32 1.1754944e-38, %v1141
    %v1143 = vsel %vm1140, %v1142, %v1138
    %v1144 = vmul.f32 1.0, %v1143
    %v1145 = vadd.f32 %v1083, %v1109
    %v1146 = vxor.u32 %v1145, 2147483648
    %v1147 = vmul.f32 %v1146, 1.442695
    %v1148 = vpow.pop %v1147
    %v1149 = vadd.f32 %v1148, 1.0
    %v1150 = vrcp.pop %v1149
    %v1151 = vmul.f32 %v1149, %v1150
    %v1152 = vsub.f32 1.0, %v1151
    %v1153 = vmul.f32 %v1150, %v1152
    %v1154 = vadd.f32 %v1150, %v1153
    %vm1155 = vweird.f32 %v1149
    %vm1156 = vweird.f32 %v1150
    %vm1157 = vmor %vm1155, %vm1156
    %v1158 = vsel %vm1157, %v1150, %v1154
    %v1159 = vand.u32 2147483647, %v1149
    %vm1160 = vcmp.eq.f32.partialorder %v1159, 8.507059e+37
    %v1161 = vand.u32 %v1149, 2147483648
    %v1162 = vor.u32 1.1754944e-38, %v1161
    %v1163 = vsel %vm1160, %v1162, %v1158
    %v1164 = vmul.f32 1.0, %v1163
    %v1165 = vadd.f32 %v1122, %v512
    %v1166 = vmul.f32 %v1144, %v1165
    %v1167 = vadd.f32 %v1084, %v1166
    %v1168 = vtanh.pop %v1167
    %v1169 = vsub.f32 %v1078, %v1168
    %v1170 = vmul.f32 %v1164, %v1169
    %v1171 = vadd.f32 %v1168, %v1170
    %1172 = vst [vmem:[#allocation2] sm:$0xff] %v1171
    // Predicated region
    $region50: #{tpu_custom_call.1} parent=1 // pred_check
      %p1173 = pneg %p77
    $region51: #{tpu_custom_call.1} parent=1 // pred_check_branch
      %1175 = sbr.rel (%p1173) target = $region53
    $region52: #{tpu_custom_call.1} parent=1 // pred_region
      %1176 = vst [vmem:[#allocation7] sm:$0xff] %v1171
      %v1177 = vpack.c.bf16 %v1171, %v1171
      %v1178 = vld [vmem:[%s6] sm:$0xf]
      %v1179 = vld [vmem:[%s6 + $0x4] sm:$0xf]
      %v1180 = vld [vmem:[%s6 + $0x8] sm:$0xf]
      %v1181 = vld [vmem:[%s6 + $0xc] sm:$0xf]
      %v1182 = vld [vmem:[%s6 + $0x10] sm:$0xf]
      %v1183 = vld [vmem:[%s6 + $0x14] sm:$0xf]
      %v1184 = vld [vmem:[%s6 + $0x18] sm:$0xf]
      %v1185 = vld [vmem:[%s6 + $0x1c] sm:$0xf]
      %v1186 = vld [vmem:[%s6 + $0x20] sm:$0xf]
      %v1187 = vld [vmem:[%s6 + $0x24] sm:$0xf]
      %v1188 = vld [vmem:[%s6 + $0x28] sm:$0xf]
      %v1189 = vld [vmem:[%s6 + $0x2c] sm:$0xf]
      %v1190 = vld [vmem:[%s6 + $0x30] sm:$0xf]
      %v1191 = vld [vmem:[%s6 + $0x34] sm:$0xf]
      %v1192 = vld [vmem:[%s6 + $0x38] sm:$0xf]
      %v1193 = vld [vmem:[%s6 + $0x3c] sm:$0xf]
      %v1194 = vld [vmem:[%s7] sm:$0x1]
      %v1196 = vperm.slane %v1194, 0
      %v1214 = vunpack.c.l.b16 %v1178
      %v1215 = vunpack.c.l.b16 %v1179
      %v1216 = vunpack.c.l.b16 %v1180
      %v1217 = vunpack.c.l.b16 %v1181
      %v1218 = vunpack.c.l.b16 %v1182
      %v1219 = vunpack.c.l.b16 %v1183
      %v1220 = vunpack.c.l.b16 %v1184
      %v1221 = vunpack.c.l.b16 %v1185
      %v1222 = vunpack.c.l.b16 %v1186
      %v1223 = vunpack.c.l.b16 %v1187
      %v1224 = vunpack.c.l.b16 %v1188
      %v1225 = vunpack.c.l.b16 %v1189
      %v1226 = vunpack.c.l.b16 %v1190
      %v1227 = vunpack.c.l.b16 %v1191
      %v1228 = vunpack.c.l.b16 %v1192
      %v1229 = vunpack.c.l.b16 %v1193
      %v1230 = vpack.c.b16 %v1215, %v1214
      %v1231 = vpack.c.b16 %v1217, %v1216
      %v1232 = vpack.c.b16 %v1219, %v1218
      %v1233 = vpack.c.b16 %v1221, %v1220
      %v1234 = vpack.c.b16 %v1223, %v1222
      %v1235 = vpack.c.b16 %v1225, %v1224
      %v1236 = vpack.c.b16 %v1227, %v1226
      %v1237 = vpack.c.b16 %v1229, %v1228
      %1246 = vmatpush.bf16.msra.mxu0 %v1237
      %1247 = vmatpush.bf16.msra.mxu0 %v1236
      %1248 = vmatpush.bf16.msra.mxu0 %v1235
      %1249 = vmatpush.bf16.msra.mxu0 %v1234
      %1250 = vmatpush.bf16.msra.mxu0 %v1233
      %1251 = vmatpush.bf16.msra.mxu0 %v1232
      %1252 = vmatpush.bf16.msra.mxu0 %v1231
      %1253 = vmatpush.bf16.msra.mxu0 %v1230
      %1254 = vmatmul.bf16.gmra.mxu0 %v1177
      %v1255 = vpop.f32.mrf.mxu0
      %v1256 = vadd.f32 %v1196, %v1255
      %v1257 = vpop.f32.mrf.mxu0
      %1258 = vdwg.mxu0
      %v1259 = vmax.f32 %v1256, 0.0
      %v1260 = vpack.c.bf16 %v1259, %v1259
      %v1261 = vld [vmem:[%s8] sm:$0xf]
      %v1262 = vld [vmem:[%s8 + $0x4] sm:$0xf]
      %v1263 = vld [vmem:[%s8 + $0x8] sm:$0xf]
      %v1264 = vld [vmem:[%s8 + $0xc] sm:$0xf]
      %v1265 = vld [vmem:[%s9] sm:$0x1]
      %v1267 = vperm.slane %v1265, 0
      %v1273 = vunpack.c.l.b16 %v1261
      %v1274 = vunpack.c.l.b16 %v1262
      %v1275 = vunpack.c.l.b16 %v1263
      %v1276 = vunpack.c.l.b16 %v1264
      %v1277 = vpack.c.b16 %v1274, %v1273
      %v1278 = vpack.c.b16 %v1276, %v1275
      %vm1281 = vcmask 261120
      %v1283 = vsel %vm1281, %v1260, 0
      %1285 = vmatpush.bf16.msra.mxu0 0
      %1286 = vmatpush.bf16.msra.mxu0 0
      %1287 = vmatpush.bf16.msra.mxu0 0
      %1288 = vmatpush.bf16.msra.mxu0 0
      %1289 = vmatpush.bf16.msra.mxu0 0
      %1290 = vmatpush.bf16.msra.mxu0 0
      %1291 = vmatpush.bf16.msra.mxu0 %v1278
      %1292 = vmatpush.bf16.msra.mxu0 %v1277
      %1293 = vmatmul.bf16.gmra.mxu0 %v1283
      %v1294 = vpop.f32.mrf.mxu0
      %v1295 = vadd.f32 %v1267, %v1294
      %v1296 = vpop.f32.mrf.mxu0
      %1297 = vdwg.mxu0
      %vm1298 = vcmask 31744
      %1299 = vst.msk [vmem:[%s10] sm:$0xff] %vm1298, %v1295
    $region53: #{tpu_custom_call.1} parent=1 // pred_fallthru
      _
    // Predicated region
    $region54: #{tpu_custom_call.1} parent=1 // pred_check
      _
    $region55: #{tpu_custom_call.1} parent=1 // pred_check_branch
      %1301 = sbr.rel (0) target = $region57
    $region56: #{tpu_custom_call.1} parent=1 // pred_region
      _
    $region57: #{tpu_custom_call.1} parent=1 // pred_fallthru
      _
    // Predicated region
    $region58: #{tpu_custom_call.1} parent=1 // pred_check
      _
    $region59: #{tpu_custom_call.1} parent=1 // pred_check_branch
      %1303 = sbr.rel (0) target = $region61
    $region60: #{tpu_custom_call.1} parent=1 // pred_region
      %1305 = vsyncadd [#allocation6], 0
      %s1307 = sshll.u32 [#allocation7], 4
      %s1308 = int_to_ptr.vmem [resolvable:$true] %s1307
      %s1309 = sshll.u32 %s11, 4
      %s1310 = int_to_ptr.hbm [resolvable:$true] %s1309
      %1312 = dma.vmem_to_hbm [thread:$0]  %s1308, 128, %s1310, [#allocation6]
    $region61: #{tpu_custom_call.1} parent=1 // pred_fallthru
      _
    // Predicated region
    $region62: #{tpu_custom_call.1} parent=1 // pred_check
      _
    $region63: #{tpu_custom_call.1} parent=1 // pred_check_branch
      %1314 = sbr.rel (0) target = $region65
    $region64: #{tpu_custom_call.1} parent=1 // pred_region
      _
    $region65: #{tpu_custom_call.1} parent=1 // pred_fallthru
      _
    // Predicated region
    $region66: #{tpu_custom_call.1} parent=1 // pred_check
      _
    $region67: #{tpu_custom_call.1} parent=1 // pred_check_branch
      %1316 = sbr.rel (0) target = $region69
    $region68: #{tpu_custom_call.1} parent=1 // pred_region
      %1318 = dma.done [#allocation6], 128
    $region69: #{tpu_custom_call.1} parent=1 // pred_fallthru
      _
    %1319 = vsyncpa [#allocation5], 1
    %1320 = vsyncpa [#allocation6], 1

</llo_original>
